<compile_context>
chip_gen: v5e
topology: v5e:2x2
jax: 0.10.0
libtpu: 0.0.40
codegen_flags: <defaults>
</compile_context>

<pallas_src>
import functools
import math

import jax
import jax.numpy as jnp
from jax.experimental import pallas as pl
from jax.experimental.pallas import tpu as pltpu


_COMPUTE_DTYPE = jnp.bfloat16          # MXU input dtype; accumulation is f32


def _vmem_limit_bytes():
    # ~3/4 of physical VMEM, capped: v5e/v6e (128 MiB) -> 96 MiB, v7x (64) -> 48.
    cap = 64 * 1024 * 1024
    try:
        cap = int(getattr(pltpu.get_tpu_info(), "vmem_capacity_bytes", cap))
    except Exception:
        pass
    return int(min(cap * 3 // 4, 112 * 1024 * 1024))


def _const_spec(shape):
    # Block resident across the whole grid (weights / bias rows).
    zeros = (0,) * len(shape)
    return pl.BlockSpec(shape, lambda b, _z=zeros: _z)


def _layernorm(z, g, b):
    # PyTorch LayerNorm: biased variance, eps=1e-5, f32 math.
    mu = jnp.mean(z, axis=-1, keepdims=True)
    var = jnp.mean((z - mu) ** 2, axis=-1, keepdims=True)
    return (z - mu) * jax.lax.rsqrt(var + 1e-5) * g + b


# ------------------------------ fused kernel -------------------------------- #

def _encoder_kernel(x_ref, wqkv_ref, bqkv_ref, wo_ref, bo_ref, g1_ref, be1_ref,
                    w1_ref, b1_ref, w2_ref, b2_ref, g2_ref, be2_ref,
                    gn_ref, bn_ref, o_ref, a_ref, *, n_layers, n_heads,
                    use_final_norm):
    # One batch element per grid step; residual stream kept in f32 vregs.
    x = x_ref[0].astype(jnp.float32)                       # (L, D)
    L, D = x.shape
    E = D // n_heads

    for layer in range(n_layers):                          # static unroll
        # ---- fused QKV projection (bf16 MXU, f32 acc); scale pre-folded ----
        qkv = (jnp.dot(x.astype(_COMPUTE_DTYPE), wqkv_ref[layer],
                       preferred_element_type=jnp.float32)
               + bqkv_ref[layer])                          # (L, 3D)
        q = qkv[:, :D].reshape(L, n_heads, E).transpose(1, 0, 2)        # (H,L,E)
        k = qkv[:, D:2 * D].reshape(L, n_heads, E).transpose(1, 0, 2)
        v = qkv[:, 2 * D:].reshape(L, n_heads, E).transpose(1, 0, 2)

        # ---- batched-over-heads q.k^T ; exact softmax ; a.v ----
        s = jax.lax.dot_general(q.astype(_COMPUTE_DTYPE),
                                k.astype(_COMPUTE_DTYPE),
                                (((2,), (2,)), ((0,), (0,))),
                                preferred_element_type=jnp.float32)     # (H,L,L)
        p = jnp.exp(s - jnp.max(s, axis=-1, keepdims=True))
        a = p / jnp.sum(p, axis=-1, keepdims=True)
        # lane-dense attention-map store: (L_q, H*L_k) slab for this layer
        a_ref[0, layer] = (a.transpose(1, 0, 2)
                            .reshape(L, n_heads * L).astype(a_ref.dtype))
        ctx = jax.lax.dot_general(a.astype(_COMPUTE_DTYPE),
                                  v.astype(_COMPUTE_DTYPE),
                                  (((2,), (1,)), ((0,), (0,))),
                                  preferred_element_type=jnp.float32)   # (H,L,E)
        ctx = ctx.transpose(1, 0, 2).reshape(L, D)

        # ---- output projection + residual + LayerNorm1 ----
        out = (jnp.dot(ctx.astype(_COMPUTE_DTYPE), wo_ref[layer],
                       preferred_element_type=jnp.float32) + bo_ref[layer])
        x1 = _layernorm(x + out, g1_ref[layer], be1_ref[layer])

        # ---- FFN (1x1 convs == per-position MLP) + residual + LayerNorm2 ----
        h = jnp.maximum(
            jnp.dot(x1.astype(_COMPUTE_DTYPE), w1_ref[layer],
                    preferred_element_type=jnp.float32) + b1_ref[layer], 0.0)
        y = (jnp.dot(h.astype(_COMPUTE_DTYPE), w2_ref[layer],
                     preferred_element_type=jnp.float32) + b2_ref[layer])
        x = _layernorm(x1 + y, g2_ref[layer], be2_ref[layer])

    if use_final_norm:
        x = _layernorm(x, gn_ref[...], bn_ref[...])
    o_ref[0] = x.astype(o_ref.dtype)


# ------------------------------ call wrapper -------------------------------- #

def encoder_forward(x, params, n_heads, use_final_norm=True):
    B, L, D = x.shape
    H = n_heads
    N = params["wqkv"].shape[0]
    dff = params["w1"].shape[-1]
    kernel = functools.partial(_encoder_kernel, n_layers=N, n_heads=H,
                               use_final_norm=use_final_norm)
    out, attn_slab = pl.pallas_call(
        kernel,
        grid=(B,),
        in_specs=[
            pl.BlockSpec((1, L, D), lambda b: (b, 0, 0)),
            _const_spec((N, D, 3 * D)), _const_spec((N, 1, 3 * D)),
            _const_spec((N, D, D)),     _const_spec((N, 1, D)),
            _const_spec((N, 1, D)),     _const_spec((N, 1, D)),
            _const_spec((N, D, dff)),   _const_spec((N, 1, dff)),
            _const_spec((N, dff, D)),   _const_spec((N, 1, D)),
            _const_spec((N, 1, D)),     _const_spec((N, 1, D)),
            _const_spec((1, D)),        _const_spec((1, D)),
        ],
        out_specs=[
            pl.BlockSpec((1, L, D), lambda b: (b, 0, 0)),
            pl.BlockSpec((1, N, L, H * L), lambda b: (b, 0, 0, 0)),
        ],
        out_shape=(
            jax.ShapeDtypeStruct((B, L, D), x.dtype),
            jax.ShapeDtypeStruct((B, N, L, H * L), jnp.float32),
        ),
        compiler_params=pltpu.CompilerParams(
            dimension_semantics=("parallel",),
            vmem_limit_bytes=_vmem_limit_bytes()),
    )(x, params["wqkv"], params["bqkv"], params["wo"], params["bo"],
      params["g1"], params["be1"], params["w1"], params["b1"],
      params["w2"], params["b2"], params["g2"], params["be2"],
      params["gn"], params["bn"])
    # wrapper-side layout plumbing back to the reference (B, H, L, L) per layer
    attn = attn_slab.reshape(B, N, L, H, L).transpose(1, 0, 3, 2, 4)
    return out, [attn[i] for i in range(N)]


# --------------------------- parameter construction ------------------------- #

def make_params(key, n_layers, d_model, d_ff):
    # PyTorch layouts: Linear weight (Dout, Din); conv1d(k=1) == Linear.
    keys = jax.random.split(key, n_layers)
    layers = []
    for lk in keys:
        ks = jax.random.split(lk, 6)
        scale = 0.02
        layers.append(dict(
            wq=scale * jax.random.normal(ks[0], (d_model, d_model), jnp.float32),
            bq=jnp.zeros((d_model,), jnp.float32),
            wk=scale * jax.random.normal(ks[1], (d_model, d_model), jnp.float32),
            bk=jnp.zeros((d_model,), jnp.float32),
            wv=scale * jax.random.normal(ks[2], (d_model, d_model), jnp.float32),
            bv=jnp.zeros((d_model,), jnp.float32),
            wo=scale * jax.random.normal(ks[3], (d_model, d_model), jnp.float32),
            bo=jnp.zeros((d_model,), jnp.float32),
            g1=jnp.ones((d_model,), jnp.float32),
            be1=jnp.zeros((d_model,), jnp.float32),
            w1=scale * jax.random.normal(ks[4], (d_ff, d_model), jnp.float32),
            b1=jnp.zeros((d_ff,), jnp.float32),
            w2=scale * jax.random.normal(ks[5], (d_model, d_ff), jnp.float32),
            b2=jnp.zeros((d_model,), jnp.float32),
            g2=jnp.ones((d_model,), jnp.float32),
            be2=jnp.zeros((d_model,), jnp.float32),
        ))
    norm = dict(g=jnp.ones((d_model,), jnp.float32),
                b=jnp.zeros((d_model,), jnp.float32))
    return layers, norm


def prepare_params(raw_layers, norm_params, n_heads):
    # One-time host-side layout plumbing:
    #   * transpose weights to (Din, Dout); fuse QKV into one (D, 3D) weight
    #   * fold 1/sqrt(E) into the Q slice of the fused weight AND its bias
    #   * stack all layers along a leading axis; cast MXU weights to bf16
    d = raw_layers[0]["wq"].shape[0]
    e = d // n_heads
    scale = 1.0 / math.sqrt(e)

    def stack(fn):
        return jnp.stack([fn(p) for p in raw_layers], axis=0)

    return dict(
        wqkv=stack(lambda p: jnp.concatenate(
            [p["wq"] * scale, p["wk"], p["wv"]], axis=0).T.astype(_COMPUTE_DTYPE)),
        bqkv=stack(lambda p: jnp.concatenate(
            [p["bq"] * scale, p["bk"], p["bv"]]).reshape(1, 3 * d)),
        wo=stack(lambda p: p["wo"].T.astype(_COMPUTE_DTYPE)),
        bo=stack(lambda p: p["bo"].reshape(1, d)),
        g1=stack(lambda p: p["g1"].reshape(1, d)),
        be1=stack(lambda p: p["be1"].reshape(1, d)),
        w1=stack(lambda p: p["w1"].T.astype(_COMPUTE_DTYPE)),
        b1=stack(lambda p: p["b1"].reshape(1, -1)),
        w2=stack(lambda p: p["w2"].T.astype(_COMPUTE_DTYPE)),
        b2=stack(lambda p: p["b2"].reshape(1, d)),
        g2=stack(lambda p: p["g2"].reshape(1, d)),
        be2=stack(lambda p: p["be2"].reshape(1, d)),
        gn=norm_params["g"].reshape(1, d),
        bn=norm_params["b"].reshape(1, d),
    )


# ----------------------------- pure-JAX reference --------------------------- #

def _reference_forward(x, raw_layers, norm_params, n_heads):
    B, L, D = x.shape
    E = D // n_heads

    def ln(z, g, b):
        mu = jnp.mean(z, -1, keepdims=True)
        var = jnp.mean((z - mu) ** 2, -1, keepdims=True)
        return (z - mu) / jnp.sqrt(var + 1e-5) * g + b

    attns = []
    for p in raw_layers:
        x2 = x.reshape(B * L, D)
        q = (x2 @ p["wq"].T + p["bq"]).reshape(B, L, n_heads, E).transpose(0, 2, 1, 3)
        k = (x2 @ p["wk"].T + p["bk"]).reshape(B, L, n_heads, E).transpose(0, 2, 1, 3)
        v = (x2 @ p["wv"].T + p["bv"]).reshape(B, L, n_heads, E).transpose(0, 2, 1, 3)
        s = jnp.einsum("bhle,bhme->bhlm", q, k) / math.sqrt(E)
        a = jax.nn.softmax(s, axis=-1)
        attns.append(a)
        o = jnp.einsum("bhlm,bhme->bhle", a, v).transpose(0, 2, 1, 3).reshape(B * L, D)
        o = o @ p["wo"].T + p["bo"]
        x1 = ln(x2 + o, p["g1"], p["be1"])
        h = jnp.maximum(x1 @ p["w1"].T + p["b1"], 0.0)
        y = h @ p["w2"].T + p["b2"]
        x = ln(x1 + y, p["g2"], p["be2"]).reshape(B, L, D)
    x = ln(x, norm_params["g"], norm_params["b"])
    return x, attns


# ----------------------------------- main ----------------------------------- #

if __name__ == "__main__":
    B, L, D = 2, 8, 32       # batch, seq len, d_model
    H = 4                    # heads
    D_FF = 64                # FFN hidden
    N_LAYERS = 2

    key = jax.random.PRNGKey(0)
    k_x, k_p = jax.random.split(key)
    x = jax.random.normal(k_x, (B, L, D), jnp.float32)
    raw_layers, norm_params = make_params(k_p, N_LAYERS, D, D_FF)
    params = prepare_params(raw_layers, norm_params, H)

    fwd = jax.jit(functools.partial(encoder_forward, n_heads=H))
    out, attns = fwd(x, params)
    out = jax.block_until_ready(out)
    attns = [jax.block_until_ready(a) for a in attns]

    assert out.shape == (B, L, D)
    assert len(attns) == N_LAYERS and attns[0].shape == (B, H, L, L)
    assert bool(jnp.all(jnp.isfinite(out))) and bool(jnp.all(jnp.isfinite(attns[0])))
    # softmax rows must sum to ~1 (exact division in-kernel)
    assert bool(jnp.allclose(jnp.sum(attns[0], axis=-1), 1.0, atol=1e-3))

    # pure-JAX f32 reference (kernel uses bf16 MXU inputs with f32 accumulation)
    ref_out, ref_attns = _reference_forward(x, raw_layers, norm_params, H)
    assert bool(jnp.allclose(out, ref_out, rtol=2e-2, atol=2e-2))
    assert bool(jnp.allclose(attns[0], ref_attns[0], atol=1e-2))
    assert bool(jnp.allclose(attns[-1], ref_attns[-1], atol=1e-2))

    print("KERNEL_OK")
</pallas_src>

<mosaic_0001>
module attributes {stable_mosaic.version = 11 : i64} {
  func.func @_encoder_kernel(%arg0: i32, %arg1: memref<1x8x32xf32, #tpu.memory_space<vmem>>, %arg2: memref<2x32x96xbf16, #tpu.memory_space<vmem>>, %arg3: memref<2x1x96xf32, #tpu.memory_space<vmem>>, %arg4: memref<2x32x32xbf16, #tpu.memory_space<vmem>>, %arg5: memref<2x1x32xf32, #tpu.memory_space<vmem>>, %arg6: memref<2x1x32xf32, #tpu.memory_space<vmem>>, %arg7: memref<2x1x32xf32, #tpu.memory_space<vmem>>, %arg8: memref<2x32x64xbf16, #tpu.memory_space<vmem>>, %arg9: memref<2x1x64xf32, #tpu.memory_space<vmem>>, %arg10: memref<2x64x32xbf16, #tpu.memory_space<vmem>>, %arg11: memref<2x1x32xf32, #tpu.memory_space<vmem>>, %arg12: memref<2x1x32xf32, #tpu.memory_space<vmem>>, %arg13: memref<2x1x32xf32, #tpu.memory_space<vmem>>, %arg14: memref<1x32xf32, #tpu.memory_space<vmem>>, %arg15: memref<1x32xf32, #tpu.memory_space<vmem>>, %arg16: memref<1x8x32xf32, #tpu.memory_space<vmem>>, %arg17: memref<1x2x8x32xf32, #tpu.memory_space<vmem>>) attributes {dimension_semantics = [#tpu.dimension_semantics<parallel>], iteration_bounds = array<i64: 2>, scalar_prefetch = 0 : i64, scratch_operands = 0 : i64, tpu.core_type = #tpu.core_type<tc>, window_params = [{transform_indices = @transform_0, window_bounds = array<i64: 1, 8, 32>}, {pipeline_mode = #tpu.pipeline_mode<synchronous>, transform_indices = @transform_1, window_bounds = array<i64: 2, 32, 96>}, {pipeline_mode = #tpu.pipeline_mode<synchronous>, transform_indices = @transform_2, window_bounds = array<i64: 2, 1, 96>}, {pipeline_mode = #tpu.pipeline_mode<synchronous>, transform_indices = @transform_3, window_bounds = array<i64: 2, 32, 32>}, {pipeline_mode = #tpu.pipeline_mode<synchronous>, transform_indices = @transform_4, window_bounds = array<i64: 2, 1, 32>}, {pipeline_mode = #tpu.pipeline_mode<synchronous>, transform_indices = @transform_5, window_bounds = array<i64: 2, 1, 32>}, {pipeline_mode = #tpu.pipeline_mode<synchronous>, transform_indices = @transform_6, window_bounds = array<i64: 2, 1, 32>}, {pipeline_mode = #tpu.pipeline_mode<synchronous>, transform_indices = @transform_7, window_bounds = array<i64: 2, 32, 64>}, {pipeline_mode = #tpu.pipeline_mode<synchronous>, transform_indices = @transform_8, window_bounds = array<i64: 2, 1, 64>}, {pipeline_mode = #tpu.pipeline_mode<synchronous>, transform_indices = @transform_9, window_bounds = array<i64: 2, 64, 32>}, {pipeline_mode = #tpu.pipeline_mode<synchronous>, transform_indices = @transform_10, window_bounds = array<i64: 2, 1, 32>}, {pipeline_mode = #tpu.pipeline_mode<synchronous>, transform_indices = @transform_11, window_bounds = array<i64: 2, 1, 32>}, {pipeline_mode = #tpu.pipeline_mode<synchronous>, transform_indices = @transform_12, window_bounds = array<i64: 2, 1, 32>}, {pipeline_mode = #tpu.pipeline_mode<synchronous>, transform_indices = @transform_13, window_bounds = array<i64: 1, 32>}, {pipeline_mode = #tpu.pipeline_mode<synchronous>, transform_indices = @transform_14, window_bounds = array<i64: 1, 32>}, {transform_indices = @transform_15, window_bounds = array<i64: 1, 8, 32>}, {transform_indices = @transform_16, window_bounds = array<i64: 1, 2, 8, 32>}]} {
    %c0 = arith.constant 0 : index
    %c0_0 = arith.constant 0 : index
    %c0_1 = arith.constant 0 : index
    %0 = vector.load %arg1[%c0, %c0_0, %c0_1] : memref<1x8x32xf32, #tpu.memory_space<vmem>>, vector<1x8x32xf32>
    %1 = vector.shape_cast %0 : vector<1x8x32xf32> to vector<8x32xf32>
    %2 = arith.truncf %1 : vector<8x32xf32> to vector<8x32xbf16>
    %c0_2 = arith.constant 0 : index
    %c0_3 = arith.constant 0 : index
    %c0_4 = arith.constant 0 : index
    %3 = vector.load %arg2[%c0_2, %c0_3, %c0_4] : memref<2x32x96xbf16, #tpu.memory_space<vmem>>, vector<1x32x96xbf16>
    %4 = vector.shape_cast %3 : vector<1x32x96xbf16> to vector<32x96xbf16>
    %cst = arith.constant dense<0.000000e+00> : vector<8x96xf32>
    %5 = tpu.matmul %2, %4, %cst {dimension_numbers = #tpu.dot_dimension_numbers<[1], [0], [0], [1], [0, 0, 1, 1], [], []>} : vector<8x32xbf16>, vector<32x96xbf16>, vector<8x96xf32> -> vector<8x96xf32>
    %c0_5 = arith.constant 0 : index
    %c0_6 = arith.constant 0 : index
    %c0_7 = arith.constant 0 : index
    %6 = vector.load %arg3[%c0_5, %c0_6, %c0_7] : memref<2x1x96xf32, #tpu.memory_space<vmem>>, vector<1x1x96xf32>
    %7 = vector.shape_cast %6 : vector<1x1x96xf32> to vector<1x96xf32>
    %8 = vector.broadcast %7 : vector<1x96xf32> to vector<8x96xf32>
    %9 = arith.addf %5, %8 : vector<8x96xf32>
    %10 = vector.extract_strided_slice %9 {offsets = [0, 0], sizes = [8, 32], strides = [1, 1]} : vector<8x96xf32> to vector<8x32xf32>
    %11 = vector.shape_cast %10 : vector<8x32xf32> to vector<8x4x8xf32>
    %12 = tpu.transpose %11, [1, 0, 2] : vector<8x4x8xf32> -> vector<4x8x8xf32>
    %13 = vector.extract_strided_slice %9 {offsets = [0, 32], sizes = [8, 32], strides = [1, 1]} : vector<8x96xf32> to vector<8x32xf32>
    %14 = vector.shape_cast %13 : vector<8x32xf32> to vector<8x4x8xf32>
    %15 = tpu.transpose %14, [1, 0, 2] : vector<8x4x8xf32> -> vector<4x8x8xf32>
    %16 = vector.extract_strided_slice %9 {offsets = [0, 64], sizes = [8, 32], strides = [1, 1]} : vector<8x96xf32> to vector<8x32xf32>
    %17 = vector.shape_cast %16 : vector<8x32xf32> to vector<8x4x8xf32>
    %18 = tpu.transpose %17, [1, 0, 2] : vector<8x4x8xf32> -> vector<4x8x8xf32>
    %19 = arith.truncf %12 : vector<4x8x8xf32> to vector<4x8x8xbf16>
    %20 = arith.truncf %15 : vector<4x8x8xf32> to vector<4x8x8xbf16>
    %cst_8 = arith.constant dense<0.000000e+00> : vector<4x8x8xf32>
    %21 = tpu.matmul %19, %20, %cst_8 {dimension_numbers = #tpu.dot_dimension_numbers<[2], [2], [1], [1], [0, 0, 0, 1, 1, 1], [0], [0]>} : vector<4x8x8xbf16>, vector<4x8x8xbf16>, vector<4x8x8xf32> -> vector<4x8x8xf32>
    %cst_9 = arith.constant dense<0xFF800000> : vector<4x8xf32>
    %22 = vector.multi_reduction <maximumf>, %21, %cst_9 [2] : vector<4x8x8xf32> to vector<4x8xf32>
    %23 = vector.shape_cast %22 : vector<4x8xf32> to vector<4x8x1xf32>
    %24 = vector.broadcast %23 : vector<4x8x1xf32> to vector<4x8x8xf32>
    %25 = arith.subf %21, %24 : vector<4x8x8xf32>
    %26 = math.exp %25 : vector<4x8x8xf32>
    %cst_10 = arith.constant dense<0.000000e+00> : vector<4x8xf32>
    %27 = vector.multi_reduction <add>, %26, %cst_10 [2] : vector<4x8x8xf32> to vector<4x8xf32>
    %28 = vector.shape_cast %27 : vector<4x8xf32> to vector<4x8x1xf32>
    %29 = vector.broadcast %28 : vector<4x8x1xf32> to vector<4x8x8xf32>
    %30 = arith.divf %26, %29 : vector<4x8x8xf32>
    %31 = tpu.transpose %30, [1, 0, 2] : vector<4x8x8xf32> -> vector<8x4x8xf32>
    %32 = vector.shape_cast %31 : vector<8x4x8xf32> to vector<8x32xf32>
    %c0_11 = arith.constant 0 : index
    %c0_12 = arith.constant 0 : index
    %c0_13 = arith.constant 0 : index
    %c0_14 = arith.constant 0 : index
    %33 = vector.load %arg17[%c0_11, %c0_12, %c0_13, %c0_14] : memref<1x2x8x32xf32, #tpu.memory_space<vmem>>, vector<1x1x8x32xf32>
    %34 = vector.shape_cast %33 : vector<1x1x8x32xf32> to vector<8x32xf32>
    %35 = vector.shape_cast %32 : vector<8x32xf32> to vector<1x1x8x32xf32>
    tpu.vector_store %arg17[%c0_11, %c0_12, %c0_13, %c0_14], %35 {strides = array<i32>} : memref<1x2x8x32xf32, #tpu.memory_space<vmem>>, vector<1x1x8x32xf32>,
    %36 = arith.truncf %30 : vector<4x8x8xf32> to vector<4x8x8xbf16>
    %37 = arith.truncf %18 : vector<4x8x8xf32> to vector<4x8x8xbf16>
    %cst_15 = arith.constant dense<0.000000e+00> : vector<4x8x8xf32>
    %38 = tpu.matmul %36, %37, %cst_15 {dimension_numbers = #tpu.dot_dimension_numbers<[2], [1], [1], [2], [0, 0, 0, 1, 1, 2], [0], [0]>} : vector<4x8x8xbf16>, vector<4x8x8xbf16>, vector<4x8x8xf32> -> vector<4x8x8xf32>
    %39 = tpu.transpose %38, [1, 0, 2] : vector<4x8x8xf32> -> vector<8x4x8xf32>
    %40 = vector.shape_cast %39 : vector<8x4x8xf32> to vector<8x32xf32>
    %41 = arith.truncf %40 : vector<8x32xf32> to vector<8x32xbf16>
    %c0_16 = arith.constant 0 : index
    %c0_17 = arith.constant 0 : index
    %c0_18 = arith.constant 0 : index
    %42 = vector.load %arg4[%c0_16, %c0_17, %c0_18] : memref<2x32x32xbf16, #tpu.memory_space<vmem>>, vector<1x32x32xbf16>
    %43 = vector.shape_cast %42 : vector<1x32x32xbf16> to vector<32x32xbf16>
    %cst_19 = arith.constant dense<0.000000e+00> : vector<8x32xf32>
    %44 = tpu.matmul %41, %43, %cst_19 {dimension_numbers = #tpu.dot_dimension_numbers<[1], [0], [0], [1], [0, 0, 1, 1], [], []>} : vector<8x32xbf16>, vector<32x32xbf16>, vector<8x32xf32> -> vector<8x32xf32>
    %c0_20 = arith.constant 0 : index
    %c0_21 = arith.constant 0 : index
    %c0_22 = arith.constant 0 : index
    %45 = vector.load %arg5[%c0_20, %c0_21, %c0_22] : memref<2x1x32xf32, #tpu.memory_space<vmem>>, vector<1x1x32xf32>
    %46 = vector.shape_cast %45 : vector<1x1x32xf32> to vector<1x32xf32>
    %47 = vector.broadcast %46 : vector<1x32xf32> to vector<8x32xf32>
    %48 = arith.addf %44, %47 : vector<8x32xf32>
    %49 = arith.addf %1, %48 : vector<8x32xf32>
    %c0_23 = arith.constant 0 : index
    %c0_24 = arith.constant 0 : index
    %c0_25 = arith.constant 0 : index
    %50 = vector.load %arg6[%c0_23, %c0_24, %c0_25] : memref<2x1x32xf32, #tpu.memory_space<vmem>>, vector<1x1x32xf32>
    %51 = vector.shape_cast %50 : vector<1x1x32xf32> to vector<1x32xf32>
    %c0_26 = arith.constant 0 : index
    %c0_27 = arith.constant 0 : index
    %c0_28 = arith.constant 0 : index
    %52 = vector.load %arg7[%c0_26, %c0_27, %c0_28] : memref<2x1x32xf32, #tpu.memory_space<vmem>>, vector<1x1x32xf32>
    %53 = vector.shape_cast %52 : vector<1x1x32xf32> to vector<1x32xf32>
    %cst_29 = arith.constant dense<0.000000e+00> : vector<8xf32>
    %54 = vector.multi_reduction <add>, %49, %cst_29 [1] : vector<8x32xf32> to vector<8xf32>
    %55 = vector.shape_cast %54 : vector<8xf32> to vector<8x1xf32>
    %cst_30 = arith.constant 3.200000e+01 : f32
    %56 = vector.broadcast %cst_30 : f32 to vector<8x1xf32>
    %57 = arith.divf %55, %56 : vector<8x1xf32>
    %58 = vector.broadcast %57 : vector<8x1xf32> to vector<8x32xf32>
    %59 = arith.subf %49, %58 : vector<8x32xf32>
    %60 = arith.mulf %59, %59 : vector<8x32xf32>
    %cst_31 = arith.constant dense<0.000000e+00> : vector<8xf32>
    %61 = vector.multi_reduction <add>, %60, %cst_31 [1] : vector<8x32xf32> to vector<8xf32>
    %62 = vector.shape_cast %61 : vector<8xf32> to vector<8x1xf32>
    %cst_32 = arith.constant 3.200000e+01 : f32
    %63 = vector.broadcast %cst_32 : f32 to vector<8x1xf32>
    %64 = arith.divf %62, %63 : vector<8x1xf32>
    %65 = vector.broadcast %57 : vector<8x1xf32> to vector<8x32xf32>
    %66 = arith.subf %49, %65 : vector<8x32xf32>
    %cst_33 = arith.constant 9.99999974E-6 : f32
    %67 = vector.broadcast %cst_33 : f32 to vector<8x1xf32>
    %68 = arith.addf %64, %67 : vector<8x1xf32>
    %69 = math.rsqrt %68 : vector<8x1xf32>
    %70 = vector.broadcast %69 : vector<8x1xf32> to vector<8x32xf32>
    %71 = arith.mulf %66, %70 : vector<8x32xf32>
    %72 = vector.broadcast %51 : vector<1x32xf32> to vector<8x32xf32>
    %73 = arith.mulf %71, %72 : vector<8x32xf32>
    %74 = vector.broadcast %53 : vector<1x32xf32> to vector<8x32xf32>
    %75 = arith.addf %73, %74 : vector<8x32xf32>
    %76 = arith.truncf %75 : vector<8x32xf32> to vector<8x32xbf16>
    %c0_34 = arith.constant 0 : index
    %c0_35 = arith.constant 0 : index
    %c0_36 = arith.constant 0 : index
    %77 = vector.load %arg8[%c0_34, %c0_35, %c0_36] : memref<2x32x64xbf16, #tpu.memory_space<vmem>>, vector<1x32x64xbf16>
    %78 = vector.shape_cast %77 : vector<1x32x64xbf16> to vector<32x64xbf16>
    %cst_37 = arith.constant dense<0.000000e+00> : vector<8x64xf32>
    %79 = tpu.matmul %76, %78, %cst_37 {dimension_numbers = #tpu.dot_dimension_numbers<[1], [0], [0], [1], [0, 0, 1, 1], [], []>} : vector<8x32xbf16>, vector<32x64xbf16>, vector<8x64xf32> -> vector<8x64xf32>
    %c0_38 = arith.constant 0 : index
    %c0_39 = arith.constant 0 : index
    %c0_40 = arith.constant 0 : index
    %80 = vector.load %arg9[%c0_38, %c0_39, %c0_40] : memref<2x1x64xf32, #tpu.memory_space<vmem>>, vector<1x1x64xf32>
    %81 = vector.shape_cast %80 : vector<1x1x64xf32> to vector<1x64xf32>
    %82 = vector.broadcast %81 : vector<1x64xf32> to vector<8x64xf32>
    %83 = arith.addf %79, %82 : vector<8x64xf32>
    %cst_41 = arith.constant 0.000000e+00 : f32
    %84 = vector.broadcast %cst_41 : f32 to vector<8x64xf32>
    %85 = arith.maximumf %83, %84 : vector<8x64xf32>
    %86 = arith.truncf %85 : vector<8x64xf32> to vector<8x64xbf16>
    %c0_42 = arith.constant 0 : index
    %c0_43 = arith.constant 0 : index
    %c0_44 = arith.constant 0 : index
    %87 = vector.load %arg10[%c0_42, %c0_43, %c0_44] : memref<2x64x32xbf16, #tpu.memory_space<vmem>>, vector<1x64x32xbf16>
    %88 = vector.shape_cast %87 : vector<1x64x32xbf16> to vector<64x32xbf16>
    %cst_45 = arith.constant dense<0.000000e+00> : vector<8x32xf32>
    %89 = tpu.matmul %86, %88, %cst_45 {dimension_numbers = #tpu.dot_dimension_numbers<[1], [0], [0], [1], [0, 0, 1, 1], [], []>} : vector<8x64xbf16>, vector<64x32xbf16>, vector<8x32xf32> -> vector<8x32xf32>
    %c0_46 = arith.constant 0 : index
    %c0_47 = arith.constant 0 : index
    %c0_48 = arith.constant 0 : index
    %90 = vector.load %arg11[%c0_46, %c0_47, %c0_48] : memref<2x1x32xf32, #tpu.memory_space<vmem>>, vector<1x1x32xf32>
    %91 = vector.shape_cast %90 : vector<1x1x32xf32> to vector<1x32xf32>
    %92 = vector.broadcast %91 : vector<1x32xf32> to vector<8x32xf32>
    %93 = arith.addf %89, %92 : vector<8x32xf32>
    %94 = arith.addf %75, %93 : vector<8x32xf32>
    %c0_49 = arith.constant 0 : index
    %c0_50 = arith.constant 0 : index
    %c0_51 = arith.constant 0 : index
    %95 = vector.load %arg12[%c0_49, %c0_50, %c0_51] : memref<2x1x32xf32, #tpu.memory_space<vmem>>, vector<1x1x32xf32>
    %96 = vector.shape_cast %95 : vector<1x1x32xf32> to vector<1x32xf32>
    %c0_52 = arith.constant 0 : index
    %c0_53 = arith.constant 0 : index
    %c0_54 = arith.constant 0 : index
    %97 = vector.load %arg13[%c0_52, %c0_53, %c0_54] : memref<2x1x32xf32, #tpu.memory_space<vmem>>, vector<1x1x32xf32>
    %98 = vector.shape_cast %97 : vector<1x1x32xf32> to vector<1x32xf32>
    %cst_55 = arith.constant dense<0.000000e+00> : vector<8xf32>
    %99 = vector.multi_reduction <add>, %94, %cst_55 [1] : vector<8x32xf32> to vector<8xf32>
    %100 = vector.shape_cast %99 : vector<8xf32> to vector<8x1xf32>
    %cst_56 = arith.constant 3.200000e+01 : f32
    %101 = vector.broadcast %cst_56 : f32 to vector<8x1xf32>
    %102 = arith.divf %100, %101 : vector<8x1xf32>
    %103 = vector.broadcast %102 : vector<8x1xf32> to vector<8x32xf32>
    %104 = arith.subf %94, %103 : vector<8x32xf32>
    %105 = arith.mulf %104, %104 : vector<8x32xf32>
    %cst_57 = arith.constant dense<0.000000e+00> : vector<8xf32>
    %106 = vector.multi_reduction <add>, %105, %cst_57 [1] : vector<8x32xf32> to vector<8xf32>
    %107 = vector.shape_cast %106 : vector<8xf32> to vector<8x1xf32>
    %cst_58 = arith.constant 3.200000e+01 : f32
    %108 = vector.broadcast %cst_58 : f32 to vector<8x1xf32>
    %109 = arith.divf %107, %108 : vector<8x1xf32>
    %110 = vector.broadcast %102 : vector<8x1xf32> to vector<8x32xf32>
    %111 = arith.subf %94, %110 : vector<8x32xf32>
    %cst_59 = arith.constant 9.99999974E-6 : f32
    %112 = vector.broadcast %cst_59 : f32 to vector<8x1xf32>
    %113 = arith.addf %109, %112 : vector<8x1xf32>
    %114 = math.rsqrt %113 : vector<8x1xf32>
    %115 = vector.broadcast %114 : vector<8x1xf32> to vector<8x32xf32>
    %116 = arith.mulf %111, %115 : vector<8x32xf32>
    %117 = vector.broadcast %96 : vector<1x32xf32> to vector<8x32xf32>
    %118 = arith.mulf %116, %117 : vector<8x32xf32>
    %119 = vector.broadcast %98 : vector<1x32xf32> to vector<8x32xf32>
    %120 = arith.addf %118, %119 : vector<8x32xf32>
    %121 = arith.truncf %120 : vector<8x32xf32> to vector<8x32xbf16>
    %c1 = arith.constant 1 : index
    %c0_60 = arith.constant 0 : index
    %c0_61 = arith.constant 0 : index
    %122 = vector.load %arg2[%c1, %c0_60, %c0_61] : memref<2x32x96xbf16, #tpu.memory_space<vmem>>, vector<1x32x96xbf16>
    %123 = vector.shape_cast %122 : vector<1x32x96xbf16> to vector<32x96xbf16>
    %cst_62 = arith.constant dense<0.000000e+00> : vector<8x96xf32>
    %124 = tpu.matmul %121, %123, %cst_62 {dimension_numbers = #tpu.dot_dimension_numbers<[1], [0], [0], [1], [0, 0, 1, 1], [], []>} : vector<8x32xbf16>, vector<32x96xbf16>, vector<8x96xf32> -> vector<8x96xf32>
    %c1_63 = arith.constant 1 : index
    %c0_64 = arith.constant 0 : index
    %c0_65 = arith.constant 0 : index
    %125 = vector.load %arg3[%c1_63, %c0_64, %c0_65] : memref<2x1x96xf32, #tpu.memory_space<vmem>>, vector<1x1x96xf32>
    %126 = vector.shape_cast %125 : vector<1x1x96xf32> to vector<1x96xf32>
    %127 = vector.broadcast %126 : vector<1x96xf32> to vector<8x96xf32>
    %128 = arith.addf %124, %127 : vector<8x96xf32>
    %129 = vector.extract_strided_slice %128 {offsets = [0, 0], sizes = [8, 32], strides = [1, 1]} : vector<8x96xf32> to vector<8x32xf32>
    %130 = vector.shape_cast %129 : vector<8x32xf32> to vector<8x4x8xf32>
    %131 = tpu.transpose %130, [1, 0, 2] : vector<8x4x8xf32> -> vector<4x8x8xf32>
    %132 = vector.extract_strided_slice %128 {offsets = [0, 32], sizes = [8, 32], strides = [1, 1]} : vector<8x96xf32> to vector<8x32xf32>
    %133 = vector.shape_cast %132 : vector<8x32xf32> to vector<8x4x8xf32>
    %134 = tpu.transpose %133, [1, 0, 2] : vector<8x4x8xf32> -> vector<4x8x8xf32>
    %135 = vector.extract_strided_slice %128 {offsets = [0, 64], sizes = [8, 32], strides = [1, 1]} : vector<8x96xf32> to vector<8x32xf32>
    %136 = vector.shape_cast %135 : vector<8x32xf32> to vector<8x4x8xf32>
    %137 = tpu.transpose %136, [1, 0, 2] : vector<8x4x8xf32> -> vector<4x8x8xf32>
    %138 = arith.truncf %131 : vector<4x8x8xf32> to vector<4x8x8xbf16>
    %139 = arith.truncf %134 : vector<4x8x8xf32> to vector<4x8x8xbf16>
    %cst_66 = arith.constant dense<0.000000e+00> : vector<4x8x8xf32>
    %140 = tpu.matmul %138, %139, %cst_66 {dimension_numbers = #tpu.dot_dimension_numbers<[2], [2], [1], [1], [0, 0, 0, 1, 1, 1], [0], [0]>} : vector<4x8x8xbf16>, vector<4x8x8xbf16>, vector<4x8x8xf32> -> vector<4x8x8xf32>
    %cst_67 = arith.constant dense<0xFF800000> : vector<4x8xf32>
    %141 = vector.multi_reduction <maximumf>, %140, %cst_67 [2] : vector<4x8x8xf32> to vector<4x8xf32>
    %142 = vector.shape_cast %141 : vector<4x8xf32> to vector<4x8x1xf32>
    %143 = vector.broadcast %142 : vector<4x8x1xf32> to vector<4x8x8xf32>
    %144 = arith.subf %140, %143 : vector<4x8x8xf32>
    %145 = math.exp %144 : vector<4x8x8xf32>
    %cst_68 = arith.constant dense<0.000000e+00> : vector<4x8xf32>
    %146 = vector.multi_reduction <add>, %145, %cst_68 [2] : vector<4x8x8xf32> to vector<4x8xf32>
    %147 = vector.shape_cast %146 : vector<4x8xf32> to vector<4x8x1xf32>
    %148 = vector.broadcast %147 : vector<4x8x1xf32> to vector<4x8x8xf32>
    %149 = arith.divf %145, %148 : vector<4x8x8xf32>
    %150 = tpu.transpose %149, [1, 0, 2] : vector<4x8x8xf32> -> vector<8x4x8xf32>
    %151 = vector.shape_cast %150 : vector<8x4x8xf32> to vector<8x32xf32>
    %c0_69 = arith.constant 0 : index
    %c1_70 = arith.constant 1 : index
    %c0_71 = arith.constant 0 : index
    %c0_72 = arith.constant 0 : index
    %152 = vector.load %arg17[%c0_69, %c1_70, %c0_71, %c0_72] : memref<1x2x8x32xf32, #tpu.memory_space<vmem>>, vector<1x1x8x32xf32>
    %153 = vector.shape_cast %152 : vector<1x1x8x32xf32> to vector<8x32xf32>
    %154 = vector.shape_cast %151 : vector<8x32xf32> to vector<1x1x8x32xf32>
    tpu.vector_store %arg17[%c0_69, %c1_70, %c0_71, %c0_72], %154 {strides = array<i32>} : memref<1x2x8x32xf32, #tpu.memory_space<vmem>>, vector<1x1x8x32xf32>,
    %155 = arith.truncf %149 : vector<4x8x8xf32> to vector<4x8x8xbf16>
    %156 = arith.truncf %137 : vector<4x8x8xf32> to vector<4x8x8xbf16>
    %cst_73 = arith.constant dense<0.000000e+00> : vector<4x8x8xf32>
    %157 = tpu.matmul %155, %156, %cst_73 {dimension_numbers = #tpu.dot_dimension_numbers<[2], [1], [1], [2], [0, 0, 0, 1, 1, 2], [0], [0]>} : vector<4x8x8xbf16>, vector<4x8x8xbf16>, vector<4x8x8xf32> -> vector<4x8x8xf32>
    %158 = tpu.transpose %157, [1, 0, 2] : vector<4x8x8xf32> -> vector<8x4x8xf32>
    %159 = vector.shape_cast %158 : vector<8x4x8xf32> to vector<8x32xf32>
    %160 = arith.truncf %159 : vector<8x32xf32> to vector<8x32xbf16>
    %c1_74 = arith.constant 1 : index
    %c0_75 = arith.constant 0 : index
    %c0_76 = arith.constant 0 : index
    %161 = vector.load %arg4[%c1_74, %c0_75, %c0_76] : memref<2x32x32xbf16, #tpu.memory_space<vmem>>, vector<1x32x32xbf16>
    %162 = vector.shape_cast %161 : vector<1x32x32xbf16> to vector<32x32xbf16>
    %cst_77 = arith.constant dense<0.000000e+00> : vector<8x32xf32>
    %163 = tpu.matmul %160, %162, %cst_77 {dimension_numbers = #tpu.dot_dimension_numbers<[1], [0], [0], [1], [0, 0, 1, 1], [], []>} : vector<8x32xbf16>, vector<32x32xbf16>, vector<8x32xf32> -> vector<8x32xf32>
    %c1_78 = arith.constant 1 : index
    %c0_79 = arith.constant 0 : index
    %c0_80 = arith.constant 0 : index
    %164 = vector.load %arg5[%c1_78, %c0_79, %c0_80] : memref<2x1x32xf32, #tpu.memory_space<vmem>>, vector<1x1x32xf32>
    %165 = vector.shape_cast %164 : vector<1x1x32xf32> to vector<1x32xf32>
    %166 = vector.broadcast %165 : vector<1x32xf32> to vector<8x32xf32>
    %167 = arith.addf %163, %166 : vector<8x32xf32>
    %168 = arith.addf %120, %167 : vector<8x32xf32>
    %c1_81 = arith.constant 1 : index
    %c0_82 = arith.constant 0 : index
    %c0_83 = arith.constant 0 : index
    %169 = vector.load %arg6[%c1_81, %c0_82, %c0_83] : memref<2x1x32xf32, #tpu.memory_space<vmem>>, vector<1x1x32xf32>
    %170 = vector.shape_cast %169 : vector<1x1x32xf32> to vector<1x32xf32>
    %c1_84 = arith.constant 1 : index
    %c0_85 = arith.constant 0 : index
    %c0_86 = arith.constant 0 : index
    %171 = vector.load %arg7[%c1_84, %c0_85, %c0_86] : memref<2x1x32xf32, #tpu.memory_space<vmem>>, vector<1x1x32xf32>
    %172 = vector.shape_cast %171 : vector<1x1x32xf32> to vector<1x32xf32>
    %cst_87 = arith.constant dense<0.000000e+00> : vector<8xf32>
    %173 = vector.multi_reduction <add>, %168, %cst_87 [1] : vector<8x32xf32> to vector<8xf32>
    %174 = vector.shape_cast %173 : vector<8xf32> to vector<8x1xf32>
    %cst_88 = arith.constant 3.200000e+01 : f32
    %175 = vector.broadcast %cst_88 : f32 to vector<8x1xf32>
    %176 = arith.divf %174, %175 : vector<8x1xf32>
    %177 = vector.broadcast %176 : vector<8x1xf32> to vector<8x32xf32>
    %178 = arith.subf %168, %177 : vector<8x32xf32>
    %179 = arith.mulf %178, %178 : vector<8x32xf32>
    %cst_89 = arith.constant dense<0.000000e+00> : vector<8xf32>
    %180 = vector.multi_reduction <add>, %179, %cst_89 [1] : vector<8x32xf32> to vector<8xf32>
    %181 = vector.shape_cast %180 : vector<8xf32> to vector<8x1xf32>
    %cst_90 = arith.constant 3.200000e+01 : f32
    %182 = vector.broadcast %cst_90 : f32 to vector<8x1xf32>
    %183 = arith.divf %181, %182 : vector<8x1xf32>
    %184 = vector.broadcast %176 : vector<8x1xf32> to vector<8x32xf32>
    %185 = arith.subf %168, %184 : vector<8x32xf32>
    %cst_91 = arith.constant 9.99999974E-6 : f32
    %186 = vector.broadcast %cst_91 : f32 to vector<8x1xf32>
    %187 = arith.addf %183, %186 : vector<8x1xf32>
    %188 = math.rsqrt %187 : vector<8x1xf32>
    %189 = vector.broadcast %188 : vector<8x1xf32> to vector<8x32xf32>
    %190 = arith.mulf %185, %189 : vector<8x32xf32>
    %191 = vector.broadcast %170 : vector<1x32xf32> to vector<8x32xf32>
    %192 = arith.mulf %190, %191 : vector<8x32xf32>
    %193 = vector.broadcast %172 : vector<1x32xf32> to vector<8x32xf32>
    %194 = arith.addf %192, %193 : vector<8x32xf32>
    %195 = arith.truncf %194 : vector<8x32xf32> to vector<8x32xbf16>
    %c1_92 = arith.constant 1 : index
    %c0_93 = arith.constant 0 : index
    %c0_94 = arith.constant 0 : index
    %196 = vector.load %arg8[%c1_92, %c0_93, %c0_94] : memref<2x32x64xbf16, #tpu.memory_space<vmem>>, vector<1x32x64xbf16>
    %197 = vector.shape_cast %196 : vector<1x32x64xbf16> to vector<32x64xbf16>
    %cst_95 = arith.constant dense<0.000000e+00> : vector<8x64xf32>
    %198 = tpu.matmul %195, %197, %cst_95 {dimension_numbers = #tpu.dot_dimension_numbers<[1], [0], [0], [1], [0, 0, 1, 1], [], []>} : vector<8x32xbf16>, vector<32x64xbf16>, vector<8x64xf32> -> vector<8x64xf32>
    %c1_96 = arith.constant 1 : index
    %c0_97 = arith.constant 0 : index
    %c0_98 = arith.constant 0 : index
    %199 = vector.load %arg9[%c1_96, %c0_97, %c0_98] : memref<2x1x64xf32, #tpu.memory_space<vmem>>, vector<1x1x64xf32>
    %200 = vector.shape_cast %199 : vector<1x1x64xf32> to vector<1x64xf32>
    %201 = vector.broadcast %200 : vector<1x64xf32> to vector<8x64xf32>
    %202 = arith.addf %198, %201 : vector<8x64xf32>
    %cst_99 = arith.constant 0.000000e+00 : f32
    %203 = vector.broadcast %cst_99 : f32 to vector<8x64xf32>
    %204 = arith.maximumf %202, %203 : vector<8x64xf32>
    %205 = arith.truncf %204 : vector<8x64xf32> to vector<8x64xbf16>
    %c1_100 = arith.constant 1 : index
    %c0_101 = arith.constant 0 : index
    %c0_102 = arith.constant 0 : index
    %206 = vector.load %arg10[%c1_100, %c0_101, %c0_102] : memref<2x64x32xbf16, #tpu.memory_space<vmem>>, vector<1x64x32xbf16>
    %207 = vector.shape_cast %206 : vector<1x64x32xbf16> to vector<64x32xbf16>
    %cst_103 = arith.constant dense<0.000000e+00> : vector<8x32xf32>
    %208 = tpu.matmul %205, %207, %cst_103 {dimension_numbers = #tpu.dot_dimension_numbers<[1], [0], [0], [1], [0, 0, 1, 1], [], []>} : vector<8x64xbf16>, vector<64x32xbf16>, vector<8x32xf32> -> vector<8x32xf32>
    %c1_104 = arith.constant 1 : index
    %c0_105 = arith.constant 0 : index
    %c0_106 = arith.constant 0 : index
    %209 = vector.load %arg11[%c1_104, %c0_105, %c0_106] : memref<2x1x32xf32, #tpu.memory_space<vmem>>, vector<1x1x32xf32>
    %210 = vector.shape_cast %209 : vector<1x1x32xf32> to vector<1x32xf32>
    %211 = vector.broadcast %210 : vector<1x32xf32> to vector<8x32xf32>
    %212 = arith.addf %208, %211 : vector<8x32xf32>
    %213 = arith.addf %194, %212 : vector<8x32xf32>
    %c1_107 = arith.constant 1 : index
    %c0_108 = arith.constant 0 : index
    %c0_109 = arith.constant 0 : index
    %214 = vector.load %arg12[%c1_107, %c0_108, %c0_109] : memref<2x1x32xf32, #tpu.memory_space<vmem>>, vector<1x1x32xf32>
    %215 = vector.shape_cast %214 : vector<1x1x32xf32> to vector<1x32xf32>
    %c1_110 = arith.constant 1 : index
    %c0_111 = arith.constant 0 : index
    %c0_112 = arith.constant 0 : index
    %216 = vector.load %arg13[%c1_110, %c0_111, %c0_112] : memref<2x1x32xf32, #tpu.memory_space<vmem>>, vector<1x1x32xf32>
    %217 = vector.shape_cast %216 : vector<1x1x32xf32> to vector<1x32xf32>
    %cst_113 = arith.constant dense<0.000000e+00> : vector<8xf32>
    %218 = vector.multi_reduction <add>, %213, %cst_113 [1] : vector<8x32xf32> to vector<8xf32>
    %219 = vector.shape_cast %218 : vector<8xf32> to vector<8x1xf32>
    %cst_114 = arith.constant 3.200000e+01 : f32
    %220 = vector.broadcast %cst_114 : f32 to vector<8x1xf32>
    %221 = arith.divf %219, %220 : vector<8x1xf32>
    %222 = vector.broadcast %221 : vector<8x1xf32> to vector<8x32xf32>
    %223 = arith.subf %213, %222 : vector<8x32xf32>
    %224 = arith.mulf %223, %223 : vector<8x32xf32>
    %cst_115 = arith.constant dense<0.000000e+00> : vector<8xf32>
    %225 = vector.multi_reduction <add>, %224, %cst_115 [1] : vector<8x32xf32> to vector<8xf32>
    %226 = vector.shape_cast %225 : vector<8xf32> to vector<8x1xf32>
    %cst_116 = arith.constant 3.200000e+01 : f32
    %227 = vector.broadcast %cst_116 : f32 to vector<8x1xf32>
    %228 = arith.divf %226, %227 : vector<8x1xf32>
    %229 = vector.broadcast %221 : vector<8x1xf32> to vector<8x32xf32>
    %230 = arith.subf %213, %229 : vector<8x32xf32>
    %cst_117 = arith.constant 9.99999974E-6 : f32
    %231 = vector.broadcast %cst_117 : f32 to vector<8x1xf32>
    %232 = arith.addf %228, %231 : vector<8x1xf32>
    %233 = math.rsqrt %232 : vector<8x1xf32>
    %234 = vector.broadcast %233 : vector<8x1xf32> to vector<8x32xf32>
    %235 = arith.mulf %230, %234 : vector<8x32xf32>
    %236 = vector.broadcast %215 : vector<1x32xf32> to vector<8x32xf32>
    %237 = arith.mulf %235, %236 : vector<8x32xf32>
    %238 = vector.broadcast %217 : vector<1x32xf32> to vector<8x32xf32>
    %239 = arith.addf %237, %238 : vector<8x32xf32>
    %c0_118 = arith.constant 0 : index
    %c0_119 = arith.constant 0 : index
    %240 = vector.load %arg14[%c0_118, %c0_119] : memref<1x32xf32, #tpu.memory_space<vmem>>, vector<1x32xf32>
    %c0_120 = arith.constant 0 : index
    %c0_121 = arith.constant 0 : index
    %241 = vector.load %arg15[%c0_120, %c0_121] : memref<1x32xf32, #tpu.memory_space<vmem>>, vector<1x32xf32>
    %cst_122 = arith.constant dense<0.000000e+00> : vector<8xf32>
    %242 = vector.multi_reduction <add>, %239, %cst_122 [1] : vector<8x32xf32> to vector<8xf32>
    %243 = vector.shape_cast %242 : vector<8xf32> to vector<8x1xf32>
    %cst_123 = arith.constant 3.200000e+01 : f32
    %244 = vector.broadcast %cst_123 : f32 to vector<8x1xf32>
    %245 = arith.divf %243, %244 : vector<8x1xf32>
    %246 = vector.broadcast %245 : vector<8x1xf32> to vector<8x32xf32>
    %247 = arith.subf %239, %246 : vector<8x32xf32>
    %248 = arith.mulf %247, %247 : vector<8x32xf32>
    %cst_124 = arith.constant dense<0.000000e+00> : vector<8xf32>
    %249 = vector.multi_reduction <add>, %248, %cst_124 [1] : vector<8x32xf32> to vector<8xf32>
    %250 = vector.shape_cast %249 : vector<8xf32> to vector<8x1xf32>
    %cst_125 = arith.constant 3.200000e+01 : f32
    %251 = vector.broadcast %cst_125 : f32 to vector<8x1xf32>
    %252 = arith.divf %250, %251 : vector<8x1xf32>
    %253 = vector.broadcast %245 : vector<8x1xf32> to vector<8x32xf32>
    %254 = arith.subf %239, %253 : vector<8x32xf32>
    %cst_126 = arith.constant 9.99999974E-6 : f32
    %255 = vector.broadcast %cst_126 : f32 to vector<8x1xf32>
    %256 = arith.addf %252, %255 : vector<8x1xf32>
    %257 = math.rsqrt %256 : vector<8x1xf32>
    %258 = vector.broadcast %257 : vector<8x1xf32> to vector<8x32xf32>
    %259 = arith.mulf %254, %258 : vector<8x32xf32>
    %260 = vector.broadcast %240 : vector<1x32xf32> to vector<8x32xf32>
    %261 = arith.mulf %259, %260 : vector<8x32xf32>
    %262 = vector.broadcast %241 : vector<1x32xf32> to vector<8x32xf32>
    %263 = arith.addf %261, %262 : vector<8x32xf32>
    %c0_127 = arith.constant 0 : index
    %c0_128 = arith.constant 0 : index
    %c0_129 = arith.constant 0 : index
    %264 = vector.load %arg16[%c0_127, %c0_128, %c0_129] : memref<1x8x32xf32, #tpu.memory_space<vmem>>, vector<1x8x32xf32>
    %265 = vector.shape_cast %264 : vector<1x8x32xf32> to vector<8x32xf32>
    %266 = vector.shape_cast %263 : vector<8x32xf32> to vector<1x8x32xf32>
    tpu.vector_store %arg16[%c0_127, %c0_128, %c0_129], %266 {strides = array<i32>} : memref<1x8x32xf32, #tpu.memory_space<vmem>>, vector<1x8x32xf32>,
    return
  }
  func.func @transform_0(%arg0: i32) -> (i32, i32, i32) {
    %c0_i32 = arith.constant 0 : i32
    %c0_i32_0 = arith.constant 0 : i32
    %c0_i32_1 = arith.constant 0 : i32
    return %arg0, %c0_i32, %c0_i32_0 : i32, i32, i32
  }
  func.func @transform_1(%arg0: i32) -> (i32, i32, i32) {
    %c0_i32 = arith.constant 0 : i32
    %c0_i32_0 = arith.constant 0 : i32
    %c0_i32_1 = arith.constant 0 : i32
    %c0_i32_2 = arith.constant 0 : i32
    return %c0_i32, %c0_i32_0, %c0_i32_1 : i32, i32, i32
  }
  func.func @transform_2(%arg0: i32) -> (i32, i32, i32) {
    %c0_i32 = arith.constant 0 : i32
    %c0_i32_0 = arith.constant 0 : i32
    %c0_i32_1 = arith.constant 0 : i32
    %c0_i32_2 = arith.constant 0 : i32
    return %c0_i32, %c0_i32_0, %c0_i32_1 : i32, i32, i32
  }
  func.func @transform_3(%arg0: i32) -> (i32, i32, i32) {
    %c0_i32 = arith.constant 0 : i32
    %c0_i32_0 = arith.constant 0 : i32
    %c0_i32_1 = arith.constant 0 : i32
    %c0_i32_2 = arith.constant 0 : i32
    return %c0_i32, %c0_i32_0, %c0_i32_1 : i32, i32, i32
  }
  func.func @transform_4(%arg0: i32) -> (i32, i32, i32) {
    %c0_i32 = arith.constant 0 : i32
    %c0_i32_0 = arith.constant 0 : i32
    %c0_i32_1 = arith.constant 0 : i32
    %c0_i32_2 = arith.constant 0 : i32
    return %c0_i32, %c0_i32_0, %c0_i32_1 : i32, i32, i32
  }
  func.func @transform_5(%arg0: i32) -> (i32, i32, i32) {
    %c0_i32 = arith.constant 0 : i32
    %c0_i32_0 = arith.constant 0 : i32
    %c0_i32_1 = arith.constant 0 : i32
    %c0_i32_2 = arith.constant 0 : i32
    return %c0_i32, %c0_i32_0, %c0_i32_1 : i32, i32, i32
  }
  func.func @transform_6(%arg0: i32) -> (i32, i32, i32) {
    %c0_i32 = arith.constant 0 : i32
    %c0_i32_0 = arith.constant 0 : i32
    %c0_i32_1 = arith.constant 0 : i32
    %c0_i32_2 = arith.constant 0 : i32
    return %c0_i32, %c0_i32_0, %c0_i32_1 : i32, i32, i32
  }
  func.func @transform_7(%arg0: i32) -> (i32, i32, i32) {
    %c0_i32 = arith.constant 0 : i32
    %c0_i32_0 = arith.constant 0 : i32
    %c0_i32_1 = arith.constant 0 : i32
    %c0_i32_2 = arith.constant 0 : i32
    return %c0_i32, %c0_i32_0, %c0_i32_1 : i32, i32, i32
  }
  func.func @transform_8(%arg0: i32) -> (i32, i32, i32) {
    %c0_i32 = arith.constant 0 : i32
    %c0_i32_0 = arith.constant 0 : i32
    %c0_i32_1 = arith.constant 0 : i32
    %c0_i32_2 = arith.constant 0 : i32
    return %c0_i32, %c0_i32_0, %c0_i32_1 : i32, i32, i32
  }
  func.func @transform_9(%arg0: i32) -> (i32, i32, i32) {
    %c0_i32 = arith.constant 0 : i32
    %c0_i32_0 = arith.constant 0 : i32
    %c0_i32_1 = arith.constant 0 : i32
    %c0_i32_2 = arith.constant 0 : i32
    return %c0_i32, %c0_i32_0, %c0_i32_1 : i32, i32, i32
  }
  func.func @transform_10(%arg0: i32) -> (i32, i32, i32) {
    %c0_i32 = arith.constant 0 : i32
    %c0_i32_0 = arith.constant 0 : i32
    %c0_i32_1 = arith.constant 0 : i32
    %c0_i32_2 = arith.constant 0 : i32
    return %c0_i32, %c0_i32_0, %c0_i32_1 : i32, i32, i32
  }
  func.func @transform_11(%arg0: i32) -> (i32, i32, i32) {
    %c0_i32 = arith.constant 0 : i32
    %c0_i32_0 = arith.constant 0 : i32
    %c0_i32_1 = arith.constant 0 : i32
    %c0_i32_2 = arith.constant 0 : i32
    return %c0_i32, %c0_i32_0, %c0_i32_1 : i32, i32, i32
  }
  func.func @transform_12(%arg0: i32) -> (i32, i32, i32) {
    %c0_i32 = arith.constant 0 : i32
    %c0_i32_0 = arith.constant 0 : i32
    %c0_i32_1 = arith.constant 0 : i32
    %c0_i32_2 = arith.constant 0 : i32
    return %c0_i32, %c0_i32_0, %c0_i32_1 : i32, i32, i32
  }
  func.func @transform_13(%arg0: i32) -> (i32, i32) {
    %c0_i32 = arith.constant 0 : i32
    %c0_i32_0 = arith.constant 0 : i32
    %c0_i32_1 = arith.constant 0 : i32
    return %c0_i32, %c0_i32_0 : i32, i32
  }
  func.func @transform_14(%arg0: i32) -> (i32, i32) {
    %c0_i32 = arith.constant 0 : i32
    %c0_i32_0 = arith.constant 0 : i32
    %c0_i32_1 = arith.constant 0 : i32
    return %c0_i32, %c0_i32_0 : i32, i32
  }
  func.func @transform_15(%arg0: i32) -> (i32, i32, i32) {
    %c0_i32 = arith.constant 0 : i32
    %c0_i32_0 = arith.constant 0 : i32
    %c0_i32_1 = arith.constant 0 : i32
    return %arg0, %c0_i32, %c0_i32_0 : i32, i32, i32
  }
  func.func @transform_16(%arg0: i32) -> (i32, i32, i32, i32) {
    %c0_i32 = arith.constant 0 : i32
    %c0_i32_0 = arith.constant 0 : i32
    %c0_i32_1 = arith.constant 0 : i32
    %c0_i32_2 = arith.constant 0 : i32
    return %arg0, %c0_i32, %c0_i32_0, %c0_i32_1 : i32, i32, i32, i32
  }
}

</mosaic_0001>

<llo_original>
// kernel: encoder_forward.1
$region0: #{encoder_forward.1}
  #allocation0 [shape = 'u32[]', space=smem, size = 0x4, offset = 0x4, fixed_abs, tag = 'smem constant byte address 0x4 - core index']
  #allocation1 [shape = 'u32[72,128]{1,0:T(1,128)}', space=vmem, size = 0x9000, scoped, tag = 'internal scratch']
  %s0 = inlined_call_operand.hbm [shape: f32[2,8,32], index: 0, kind: input, shape index: {}]
  %s1 = inlined_call_operand.vmem [shape: bf16[2,32,96], index: 1, kind: input, shape index: {}]
  %s2 = inlined_call_operand.vmem [shape: f32[2,1,96], index: 2, kind: input, shape index: {}]
  %s3 = inlined_call_operand.vmem [shape: bf16[2,32,32], index: 3, kind: input, shape index: {}]
  %s4 = inlined_call_operand.vmem [shape: f32[2,1,32], index: 4, kind: input, shape index: {}]
  %s5 = inlined_call_operand.vmem [shape: f32[2,1,32], index: 5, kind: input, shape index: {}]
  %s6 = inlined_call_operand.hbm [shape: f32[2,1,32], index: 6, kind: input, shape index: {}]
  %s7 = inlined_call_operand.vmem [shape: bf16[2,32,64], index: 7, kind: input, shape index: {}]
  %s8 = inlined_call_operand.hbm [shape: f32[2,1,64], index: 8, kind: input, shape index: {}]
  %s9 = inlined_call_operand.vmem [shape: bf16[2,64,32], index: 9, kind: input, shape index: {}]
  %s10 = inlined_call_operand.hbm [shape: f32[2,1,32], index: 10, kind: input, shape index: {}]
  %s11 = inlined_call_operand.hbm [shape: f32[2,1,32], index: 11, kind: input, shape index: {}]
  %s12 = inlined_call_operand.hbm [shape: f32[2,1,32], index: 12, kind: input, shape index: {}]
  %s13 = inlined_call_operand.vmem [shape: f32[1,32], index: 13, kind: input, shape index: {}]
  %s14 = inlined_call_operand.hbm [shape: f32[1,32], index: 14, kind: input, shape index: {}]
  %s15 = inlined_call_operand.hbm [shape: f32[2,8,32], index: 15, kind: output, shape index: {0}]
  %s16 = inlined_call_operand.vmem [shape: f32[2,2,8,32], index: 16, kind: output, shape index: {1}]
  %17 = xla_tuple %s15, %s16
  %s18 = sld [smem:[#allocation0]]
  $region129: #{encoder_forward.1} parent=0
    _
  %s20 = ssub.s32 1, %s18
  %s21 = scalar_select 0, %s20, %s18
  $region1: #{encoder_forward.1} parent=0
    #allocation2 [shape = 'u8[8192]{0}', space=vmem, size = 0x2000, scoped, tag = 'input window, operand 0']
    #allocation3 [shape = 's32[2]{0}', space=sflag, size = 0x8, scoped, tag = 'scoped memory for encoder_forward.1']
    #allocation4 [shape = 's32[2]{0}', space=sflag, size = 0x8, scoped, tag = 'scoped memory for encoder_forward.1']
    #allocation5 [shape = 'u8[1024]{0}', space=vmem, size = 0x400, scoped, tag = 'input window, operand 6, single buffered']
    #allocation6 [shape = 's32[1]{0}', space=sflag, size = 0x4, scoped, tag = 'scoped memory for encoder_forward.1']
    #allocation7 [shape = 'u8[1024]{0}', space=vmem, size = 0x400, scoped, tag = 'input window, operand 8, single buffered']
    #allocation8 [shape = 'u8[1024]{0}', space=vmem, size = 0x400, scoped, tag = 'input window, operand 10, single buffered']
    #allocation9 [shape = 's32[1]{0}', space=sflag, size = 0x4, scoped, tag = 'scoped memory for encoder_forward.1']
    #allocation10 [shape = 'u8[1024]{0}', space=vmem, size = 0x400, scoped, tag = 'input window, operand 11, single buffered']
    #allocation11 [shape = 'u8[1024]{0}', space=vmem, size = 0x400, scoped, tag = 'input window, operand 12, single buffered']
    #allocation12 [shape = 's32[1]{0}', space=sflag, size = 0x4, scoped, tag = 'scoped memory for encoder_forward.1']
    #allocation13 [shape = 'u8[512]{0}', space=vmem, size = 0x400, scoped, tag = 'input window, operand 14, single buffered']
    #allocation14 [shape = 'u8[8192]{0}', space=vmem, size = 0x2000, scoped, tag = 'output window, operand 0']
    %22 = vsyncpa [#allocation3], 0
    %s23 = scalar_lea.sflag [#allocation3], 1
    %24 = vsyncpa %s23, 0
    %25 = vsyncpa [#allocation6], 0
    %26 = vsyncpa [#allocation9], 0
    %27 = vsyncpa [#allocation12], 0
    %28 = vsyncpa [#allocation4], 0
    %s29 = scalar_lea.sflag [#allocation4], 1
    %30 = vsyncpa %s29, 0
    loop: start=0, step=1, limit=4
    $region2: #{encoder_forward.1} parent=1 // loop_pre_header
      _
    $region3: #{encoder_forward.1} parent=1 // loop_header
      %s32 = sphi 0, %s36
      %p33 = scmp.ge.s32.totalorder %s32, 4
      %s42 = sphi 0, %s44
      %s45 = sphi 0, %s42
      %s46 = sphi 0, %s45
      %s62 = sphi 0, %s46
      %s66 = sphi 0, %s66
      %s68 = sphi 0, %s66
      %s69 = sphi 0, %s68
      %s83 = sphi 0, %s69
      %s87 = sphi 0, %s87
      %s89 = sphi 0, %s87
      %s90 = sphi 0, %s89
      %s104 = sphi 0, %s90
      %s108 = sphi 0, %s108
      %s110 = sphi 0, %s108
      %s111 = sphi 0, %s110
      %s125 = sphi 0, %s111
      %s129 = sphi 0, %s129
      %s131 = sphi 0, %s129
      %s132 = sphi 0, %s131
      %s146 = sphi 0, %s132
      %s150 = sphi 0, %s150
      %s152 = sphi 0, %s150
      %s153 = sphi 0, %s152
      %s167 = sphi 0, %s153
      %s171 = sphi 0, %s171
      %s173 = sphi 0, %s171
      %s174 = sphi 0, %s173
      %s188 = sphi 0, %s174
      %s192 = sphi 0, %s192
      %s194 = sphi 0, %s192
      %s195 = sphi 0, %s194
      %s209 = sphi 0, %s195
      %s213 = sphi 0, %s213
      %s215 = sphi 0, %s213
      %s216 = sphi 0, %s215
      %s230 = sphi 0, %s216
      %s234 = sphi 0, %s234
      %s236 = sphi 0, %s234
      %s237 = sphi 0, %s236
      %s251 = sphi 0, %s237
      %s255 = sphi 0, %s255
      %s257 = sphi 0, %s255
      %s258 = sphi 0, %s257
      %s272 = sphi 0, %s258
      %s276 = sphi 0, %s276
      %s278 = sphi 0, %s276
      %s279 = sphi 0, %s278
      %s293 = sphi 0, %s279
      %s297 = sphi 0, %s297
      %s299 = sphi 0, %s297
      %s300 = sphi 0, %s299
      %s314 = sphi 0, %s300
      %s318 = sphi 0, %s318
      %s320 = sphi 0, %s318
      %s321 = sphi 0, %s320
      %s335 = sphi 0, %s321
      %s339 = sphi 0, %s339
      %s341 = sphi 0, %s339
      %s342 = sphi 0, %s341
      %s356 = sphi 0, %s342
      %s362 = sphi 0, %s364
      %s365 = sphi 0, %s362
      %s366 = sphi 0, %s365
      %s382 = sphi 0, %s366
      %s388 = sphi 0, %s390
      %s391 = sphi 0, %s388
      %s392 = sphi 0, %s391
      %s408 = sphi 0, %s392
    $region4: #{encoder_forward.1} parent=1 // loop_header_branch
      %35 = sbr.rel (%p33) target = $region8
    $region5: #{encoder_forward.1} parent=1 // loop_body
      %s37 = ssub.s32 %s32, 1
      %s38 = ssub.s32 %s32, 2
      %s39 = sadd.s32 %s32, 1
      %s40 = ssub.s32 %s32, %s39
      %p41 = scmp.eq.s32.totalorder %s40, 0
      %s43 = sadd.s32 %s42, 1
      %s44 = scalar_select %p41, %s42, %s43
      %p47 = pneg %p41
      %p48 = scmp.eq.s32.totalorder %s32, 1
      %p49 = por %p47, %p48
      %p50 = scmp.ne.s32.totalorder %s42, %s45
      %p51 = scmp.eq.s32.totalorder %s32, 0
      %p52 = por %p50, %p51
      %p53 = scmp.ne.s32.totalorder %s42, %s45
      %p54 = scmp.eq.s32.totalorder %s37, 1
      %p55 = por %p53, %p54
      %p56 = scmp.ne.s32.totalorder %s45, %s46
      %p57 = scmp.eq.s32.totalorder %s37, 0
      %p58 = por %p56, %p57
      %p59 = scmp.ne.s32.totalorder %s45, %s46
      %p60 = scmp.eq.s32.totalorder %s38, 1
      %p61 = por %p59, %p60
      %p63 = scmp.ne.s32.totalorder %s46, %s62
      %p64 = scmp.eq.s32.totalorder %s38, 0
      %p65 = por %p63, %p64
      %s67 = sadd.s32 %s66, 1
      %p70 = scmp.eq.s32.totalorder %s32, 1
      %p71 = scmp.ne.s32.totalorder %s66, %s68
      %p72 = scmp.eq.s32.totalorder %s32, 0
      %p73 = por %p71, %p72
      %p74 = scmp.ne.s32.totalorder %s66, %s68
      %p75 = scmp.eq.s32.totalorder %s37, 1
      %p76 = por %p74, %p75
      %p77 = scmp.ne.s32.totalorder %s68, %s69
      %p78 = scmp.eq.s32.totalorder %s37, 0
      %p79 = por %p77, %p78
      %p80 = scmp.ne.s32.totalorder %s68, %s69
      %p81 = scmp.eq.s32.totalorder %s38, 1
      %p82 = por %p80, %p81
      %p84 = scmp.ne.s32.totalorder %s69, %s83
      %p85 = scmp.eq.s32.totalorder %s38, 0
      %p86 = por %p84, %p85
      %s88 = sadd.s32 %s87, 1
      %p91 = scmp.eq.s32.totalorder %s32, 1
      %p92 = scmp.ne.s32.totalorder %s87, %s89
      %p93 = scmp.eq.s32.totalorder %s32, 0
      %p94 = por %p92, %p93
      %p95 = scmp.ne.s32.totalorder %s87, %s89
      %p96 = scmp.eq.s32.totalorder %s37, 1
      %p97 = por %p95, %p96
      %p98 = scmp.ne.s32.totalorder %s89, %s90
      %p99 = scmp.eq.s32.totalorder %s37, 0
      %p100 = por %p98, %p99
      %p101 = scmp.ne.s32.totalorder %s89, %s90
      %p102 = scmp.eq.s32.totalorder %s38, 1
      %p103 = por %p101, %p102
      %p105 = scmp.ne.s32.totalorder %s90, %s104
      %p106 = scmp.eq.s32.totalorder %s38, 0
      %p107 = por %p105, %p106
      %s109 = sadd.s32 %s108, 1
      %p112 = scmp.eq.s32.totalorder %s32, 1
      %p113 = scmp.ne.s32.totalorder %s108, %s110
      %p114 = scmp.eq.s32.totalorder %s32, 0
      %p115 = por %p113, %p114
      %p116 = scmp.ne.s32.totalorder %s108, %s110
      %p117 = scmp.eq.s32.totalorder %s37, 1
      %p118 = por %p116, %p117
      %p119 = scmp.ne.s32.totalorder %s110, %s111
      %p120 = scmp.eq.s32.totalorder %s37, 0
      %p121 = por %p119, %p120
      %p122 = scmp.ne.s32.totalorder %s110, %s111
      %p123 = scmp.eq.s32.totalorder %s38, 1
      %p124 = por %p122, %p123
      %p126 = scmp.ne.s32.totalorder %s111, %s125
      %p127 = scmp.eq.s32.totalorder %s38, 0
      %p128 = por %p126, %p127
      %s130 = sadd.s32 %s129, 1
      %p133 = scmp.eq.s32.totalorder %s32, 1
      %p134 = scmp.ne.s32.totalorder %s129, %s131
      %p135 = scmp.eq.s32.totalorder %s32, 0
      %p136 = por %p134, %p135
      %p137 = scmp.ne.s32.totalorder %s129, %s131
      %p138 = scmp.eq.s32.totalorder %s37, 1
      %p139 = por %p137, %p138
      %p140 = scmp.ne.s32.totalorder %s131, %s132
      %p141 = scmp.eq.s32.totalorder %s37, 0
      %p142 = por %p140, %p141
      %p143 = scmp.ne.s32.totalorder %s131, %s132
      %p144 = scmp.eq.s32.totalorder %s38, 1
      %p145 = por %p143, %p144
      %p147 = scmp.ne.s32.totalorder %s132, %s146
      %p148 = scmp.eq.s32.totalorder %s38, 0
      %p149 = por %p147, %p148
      %s151 = sadd.s32 %s150, 1
      %p154 = scmp.eq.s32.totalorder %s32, 1
      %p155 = scmp.ne.s32.totalorder %s150, %s152
      %p156 = scmp.eq.s32.totalorder %s32, 0
      %p157 = por %p155, %p156
      %p158 = scmp.ne.s32.totalorder %s150, %s152
      %p159 = scmp.eq.s32.totalorder %s37, 1
      %p160 = por %p158, %p159
      %p161 = scmp.ne.s32.totalorder %s152, %s153
      %p162 = scmp.eq.s32.totalorder %s37, 0
      %p163 = por %p161, %p162
      %p164 = scmp.ne.s32.totalorder %s152, %s153
      %p165 = scmp.eq.s32.totalorder %s38, 1
      %p166 = por %p164, %p165
      %p168 = scmp.ne.s32.totalorder %s153, %s167
      %p169 = scmp.eq.s32.totalorder %s38, 0
      %p170 = por %p168, %p169
      %s172 = sadd.s32 %s171, 1
      %p175 = scmp.eq.s32.totalorder %s32, 1
      %p176 = scmp.ne.s32.totalorder %s171, %s173
      %p177 = scmp.eq.s32.totalorder %s32, 0
      %p178 = por %p176, %p177
      %p179 = scmp.ne.s32.totalorder %s171, %s173
      %p180 = scmp.eq.s32.totalorder %s37, 1
      %p181 = por %p179, %p180
      %p182 = scmp.ne.s32.totalorder %s173, %s174
      %p183 = scmp.eq.s32.totalorder %s37, 0
      %p184 = por %p182, %p183
      %p185 = scmp.ne.s32.totalorder %s173, %s174
      %p186 = scmp.eq.s32.totalorder %s38, 1
      %p187 = por %p185, %p186
      %p189 = scmp.ne.s32.totalorder %s174, %s188
      %p190 = scmp.eq.s32.totalorder %s38, 0
      %p191 = por %p189, %p190
      %s193 = sadd.s32 %s192, 1
      %p196 = scmp.eq.s32.totalorder %s32, 1
      %p197 = scmp.ne.s32.totalorder %s192, %s194
      %p198 = scmp.eq.s32.totalorder %s32, 0
      %p199 = por %p197, %p198
      %p200 = scmp.ne.s32.totalorder %s192, %s194
      %p201 = scmp.eq.s32.totalorder %s37, 1
      %p202 = por %p200, %p201
      %p203 = scmp.ne.s32.totalorder %s194, %s195
      %p204 = scmp.eq.s32.totalorder %s37, 0
      %p205 = por %p203, %p204
      %p206 = scmp.ne.s32.totalorder %s194, %s195
      %p207 = scmp.eq.s32.totalorder %s38, 1
      %p208 = por %p206, %p207
      %p210 = scmp.ne.s32.totalorder %s195, %s209
      %p211 = scmp.eq.s32.totalorder %s38, 0
      %p212 = por %p210, %p211
      %s214 = sadd.s32 %s213, 1
      %p217 = scmp.eq.s32.totalorder %s32, 1
      %p218 = scmp.ne.s32.totalorder %s213, %s215
      %p219 = scmp.eq.s32.totalorder %s32, 0
      %p220 = por %p218, %p219
      %p221 = scmp.ne.s32.totalorder %s213, %s215
      %p222 = scmp.eq.s32.totalorder %s37, 1
      %p223 = por %p221, %p222
      %p224 = scmp.ne.s32.totalorder %s215, %s216
      %p225 = scmp.eq.s32.totalorder %s37, 0
      %p226 = por %p224, %p225
      %p227 = scmp.ne.s32.totalorder %s215, %s216
      %p228 = scmp.eq.s32.totalorder %s38, 1
      %p229 = por %p227, %p228
      %p231 = scmp.ne.s32.totalorder %s216, %s230
      %p232 = scmp.eq.s32.totalorder %s38, 0
      %p233 = por %p231, %p232
      %s235 = sadd.s32 %s234, 1
      %p238 = scmp.eq.s32.totalorder %s32, 1
      %p239 = scmp.ne.s32.totalorder %s234, %s236
      %p240 = scmp.eq.s32.totalorder %s32, 0
      %p241 = por %p239, %p240
      %p242 = scmp.ne.s32.totalorder %s234, %s236
      %p243 = scmp.eq.s32.totalorder %s37, 1
      %p244 = por %p242, %p243
      %p245 = scmp.ne.s32.totalorder %s236, %s237
      %p246 = scmp.eq.s32.totalorder %s37, 0
      %p247 = por %p245, %p246
      %p248 = scmp.ne.s32.totalorder %s236, %s237
      %p249 = scmp.eq.s32.totalorder %s38, 1
      %p250 = por %p248, %p249
      %p252 = scmp.ne.s32.totalorder %s237, %s251
      %p253 = scmp.eq.s32.totalorder %s38, 0
      %p254 = por %p252, %p253
      %s256 = sadd.s32 %s255, 1
      %p259 = scmp.eq.s32.totalorder %s32, 1
      %p260 = scmp.ne.s32.totalorder %s255, %s257
      %p261 = scmp.eq.s32.totalorder %s32, 0
      %p262 = por %p260, %p261
      %p263 = scmp.ne.s32.totalorder %s255, %s257
      %p264 = scmp.eq.s32.totalorder %s37, 1
      %p265 = por %p263, %p264
      %p266 = scmp.ne.s32.totalorder %s257, %s258
      %p267 = scmp.eq.s32.totalorder %s37, 0
      %p268 = por %p266, %p267
      %p269 = scmp.ne.s32.totalorder %s257, %s258
      %p270 = scmp.eq.s32.totalorder %s38, 1
      %p271 = por %p269, %p270
      %p273 = scmp.ne.s32.totalorder %s258, %s272
      %p274 = scmp.eq.s32.totalorder %s38, 0
      %p275 = por %p273, %p274
      %s277 = sadd.s32 %s276, 1
      %p280 = scmp.eq.s32.totalorder %s32, 1
      %p281 = scmp.ne.s32.totalorder %s276, %s278
      %p282 = scmp.eq.s32.totalorder %s32, 0
      %p283 = por %p281, %p282
      %p284 = scmp.ne.s32.totalorder %s276, %s278
      %p285 = scmp.eq.s32.totalorder %s37, 1
      %p286 = por %p284, %p285
      %p287 = scmp.ne.s32.totalorder %s278, %s279
      %p288 = scmp.eq.s32.totalorder %s37, 0
      %p289 = por %p287, %p288
      %p290 = scmp.ne.s32.totalorder %s278, %s279
      %p291 = scmp.eq.s32.totalorder %s38, 1
      %p292 = por %p290, %p291
      %p294 = scmp.ne.s32.totalorder %s279, %s293
      %p295 = scmp.eq.s32.totalorder %s38, 0
      %p296 = por %p294, %p295
      %s298 = sadd.s32 %s297, 1
      %p301 = scmp.eq.s32.totalorder %s32, 1
      %p302 = scmp.ne.s32.totalorder %s297, %s299
      %p303 = scmp.eq.s32.totalorder %s32, 0
      %p304 = por %p302, %p303
      %p305 = scmp.ne.s32.totalorder %s297, %s299
      %p306 = scmp.eq.s32.totalorder %s37, 1
      %p307 = por %p305, %p306
      %p308 = scmp.ne.s32.totalorder %s299, %s300
      %p309 = scmp.eq.s32.totalorder %s37, 0
      %p310 = por %p308, %p309
      %p311 = scmp.ne.s32.totalorder %s299, %s300
      %p312 = scmp.eq.s32.totalorder %s38, 1
      %p313 = por %p311, %p312
      %p315 = scmp.ne.s32.totalorder %s300, %s314
      %p316 = scmp.eq.s32.totalorder %s38, 0
      %p317 = por %p315, %p316
      %s319 = sadd.s32 %s318, 1
      %p322 = scmp.eq.s32.totalorder %s32, 1
      %p323 = scmp.ne.s32.totalorder %s318, %s320
      %p324 = scmp.eq.s32.totalorder %s32, 0
      %p325 = por %p323, %p324
      %p326 = scmp.ne.s32.totalorder %s318, %s320
      %p327 = scmp.eq.s32.totalorder %s37, 1
      %p328 = por %p326, %p327
      %p329 = scmp.ne.s32.totalorder %s320, %s321
      %p330 = scmp.eq.s32.totalorder %s37, 0
      %p331 = por %p329, %p330
      %p332 = scmp.ne.s32.totalorder %s320, %s321
      %p333 = scmp.eq.s32.totalorder %s38, 1
      %p334 = por %p332, %p333
      %p336 = scmp.ne.s32.totalorder %s321, %s335
      %p337 = scmp.eq.s32.totalorder %s38, 0
      %p338 = por %p336, %p337
      %s340 = sadd.s32 %s339, 1
      %p343 = scmp.eq.s32.totalorder %s32, 1
      %p344 = scmp.ne.s32.totalorder %s339, %s341
      %p345 = scmp.eq.s32.totalorder %s32, 0
      %p346 = por %p344, %p345
      %p347 = scmp.ne.s32.totalorder %s339, %s341
      %p348 = scmp.eq.s32.totalorder %s37, 1
      %p349 = por %p347, %p348
      %p350 = scmp.ne.s32.totalorder %s341, %s342
      %p351 = scmp.eq.s32.totalorder %s37, 0
      %p352 = por %p350, %p351
      %p353 = scmp.ne.s32.totalorder %s341, %s342
      %p354 = scmp.eq.s32.totalorder %s38, 1
      %p355 = por %p353, %p354
      %p357 = scmp.ne.s32.totalorder %s342, %s356
      %p358 = scmp.eq.s32.totalorder %s38, 0
      %p359 = por %p357, %p358
      %s360 = ssub.s32 %s32, %s39
      %p361 = scmp.eq.s32.totalorder %s360, 0
      %s363 = sadd.s32 %s362, 1
      %s364 = scalar_select %p361, %s362, %s363
      %p367 = pneg %p361
      %p368 = scmp.eq.s32.totalorder %s32, 1
      %p369 = por %p367, %p368
      %p370 = scmp.ne.s32.totalorder %s362, %s365
      %p371 = scmp.eq.s32.totalorder %s32, 0
      %p372 = por %p370, %p371
      %p373 = scmp.ne.s32.totalorder %s362, %s365
      %p374 = scmp.eq.s32.totalorder %s37, 1
      %p375 = por %p373, %p374
      %p376 = scmp.ne.s32.totalorder %s365, %s366
      %p377 = scmp.eq.s32.totalorder %s37, 0
      %p378 = por %p376, %p377
      %p379 = scmp.ne.s32.totalorder %s365, %s366
      %p380 = scmp.eq.s32.totalorder %s38, 1
      %p381 = por %p379, %p380
      %p383 = scmp.ne.s32.totalorder %s366, %s382
      %p384 = scmp.eq.s32.totalorder %s38, 0
      %p385 = por %p383, %p384
      %s386 = ssub.s32 %s32, %s39
      %p387 = scmp.eq.s32.totalorder %s386, 0
      %s389 = sadd.s32 %s388, 1
      %s390 = scalar_select %p387, %s388, %s389
      %p393 = pneg %p387
      %p394 = scmp.eq.s32.totalorder %s32, 1
      %p395 = por %p393, %p394
      %p396 = scmp.ne.s32.totalorder %s388, %s391
      %p397 = scmp.eq.s32.totalorder %s32, 0
      %p398 = por %p396, %p397
      %p399 = scmp.ne.s32.totalorder %s388, %s391
      %p400 = scmp.eq.s32.totalorder %s37, 1
      %p401 = por %p399, %p400
      %p402 = scmp.ne.s32.totalorder %s391, %s392
      %p403 = scmp.eq.s32.totalorder %s37, 0
      %p404 = por %p402, %p403
      %p405 = scmp.ne.s32.totalorder %s391, %s392
      %p406 = scmp.eq.s32.totalorder %s38, 1
      %p407 = por %p405, %p406
      %p409 = scmp.ne.s32.totalorder %s392, %s408
      %p410 = scmp.eq.s32.totalorder %s38, 0
      %p411 = por %p409, %p410
      %p412 = scmp.le.s32.totalorder 1, %s32
      %p413 = scmp.lt.s32.totalorder %s32, 3
      %p414 = pnand %p412, %p413
      %p415 = pneg %p414
      // Predicated region
      $region9: #{encoder_forward.1} parent=5 // pred_check
        _
      $region10: #{encoder_forward.1} parent=5 // pred_check_branch
        %417 = sbr.rel (%p414) target = $region12
      $region11: #{encoder_forward.1} parent=5 // pred_region
        %s418 = ssub.s32 %s32, 1
        // Predicated region
        $region13: #{encoder_forward.1} parent=11 // pred_check
          %p419 = pneg %p79
        $region14: #{encoder_forward.1} parent=11 // pred_check_branch
          %421 = sbr.rel (%p419) target = $region16
        $region15: #{encoder_forward.1} parent=11 // pred_region
          _
        $region16: #{encoder_forward.1} parent=11 // pred_fallthru
          _
        // Predicated region
        $region17: #{encoder_forward.1} parent=11 // pred_check
          %p422 = pneg %p100
        $region18: #{encoder_forward.1} parent=11 // pred_check_branch
          %424 = sbr.rel (%p422) target = $region20
        $region19: #{encoder_forward.1} parent=11 // pred_region
          _
        $region20: #{encoder_forward.1} parent=11 // pred_fallthru
          _
        // Predicated region
        $region21: #{encoder_forward.1} parent=11 // pred_check
          %p425 = pneg %p121
        $region22: #{encoder_forward.1} parent=11 // pred_check_branch
          %427 = sbr.rel (%p425) target = $region24
        $region23: #{encoder_forward.1} parent=11 // pred_region
          _
        $region24: #{encoder_forward.1} parent=11 // pred_fallthru
          _
        // Predicated region
        $region25: #{encoder_forward.1} parent=11 // pred_check
          %p428 = pneg %p142
        $region26: #{encoder_forward.1} parent=11 // pred_check_branch
          %430 = sbr.rel (%p428) target = $region28
        $region27: #{encoder_forward.1} parent=11 // pred_region
          _
        $region28: #{encoder_forward.1} parent=11 // pred_fallthru
          _
        // Predicated region
        $region29: #{encoder_forward.1} parent=11 // pred_check
          %p431 = pneg %p163
        $region30: #{encoder_forward.1} parent=11 // pred_check_branch
          %433 = sbr.rel (%p431) target = $region32
        $region31: #{encoder_forward.1} parent=11 // pred_region
          _
        $region32: #{encoder_forward.1} parent=11 // pred_fallthru
          _
        // Predicated region
        $region33: #{encoder_forward.1} parent=11 // pred_check
          %p434 = pneg %p184
        $region34: #{encoder_forward.1} parent=11 // pred_check_branch
          %436 = sbr.rel (%p434) target = $region36
        $region35: #{encoder_forward.1} parent=11 // pred_region
          %438 = vsyncadd [#allocation6], 0
          %s439 = sshll.u32 %s6, 4
          %s440 = int_to_ptr.hbm [resolvable:$true] %s439
          %s441 = sshll.u32 [#allocation5], 4
          %s442 = int_to_ptr.vmem [resolvable:$true] %s441
          %447 = dma.hbm_to_vmem [thread:$0]  %s440, 32, %s442, [#allocation6], 16, 16, 1
        $region36: #{encoder_forward.1} parent=11 // pred_fallthru
          _
        // Predicated region
        $region37: #{encoder_forward.1} parent=11 // pred_check
          %p448 = pneg %p205
        $region38: #{encoder_forward.1} parent=11 // pred_check_branch
          %450 = sbr.rel (%p448) target = $region40
        $region39: #{encoder_forward.1} parent=11 // pred_region
          _
        $region40: #{encoder_forward.1} parent=11 // pred_fallthru
          _
        // Predicated region
        $region41: #{encoder_forward.1} parent=11 // pred_check
          %p451 = pneg %p226
        $region42: #{encoder_forward.1} parent=11 // pred_check_branch
          %453 = sbr.rel (%p451) target = $region44
        $region43: #{encoder_forward.1} parent=11 // pred_region
          %455 = vsyncadd [#allocation6], 0
          %s456 = sshll.u32 %s8, 4
          %s457 = int_to_ptr.hbm [resolvable:$true] %s456
          %s458 = sshll.u32 [#allocation7], 4
          %s459 = int_to_ptr.vmem [resolvable:$true] %s458
          %464 = dma.hbm_to_vmem [thread:$0]  %s457, 32, %s459, [#allocation6], 16, 16, 1
        $region44: #{encoder_forward.1} parent=11 // pred_fallthru
          _
        // Predicated region
        $region45: #{encoder_forward.1} parent=11 // pred_check
          %p465 = pneg %p247
        $region46: #{encoder_forward.1} parent=11 // pred_check_branch
          %467 = sbr.rel (%p465) target = $region48
        $region47: #{encoder_forward.1} parent=11 // pred_region
          _
        $region48: #{encoder_forward.1} parent=11 // pred_fallthru
          _
        // Predicated region
        $region49: #{encoder_forward.1} parent=11 // pred_check
          %p468 = pneg %p268
        $region50: #{encoder_forward.1} parent=11 // pred_check_branch
          %470 = sbr.rel (%p468) target = $region52
        $region51: #{encoder_forward.1} parent=11 // pred_region
          %472 = vsyncadd [#allocation9], 0
          %s473 = sshll.u32 %s10, 4
          %s474 = int_to_ptr.hbm [resolvable:$true] %s473
          %s475 = sshll.u32 [#allocation8], 4
          %s476 = int_to_ptr.vmem [resolvable:$true] %s475
          %481 = dma.hbm_to_vmem [thread:$0]  %s474, 32, %s476, [#allocation9], 16, 16, 1
        $region52: #{encoder_forward.1} parent=11 // pred_fallthru
          _
        // Predicated region
        $region53: #{encoder_forward.1} parent=11 // pred_check
          %p482 = pneg %p289
        $region54: #{encoder_forward.1} parent=11 // pred_check_branch
          %484 = sbr.rel (%p482) target = $region56
        $region55: #{encoder_forward.1} parent=11 // pred_region
          %486 = vsyncadd [#allocation9], 0
          %s487 = sshll.u32 %s11, 4
          %s488 = int_to_ptr.hbm [resolvable:$true] %s487
          %s489 = sshll.u32 [#allocation10], 4
          %s490 = int_to_ptr.vmem [resolvable:$true] %s489
          %495 = dma.hbm_to_vmem [thread:$0]  %s488, 32, %s490, [#allocation9], 16, 16, 1
        $region56: #{encoder_forward.1} parent=11 // pred_fallthru
          _
        // Predicated region
        $region57: #{encoder_forward.1} parent=11 // pred_check
          %p496 = pneg %p310
        $region58: #{encoder_forward.1} parent=11 // pred_check_branch
          %498 = sbr.rel (%p496) target = $region60
        $region59: #{encoder_forward.1} parent=11 // pred_region
          %500 = vsyncadd [#allocation12], 0
          %s501 = sshll.u32 %s12, 4
          %s502 = int_to_ptr.hbm [resolvable:$true] %s501
          %s503 = sshll.u32 [#allocation11], 4
          %s504 = int_to_ptr.vmem [resolvable:$true] %s503
          %509 = dma.hbm_to_vmem [thread:$0]  %s502, 32, %s504, [#allocation12], 16, 16, 1
        $region60: #{encoder_forward.1} parent=11 // pred_fallthru
          _
        // Predicated region
        $region61: #{encoder_forward.1} parent=11 // pred_check
          %p510 = pneg %p331
        $region62: #{encoder_forward.1} parent=11 // pred_check_branch
          %512 = sbr.rel (%p510) target = $region64
        $region63: #{encoder_forward.1} parent=11 // pred_region
          _
        $region64: #{encoder_forward.1} parent=11 // pred_fallthru
          _
        // Predicated region
        $region65: #{encoder_forward.1} parent=11 // pred_check
          %p513 = pneg %p352
        $region66: #{encoder_forward.1} parent=11 // pred_check_branch
          %515 = sbr.rel (%p513) target = $region68
        $region67: #{encoder_forward.1} parent=11 // pred_region
          %517 = vsyncadd [#allocation12], 0
          %s519 = sshll.u32 %s14, 4
          %s520 = int_to_ptr.hbm [resolvable:$true] %s519
          %s521 = sshll.u32 [#allocation13], 4
          %s522 = int_to_ptr.vmem [resolvable:$true] %s521
          %524 = dma.hbm_to_vmem [thread:$0]  %s520, 16, %s522, [#allocation12]
        $region68: #{encoder_forward.1} parent=11 // pred_fallthru
          _
      $region12: #{encoder_forward.1} parent=5 // pred_fallthru
        _
      %p525 = scmp.lt.s32.totalorder %s32, 2
      // Predicated region
      $region69: #{encoder_forward.1} parent=5 // pred_check
        %p526 = pneg %p525
      $region70: #{encoder_forward.1} parent=5 // pred_check_branch
        %528 = sbr.rel (%p526) target = $region72
      $region71: #{encoder_forward.1} parent=5 // pred_region
        // Predicated region
        $region73: #{encoder_forward.1} parent=71 // pred_check
          %p529 = pneg %p52
        $region74: #{encoder_forward.1} parent=71 // pred_check_branch
          %531 = sbr.rel (%p529) target = $region76
        $region75: #{encoder_forward.1} parent=71 // pred_region
          %s532 = sand.u32 %s42, 1
          %s533 = scalar_lea.sflag [#allocation3], %s532
          %s534 = sand.u32 %s42, 1
          %s535 = smul.addr %s534, 8
          %s536 = scalar_lea.vmem [#allocation2], %s535
          %538 = vsyncadd %s533, 0
          %s539 = smul.addr %s32, 8
          %s540 = scalar_lea.hbm %s0, %s539
          %s542 = sshll.u32 %s540, 4
          %s543 = int_to_ptr.hbm [resolvable:$true] %s542
          %s544 = sshll.u32 %s536, 4
          %s545 = int_to_ptr.vmem [resolvable:$true] %s544
          %547 = dma.hbm_to_vmem [thread:$0]  %s543, 128, %s545, %s533
        $region76: #{encoder_forward.1} parent=71 // pred_fallthru
          _
      $region72: #{encoder_forward.1} parent=5 // pred_fallthru
        _
      %p548 = scmp.le.s32.totalorder 1, %s32
      %p549 = scmp.lt.s32.totalorder %s32, 3
      %p550 = pnand %p548, %p549
      %p551 = pneg %p550
      // Predicated region
      $region77: #{encoder_forward.1} parent=5 // pred_check
        _
      $region78: #{encoder_forward.1} parent=5 // pred_check_branch
        %553 = sbr.rel (%p550) target = $region80
      $region79: #{encoder_forward.1} parent=5 // pred_region
        %s554 = ssub.s32 %s32, 1
        %s555 = sand.u32 %s45, 1
        %s556 = scalar_lea.sflag [#allocation3], %s555
        %s557 = sand.u32 %s45, 1
        %s558 = smul.addr %s557, 8
        %s559 = scalar_lea.vmem [#allocation2], %s558
        // Predicated region
        $region81: #{encoder_forward.1} parent=79 // pred_check
          %p560 = pneg %p58
        $region82: #{encoder_forward.1} parent=79 // pred_check_branch
          %562 = sbr.rel (%p560) target = $region84
        $region83: #{encoder_forward.1} parent=79 // pred_region
          %564 = dma.done %s556, 128
        $region84: #{encoder_forward.1} parent=79 // pred_fallthru
          _
        // Predicated region
        $region85: #{encoder_forward.1} parent=79 // pred_check
          %p565 = pneg %p184
        $region86: #{encoder_forward.1} parent=79 // pred_check_branch
          %567 = sbr.rel (%p565) target = $region88
        $region87: #{encoder_forward.1} parent=79 // pred_region
          %569 = dma.done [#allocation6], 32
        $region88: #{encoder_forward.1} parent=79 // pred_fallthru
          _
        // Predicated region
        $region89: #{encoder_forward.1} parent=79 // pred_check
          %p570 = pneg %p226
        $region90: #{encoder_forward.1} parent=79 // pred_check_branch
          %572 = sbr.rel (%p570) target = $region92
        $region91: #{encoder_forward.1} parent=79 // pred_region
          %574 = dma.done [#allocation6], 32
        $region92: #{encoder_forward.1} parent=79 // pred_fallthru
          _
        // Predicated region
        $region93: #{encoder_forward.1} parent=79 // pred_check
          %p575 = pneg %p268
        $region94: #{encoder_forward.1} parent=79 // pred_check_branch
          %577 = sbr.rel (%p575) target = $region96
        $region95: #{encoder_forward.1} parent=79 // pred_region
          %579 = dma.done [#allocation9], 32
        $region96: #{encoder_forward.1} parent=79 // pred_fallthru
          _
        // Predicated region
        $region97: #{encoder_forward.1} parent=79 // pred_check
          %p580 = pneg %p289
        $region98: #{encoder_forward.1} parent=79 // pred_check_branch
          %582 = sbr.rel (%p580) target = $region100
        $region99: #{encoder_forward.1} parent=79 // pred_region
          %584 = dma.done [#allocation9], 32
        $region100: #{encoder_forward.1} parent=79 // pred_fallthru
          _
        // Predicated region
        $region101: #{encoder_forward.1} parent=79 // pred_check
          %p585 = pneg %p310
        $region102: #{encoder_forward.1} parent=79 // pred_check_branch
          %587 = sbr.rel (%p585) target = $region104
        $region103: #{encoder_forward.1} parent=79 // pred_region
          %589 = dma.done [#allocation12], 32
        $region104: #{encoder_forward.1} parent=79 // pred_fallthru
          _
        // Predicated region
        $region105: #{encoder_forward.1} parent=79 // pred_check
          %p590 = pneg %p352
        $region106: #{encoder_forward.1} parent=79 // pred_check_branch
          %592 = sbr.rel (%p590) target = $region108
        $region107: #{encoder_forward.1} parent=79 // pred_region
          %594 = dma.done [#allocation12], 16
        $region108: #{encoder_forward.1} parent=79 // pred_fallthru
          _
        %s595 = sand.u32 %s45, 1
        %s596 = scalar_lea.sflag [#allocation3], %s595
        %s597 = sand.u32 %s45, 1
        %s598 = smul.addr %s597, 8
        %s599 = scalar_lea.vmem [#allocation2], %s598
        %p600 = pneg %p58
        %p601 = pneg %p55
        %p602 = pneg %p79
        %p603 = pneg %p76
        %p604 = pneg %p100
        %p605 = pneg %p97
        %p606 = pneg %p121
        %p607 = pneg %p118
        %p608 = pneg %p142
        %p609 = pneg %p139
        %p610 = pneg %p163
        %p611 = pneg %p160
        %p612 = pneg %p184
        %p613 = pneg %p181
        %p614 = pneg %p205
        %p615 = pneg %p202
        %p616 = pneg %p226
        %p617 = pneg %p223
        %p618 = pneg %p247
        %p619 = pneg %p244
        %p620 = pneg %p268
        %p621 = pneg %p265
        %p622 = pneg %p289
        %p623 = pneg %p286
        %p624 = pneg %p310
        %p625 = pneg %p307
        %p626 = pneg %p331
        %p627 = pneg %p328
        %p628 = pneg %p352
        %p629 = pneg %p349
        %p630 = pneg %p378
        %p631 = pneg %p375
        %s632 = sand.u32 %s365, 1
        %s633 = scalar_lea.sflag [#allocation4], %s632
        %s634 = sand.u32 %s365, 1
        %s635 = smul.addr %s634, 8
        %s636 = scalar_lea.vmem [#allocation14], %s635
        %p637 = pneg %p404
        %p638 = pneg %p401
        %p639 = scmp.lt.s32.totalorder %s37, 1
        %s640 = scalar_select %p639, %s37, 1
        %s641 = smul.addr %s640, 2
        %s642 = smul.addr %s641, 8
        %s643 = scalar_lea.vmem %s16, %s642
        %p644 = scmp.lt.s32.totalorder %s37, 1
        %s645 = scalar_select %p644, %s37, 1
        %s646 = smul.addr %s645, 2
        %s647 = smul.addr %s646, 8
        %s648 = scalar_lea.vmem %s16, %s647
        %v650 = vld [vmem:[%s559] sm:$0xff]
        %v651 = vpack.c.bf16 %v650, %v650
        %v652 = vld [vmem:[%s1] sm:$0xf]
        %v653 = vld [vmem:[%s1 + $0x4] sm:$0xf]
        %v654 = vld [vmem:[%s1 + $0x8] sm:$0xf]
        %v655 = vld [vmem:[%s1 + $0xc] sm:$0xf]
        %v656 = vld [vmem:[%s2] sm:$0x1]
        %v658 = vperm.slane %v656, 0
        %v664 = vunpack.c.l.b16 %v652
        %v665 = vunpack.c.l.b16 %v653
        %v666 = vunpack.c.l.b16 %v654
        %v667 = vunpack.c.l.b16 %v655
        %v668 = vpack.c.b16 %v665, %v664
        %v669 = vpack.c.b16 %v667, %v666
        %vm672 = vcmask 261120
        %v674 = vsel %vm672, %v651, 0
        %676 = vmatpush.bf16.msra.mxu0 0
        %677 = vmatpush.bf16.msra.mxu0 0
        %678 = vmatpush.bf16.msra.mxu0 0
        %679 = vmatpush.bf16.msra.mxu0 0
        %680 = vmatpush.bf16.msra.mxu0 0
        %681 = vmatpush.bf16.msra.mxu0 0
        %682 = vmatpush.bf16.msra.mxu0 %v669
        %683 = vmatpush.bf16.msra.mxu0 %v668
        %684 = vmatmul.bf16.gmra.mxu0 %v674
        %v685 = vpop.f32.mrf.mxu0
        %v686 = vadd.f32 %v658, %v685
        %v687 = vpop.f32.mrf.mxu0
        %688 = vdwg.mxu0
        %690 = vrot.lane.b32.xlu0 %v686, 120
        %v691 = vpop.permute.xlu0 %690
        %693 = vrot.lane.b32.xlu0 %v686, 112
        %v694 = vpop.permute.xlu0 %693
        %696 = vrot.lane.b32.xlu0 %v686, 104
        %v697 = vpop.permute.xlu0 %696
        %v699 = vrot.slane %v694, 4
        %vm700 = vcmask 1047556
        %v701 = vsel %vm700, %v699, %v686
        %v702 = vrot.slane %v686, 4
        %v703 = vsel %vm700, %v694, %v702
        %v705 = vunpack.c.l.s4 1983009808
        %v706 = vunpack.c.0.s8 %v705
        %v707 = vperm.slane %v701, %v706
        %v709 = vunpack.c.l.s4 1983009808
        %v710 = vunpack.c.0.s8 %v709
        %v711 = vperm.slane %v703, %v710
        %v712 = vrot.slane %v697, 4
        %v713 = vsel %vm700, %v712, %v691
        %v714 = vrot.slane %v691, 4
        %v715 = vsel %vm700, %v697, %v714
        %v717 = vunpack.c.l.s4 1983009808
        %v718 = vunpack.c.0.s8 %v717
        %v719 = vperm.slane %v713, %v718
        %v721 = vunpack.c.l.s4 1983009808
        %v722 = vunpack.c.0.s8 %v721
        %v723 = vperm.slane %v715, %v722
        %v724 = vrot.slane %v719, 4
        %v725 = vsel %vm700, %v724, %v707
        %v726 = vrot.slane %v707, 4
        %v727 = vsel %vm700, %v719, %v726
        %v729 = vunpack.c.l.s4 1934713408
        %v730 = vunpack.c.0.s8 %v729
        %v731 = vperm.slane %v725, %v730
        %v733 = vunpack.c.l.s4 1934713408
        %v734 = vunpack.c.0.s8 %v733
        %v735 = vperm.slane %v727, %v734
        %v736 = vrot.slane %v723, 4
        %v737 = vsel %vm700, %v736, %v711
        %v738 = vrot.slane %v711, 4
        %v739 = vsel %vm700, %v723, %v738
        %v741 = vunpack.c.l.s4 1934713408
        %v742 = vunpack.c.0.s8 %v741
        %v743 = vperm.slane %v737, %v742
        %v745 = vunpack.c.l.s4 1934713408
        %v746 = vunpack.c.0.s8 %v745
        %v747 = vperm.slane %v739, %v746
        %v748 = vrot.slane %v731, 4
        %v749 = vsel %vm700, 0.0, %v748
        %v750 = vrot.slane %v735, 4
        %v751 = vsel %vm700, 0.0, %v750
        %v752 = vrot.slane %v743, 4
        %v753 = vsel %vm700, 0.0, %v752
        %v754 = vrot.slane %v747, 4
        %v755 = vsel %vm700, 0.0, %v754
        %v756 = vsel %vm700, %v750, %v731
        %v758 = vunpack.c.l.s4 1983009808
        %v759 = vunpack.c.0.s8 %v758
        %v760 = vperm.slane %v756, %v759
        %v761 = vrot.slane %v751, 4
        %v762 = vsel %vm700, %v761, %v749
        %v764 = vunpack.c.l.s4 1983009808
        %v765 = vunpack.c.0.s8 %v764
        %v766 = vperm.slane %v762, %v765
        %v767 = vsel %vm700, %v754, %v743
        %v769 = vunpack.c.l.s4 1983009808
        %v770 = vunpack.c.0.s8 %v769
        %v771 = vperm.slane %v767, %v770
        %v772 = vrot.slane %v755, 4
        %v773 = vsel %vm700, %v772, %v753
        %v775 = vunpack.c.l.s4 1983009808
        %v776 = vunpack.c.0.s8 %v775
        %v777 = vperm.slane %v773, %v776
        %v778 = vrot.slane %v766, 4
        %v779 = vsel %vm700, %v778, %v760
        %v780 = vrot.slane %v760, 4
        %v781 = vsel %vm700, %v766, %v780
        %v783 = vunpack.c.l.s4 1934713408
        %v784 = vunpack.c.0.s8 %v783
        %v785 = vperm.slane %v779, %v784
        %v787 = vunpack.c.l.s4 1934713408
        %v788 = vunpack.c.0.s8 %v787
        %v789 = vperm.slane %v781, %v788
        %v790 = vrot.slane %v777, 4
        %v791 = vsel %vm700, %v790, %v771
        %v792 = vrot.slane %v771, 4
        %v793 = vsel %vm700, %v777, %v792
        %v795 = vunpack.c.l.s4 1934713408
        %v796 = vunpack.c.0.s8 %v795
        %v797 = vperm.slane %v791, %v796
        %v799 = vunpack.c.l.s4 1934713408
        %v800 = vunpack.c.0.s8 %v799
        %v801 = vperm.slane %v793, %v800
        %v802 = vrot.slane %v797, 4
        %v803 = vsel %vm700, %v802, %v785
        %v804 = vrot.slane %v785, 4
        %v805 = vsel %vm700, %v797, %v804
        %v806 = vrot.slane %v801, 4
        %v807 = vsel %vm700, %v806, %v789
        %v808 = vrot.slane %v789, 4
        %v809 = vsel %vm700, %v801, %v808
        %810 = vrot.lane.b32.xlu0 %v686, 96
        %v811 = vpop.permute.xlu0 %810
        %812 = vrot.lane.b32.xlu0 %v691, 96
        %v813 = vpop.permute.xlu0 %812
        %814 = vrot.lane.b32.xlu0 %v694, 96
        %v815 = vpop.permute.xlu0 %814
        %816 = vrot.lane.b32.xlu0 %v697, 96
        %v817 = vpop.permute.xlu0 %816
        %v822 = vrot.slane %v815, 4
        %v823 = vsel %vm700, %v822, %v811
        %v824 = vrot.slane %v811, 4
        %v825 = vsel %vm700, %v815, %v824
        %v827 = vunpack.c.l.s4 1983009808
        %v828 = vunpack.c.0.s8 %v827
        %v829 = vperm.slane %v823, %v828
        %v831 = vunpack.c.l.s4 1983009808
        %v832 = vunpack.c.0.s8 %v831
        %v833 = vperm.slane %v825, %v832
        %v834 = vrot.slane %v817, 4
        %v835 = vsel %vm700, %v834, %v813
        %v836 = vrot.slane %v813, 4
        %v837 = vsel %vm700, %v817, %v836
        %v839 = vunpack.c.l.s4 1983009808
        %v840 = vunpack.c.0.s8 %v839
        %v841 = vperm.slane %v835, %v840
        %v843 = vunpack.c.l.s4 1983009808
        %v844 = vunpack.c.0.s8 %v843
        %v845 = vperm.slane %v837, %v844
        %v846 = vrot.slane %v841, 4
        %v847 = vsel %vm700, %v846, %v829
        %v848 = vrot.slane %v829, 4
        %v849 = vsel %vm700, %v841, %v848
        %v851 = vunpack.c.l.s4 1934713408
        %v852 = vunpack.c.0.s8 %v851
        %v853 = vperm.slane %v847, %v852
        %v855 = vunpack.c.l.s4 1934713408
        %v856 = vunpack.c.0.s8 %v855
        %v857 = vperm.slane %v849, %v856
        %v858 = vrot.slane %v845, 4
        %v859 = vsel %vm700, %v858, %v833
        %v860 = vrot.slane %v833, 4
        %v861 = vsel %vm700, %v845, %v860
        %v863 = vunpack.c.l.s4 1934713408
        %v864 = vunpack.c.0.s8 %v863
        %v865 = vperm.slane %v859, %v864
        %v867 = vunpack.c.l.s4 1934713408
        %v868 = vunpack.c.0.s8 %v867
        %v869 = vperm.slane %v861, %v868
        %v870 = vrot.slane %v853, 4
        %v871 = vsel %vm700, 0.0, %v870
        %v872 = vrot.slane %v857, 4
        %v873 = vsel %vm700, 0.0, %v872
        %v874 = vrot.slane %v865, 4
        %v875 = vsel %vm700, 0.0, %v874
        %v876 = vrot.slane %v869, 4
        %v877 = vsel %vm700, 0.0, %v876
        %v878 = vsel %vm700, %v872, %v853
        %v880 = vunpack.c.l.s4 1983009808
        %v881 = vunpack.c.0.s8 %v880
        %v882 = vperm.slane %v878, %v881
        %v883 = vrot.slane %v873, 4
        %v884 = vsel %vm700, %v883, %v871
        %v886 = vunpack.c.l.s4 1983009808
        %v887 = vunpack.c.0.s8 %v886
        %v888 = vperm.slane %v884, %v887
        %v889 = vsel %vm700, %v876, %v865
        %v891 = vunpack.c.l.s4 1983009808
        %v892 = vunpack.c.0.s8 %v891
        %v893 = vperm.slane %v889, %v892
        %v894 = vrot.slane %v877, 4
        %v895 = vsel %vm700, %v894, %v875
        %v897 = vunpack.c.l.s4 1983009808
        %v898 = vunpack.c.0.s8 %v897
        %v899 = vperm.slane %v895, %v898
        %v900 = vrot.slane %v888, 4
        %v901 = vsel %vm700, %v900, %v882
        %v902 = vrot.slane %v882, 4
        %v903 = vsel %vm700, %v888, %v902
        %v905 = vunpack.c.l.s4 1934713408
        %v906 = vunpack.c.0.s8 %v905
        %v907 = vperm.slane %v901, %v906
        %v909 = vunpack.c.l.s4 1934713408
        %v910 = vunpack.c.0.s8 %v909
        %v911 = vperm.slane %v903, %v910
        %v912 = vrot.slane %v899, 4
        %v913 = vsel %vm700, %v912, %v893
        %v914 = vrot.slane %v893, 4
        %v915 = vsel %vm700, %v899, %v914
        %v917 = vunpack.c.l.s4 1934713408
        %v918 = vunpack.c.0.s8 %v917
        %v919 = vperm.slane %v913, %v918
        %v921 = vunpack.c.l.s4 1934713408
        %v922 = vunpack.c.0.s8 %v921
        %v923 = vperm.slane %v915, %v922
        %v924 = vrot.slane %v919, 4
        %v925 = vsel %vm700, %v924, %v907
        %v926 = vrot.slane %v907, 4
        %v927 = vsel %vm700, %v919, %v926
        %v928 = vrot.slane %v923, 4
        %v929 = vsel %vm700, %v928, %v911
        %v930 = vrot.slane %v911, 4
        %v931 = vsel %vm700, %v923, %v930
        %932 = vrot.lane.b32.xlu0 %v686, 64
        %v933 = vpop.permute.xlu0 %932
        %934 = vrot.lane.b32.xlu0 %v691, 64
        %v935 = vpop.permute.xlu0 %934
        %936 = vrot.lane.b32.xlu0 %v694, 64
        %v937 = vpop.permute.xlu0 %936
        %938 = vrot.lane.b32.xlu0 %v697, 64
        %v939 = vpop.permute.xlu0 %938
        %v944 = vrot.slane %v937, 4
        %v945 = vsel %vm700, %v944, %v933
        %v946 = vrot.slane %v933, 4
        %v947 = vsel %vm700, %v937, %v946
        %v949 = vunpack.c.l.s4 1983009808
        %v950 = vunpack.c.0.s8 %v949
        %v951 = vperm.slane %v945, %v950
        %v953 = vunpack.c.l.s4 1983009808
        %v954 = vunpack.c.0.s8 %v953
        %v955 = vperm.slane %v947, %v954
        %v956 = vrot.slane %v939, 4
        %v957 = vsel %vm700, %v956, %v935
        %v958 = vrot.slane %v935, 4
        %v959 = vsel %vm700, %v939, %v958
        %v961 = vunpack.c.l.s4 1983009808
        %v962 = vunpack.c.0.s8 %v961
        %v963 = vperm.slane %v957, %v962
        %v965 = vunpack.c.l.s4 1983009808
        %v966 = vunpack.c.0.s8 %v965
        %v967 = vperm.slane %v959, %v966
        %v968 = vrot.slane %v963, 4
        %v969 = vsel %vm700, %v968, %v951
        %v970 = vrot.slane %v951, 4
        %v971 = vsel %vm700, %v963, %v970
        %v973 = vunpack.c.l.s4 1934713408
        %v974 = vunpack.c.0.s8 %v973
        %v975 = vperm.slane %v969, %v974
        %v977 = vunpack.c.l.s4 1934713408
        %v978 = vunpack.c.0.s8 %v977
        %v979 = vperm.slane %v971, %v978
        %v980 = vrot.slane %v967, 4
        %v981 = vsel %vm700, %v980, %v955
        %v982 = vrot.slane %v955, 4
        %v983 = vsel %vm700, %v967, %v982
        %v985 = vunpack.c.l.s4 1934713408
        %v986 = vunpack.c.0.s8 %v985
        %v987 = vperm.slane %v981, %v986
        %v989 = vunpack.c.l.s4 1934713408
        %v990 = vunpack.c.0.s8 %v989
        %v991 = vperm.slane %v983, %v990
        %v992 = vrot.slane %v975, 4
        %v993 = vsel %vm700, 0.0, %v992
        %v994 = vrot.slane %v979, 4
        %v995 = vsel %vm700, 0.0, %v994
        %v996 = vrot.slane %v987, 4
        %v997 = vsel %vm700, 0.0, %v996
        %v998 = vrot.slane %v991, 4
        %v999 = vsel %vm700, 0.0, %v998
        %v1000 = vsel %vm700, %v994, %v975
        %v1002 = vunpack.c.l.s4 1983009808
        %v1003 = vunpack.c.0.s8 %v1002
        %v1004 = vperm.slane %v1000, %v1003
        %v1005 = vrot.slane %v995, 4
        %v1006 = vsel %vm700, %v1005, %v993
        %v1008 = vunpack.c.l.s4 1983009808
        %v1009 = vunpack.c.0.s8 %v1008
        %v1010 = vperm.slane %v1006, %v1009
        %v1011 = vsel %vm700, %v998, %v987
        %v1013 = vunpack.c.l.s4 1983009808
        %v1014 = vunpack.c.0.s8 %v1013
        %v1015 = vperm.slane %v1011, %v1014
        %v1016 = vrot.slane %v999, 4
        %v1017 = vsel %vm700, %v1016, %v997
        %v1019 = vunpack.c.l.s4 1983009808
        %v1020 = vunpack.c.0.s8 %v1019
        %v1021 = vperm.slane %v1017, %v1020
        %v1022 = vrot.slane %v1010, 4
        %v1023 = vsel %vm700, %v1022, %v1004
        %v1024 = vrot.slane %v1004, 4
        %v1025 = vsel %vm700, %v1010, %v1024
        %v1027 = vunpack.c.l.s4 1934713408
        %v1028 = vunpack.c.0.s8 %v1027
        %v1029 = vperm.slane %v1023, %v1028
        %v1031 = vunpack.c.l.s4 1934713408
        %v1032 = vunpack.c.0.s8 %v1031
        %v1033 = vperm.slane %v1025, %v1032
        %v1034 = vrot.slane %v1021, 4
        %v1035 = vsel %vm700, %v1034, %v1015
        %v1036 = vrot.slane %v1015, 4
        %v1037 = vsel %vm700, %v1021, %v1036
        %v1039 = vunpack.c.l.s4 1934713408
        %v1040 = vunpack.c.0.s8 %v1039
        %v1041 = vperm.slane %v1035, %v1040
        %v1043 = vunpack.c.l.s4 1934713408
        %v1044 = vunpack.c.0.s8 %v1043
        %v1045 = vperm.slane %v1037, %v1044
        %v1046 = vrot.slane %v1041, 4
        %v1047 = vsel %vm700, %v1046, %v1029
        %v1048 = vrot.slane %v1029, 4
        %v1049 = vsel %vm700, %v1041, %v1048
        %v1050 = vrot.slane %v1045, 4
        %v1051 = vsel %vm700, %v1050, %v1033
        %v1052 = vrot.slane %v1033, 4
        %v1053 = vsel %vm700, %v1045, %v1052
        %v1054 = vpack.c.bf16 %v803, %v803
        %v1055 = vpack.c.bf16 %v805, %v805
        %v1056 = vpack.c.bf16 %v807, %v807
        %v1057 = vpack.c.bf16 %v809, %v809
        %v1058 = vpack.c.bf16 %v925, %v925
        %v1059 = vpack.c.bf16 %v927, %v927
        %v1060 = vpack.c.bf16 %v929, %v929
        %v1061 = vpack.c.bf16 %v931, %v931
        %vm1062 = vcmask 64512
        %v1064 = vsel %vm1062, %v1054, 0
        %v1067 = vsel %vm1062, %v1058, 0
        %1069 = vmatpush.bf16.xpose.msra.mxu0 0
        %1070 = vmatpush.bf16.xpose.msra.mxu0 0
        %1071 = vmatpush.bf16.xpose.msra.mxu0 0
        %1072 = vmatpush.bf16.xpose.msra.mxu0 0
        %1073 = vmatpush.bf16.xpose.msra.mxu0 0
        %1074 = vmatpush.bf16.xpose.msra.mxu0 0
        %1075 = vmatpush.bf16.xpose.msra.mxu0 0
        %1076 = vmatpush.bf16.xpose.msra.mxu0 %v1067
        %1077 = vmatmul.bf16.gmra.mxu0 %v1064
        %v1078 = vpop.f32.mrf.mxu0
        %v1079 = vadd.f32 0.0, %v1078
        %v1080 = vpop.f32.mrf.mxu0
        %1081 = vdwg.mxu0
        %v1083 = vsel %vm1062, %v1055, 0
        %v1086 = vsel %vm1062, %v1059, 0
        %1088 = vmatpush.bf16.xpose.msra.mxu0 0
        %1089 = vmatpush.bf16.xpose.msra.mxu0 0
        %1090 = vmatpush.bf16.xpose.msra.mxu0 0
        %1091 = vmatpush.bf16.xpose.msra.mxu0 0
        %1092 = vmatpush.bf16.xpose.msra.mxu0 0
        %1093 = vmatpush.bf16.xpose.msra.mxu0 0
        %1094 = vmatpush.bf16.xpose.msra.mxu0 0
        %1095 = vmatpush.bf16.xpose.msra.mxu0 %v1086
        %1096 = vmatmul.bf16.gmra.mxu0 %v1083
        %v1097 = vpop.f32.mrf.mxu0
        %v1098 = vadd.f32 0.0, %v1097
        %v1099 = vpop.f32.mrf.mxu0
        %1100 = vdwg.mxu0
        %v1102 = vsel %vm1062, %v1056, 0
        %v1105 = vsel %vm1062, %v1060, 0
        %1107 = vmatpush.bf16.xpose.msra.mxu0 0
        %1108 = vmatpush.bf16.xpose.msra.mxu0 0
        %1109 = vmatpush.bf16.xpose.msra.mxu0 0
        %1110 = vmatpush.bf16.xpose.msra.mxu0 0
        %1111 = vmatpush.bf16.xpose.msra.mxu0 0
        %1112 = vmatpush.bf16.xpose.msra.mxu0 0
        %1113 = vmatpush.bf16.xpose.msra.mxu0 0
        %1114 = vmatpush.bf16.xpose.msra.mxu0 %v1105
        %1115 = vmatmul.bf16.gmra.mxu0 %v1102
        %v1116 = vpop.f32.mrf.mxu0
        %v1117 = vadd.f32 0.0, %v1116
        %v1118 = vpop.f32.mrf.mxu0
        %1119 = vdwg.mxu0
        %v1121 = vsel %vm1062, %v1057, 0
        %v1124 = vsel %vm1062, %v1061, 0
        %1126 = vmatpush.bf16.xpose.msra.mxu0 0
        %1127 = vmatpush.bf16.xpose.msra.mxu0 0
        %1128 = vmatpush.bf16.xpose.msra.mxu0 0
        %1129 = vmatpush.bf16.xpose.msra.mxu0 0
        %1130 = vmatpush.bf16.xpose.msra.mxu0 0
        %1131 = vmatpush.bf16.xpose.msra.mxu0 0
        %1132 = vmatpush.bf16.xpose.msra.mxu0 0
        %1133 = vmatpush.bf16.xpose.msra.mxu0 %v1124
        %1134 = vmatmul.bf16.gmra.mxu0 %v1121
        %v1135 = vpop.f32.mrf.mxu0
        %v1136 = vadd.f32 0.0, %v1135
        %v1137 = vpop.f32.mrf.mxu0
        %1138 = vdwg.mxu0
        %v1139 = vsel %vm1062, %v1079, -inf
        %1140 = vmax.xlane.f32.xlu0 %v1139
        %v1141 = vpop.xlane.xlu0 %1140
        %v1142 = vsel %vm1062, %v1098, -inf
        %1143 = vmax.xlane.f32.xlu0 %v1142
        %v1144 = vpop.xlane.xlu0 %1143
        %v1145 = vsel %vm1062, %v1117, -inf
        %1146 = vmax.xlane.f32.xlu0 %v1145
        %v1147 = vpop.xlane.xlu0 %1146
        %v1148 = vsel %vm1062, %v1136, -inf
        %1149 = vmax.xlane.f32.xlu0 %v1148
        %v1150 = vpop.xlane.xlu0 %1149
        %v1151 = vsub.f32 %v1079, %v1141
        %v1152 = vsub.f32 %v1098, %v1144
        %v1153 = vsub.f32 %v1117, %v1147
        %v1154 = vsub.f32 %v1136, %v1150
        %v1155 = vmul.f32 %v1151, 1.442695
        %v1156 = vpow.pop %v1155
        %v1157 = vmul.f32 %v1152, 1.442695
        %v1158 = vpow.pop %v1157
        %v1159 = vmul.f32 %v1153, 1.442695
        %v1160 = vpow.pop %v1159
        %v1161 = vmul.f32 %v1154, 1.442695
        %v1162 = vpow.pop %v1161
        %v1163 = vsel %vm1062, %v1156, 0.0
        %1164 = vadd.xlane.f32.xlu0 %v1163
        %v1165 = vpop.xlane.xlu0 %1164
        %v1166 = vsel %vm1062, %v1158, 0.0
        %1167 = vadd.xlane.f32.xlu0 %v1166
        %v1168 = vpop.xlane.xlu0 %1167
        %v1169 = vsel %vm1062, %v1160, 0.0
        %1170 = vadd.xlane.f32.xlu0 %v1169
        %v1171 = vpop.xlane.xlu0 %1170
        %v1172 = vsel %vm1062, %v1162, 0.0
        %1173 = vadd.xlane.f32.xlu0 %v1172
        %v1174 = vpop.xlane.xlu0 %1173
        %v1175 = vrcp.pop %v1165
        %v1176 = vmul.f32 %v1165, %v1175
        %v1177 = vsub.f32 1.0, %v1176
        %v1178 = vmul.f32 %v1175, %v1177
        %v1179 = vadd.f32 %v1175, %v1178
        %vm1180 = vweird.f32 %v1165
        %vm1181 = vweird.f32 %v1175
        %vm1182 = vmor %vm1180, %vm1181
        %v1183 = vsel %vm1182, %v1175, %v1179
        %v1184 = vand.u32 2147483647, %v1165
        %vm1185 = vcmp.eq.f32.partialorder %v1184, 8.507059e+37
        %v1186 = vand.u32 %v1165, 2147483648
        %v1187 = vor.u32 1.1754944e-38, %v1186
        %v1188 = vsel %vm1185, %v1187, %v1183
        %v1189 = vmul.f32 %v1156, %v1188
        %v1190 = vrcp.pop %v1168
        %v1191 = vmul.f32 %v1168, %v1190
        %v1192 = vsub.f32 1.0, %v1191
        %v1193 = vmul.f32 %v1190, %v1192
        %v1194 = vadd.f32 %v1190, %v1193
        %vm1195 = vweird.f32 %v1168
        %vm1196 = vweird.f32 %v1190
        %vm1197 = vmor %vm1195, %vm1196
        %v1198 = vsel %vm1197, %v1190, %v1194
        %v1199 = vand.u32 2147483647, %v1168
        %vm1200 = vcmp.eq.f32.partialorder %v1199, 8.507059e+37
        %v1201 = vand.u32 %v1168, 2147483648
        %v1202 = vor.u32 1.1754944e-38, %v1201
        %v1203 = vsel %vm1200, %v1202, %v1198
        %v1204 = vmul.f32 %v1158, %v1203
        %v1205 = vrcp.pop %v1171
        %v1206 = vmul.f32 %v1171, %v1205
        %v1207 = vsub.f32 1.0, %v1206
        %v1208 = vmul.f32 %v1205, %v1207
        %v1209 = vadd.f32 %v1205, %v1208
        %vm1210 = vweird.f32 %v1171
        %vm1211 = vweird.f32 %v1205
        %vm1212 = vmor %vm1210, %vm1211
        %v1213 = vsel %vm1212, %v1205, %v1209
        %v1214 = vand.u32 2147483647, %v1171
        %vm1215 = vcmp.eq.f32.partialorder %v1214, 8.507059e+37
        %v1216 = vand.u32 %v1171, 2147483648
        %v1217 = vor.u32 1.1754944e-38, %v1216
        %v1218 = vsel %vm1215, %v1217, %v1213
        %v1219 = vmul.f32 %v1160, %v1218
        %v1220 = vrcp.pop %v1174
        %v1221 = vmul.f32 %v1174, %v1220
        %v1222 = vsub.f32 1.0, %v1221
        %v1223 = vmul.f32 %v1220, %v1222
        %v1224 = vadd.f32 %v1220, %v1223
        %vm1225 = vweird.f32 %v1174
        %vm1226 = vweird.f32 %v1220
        %vm1227 = vmor %vm1225, %vm1226
        %v1228 = vsel %vm1227, %v1220, %v1224
        %v1229 = vand.u32 2147483647, %v1174
        %vm1230 = vcmp.eq.f32.partialorder %v1229, 8.507059e+37
        %v1231 = vand.u32 %v1174, 2147483648
        %v1232 = vor.u32 1.1754944e-38, %v1231
        %v1233 = vsel %vm1230, %v1232, %v1228
        %v1234 = vmul.f32 %v1162, %v1233
        %v1235 = vrot.slane %v1219, 4
        %v1236 = vsel %vm700, %v1235, %v1189
        %v1237 = vrot.slane %v1189, 4
        %v1238 = vsel %vm700, %v1219, %v1237
        %v1240 = vunpack.c.l.s4 1983009808
        %v1241 = vunpack.c.0.s8 %v1240
        %v1242 = vperm.slane %v1236, %v1241
        %v1244 = vunpack.c.l.s4 1983009808
        %v1245 = vunpack.c.0.s8 %v1244
        %v1246 = vperm.slane %v1238, %v1245
        %v1247 = vrot.slane %v1234, 4
        %v1248 = vsel %vm700, %v1247, %v1204
        %v1249 = vrot.slane %v1204, 4
        %v1250 = vsel %vm700, %v1234, %v1249
        %v1252 = vunpack.c.l.s4 1983009808
        %v1253 = vunpack.c.0.s8 %v1252
        %v1254 = vperm.slane %v1248, %v1253
        %v1256 = vunpack.c.l.s4 1983009808
        %v1257 = vunpack.c.0.s8 %v1256
        %v1258 = vperm.slane %v1250, %v1257
        %v1259 = vrot.slane %v1254, 4
        %v1260 = vsel %vm700, %v1259, %v1242
        %v1261 = vrot.slane %v1242, 4
        %v1262 = vsel %vm700, %v1254, %v1261
        %v1264 = vunpack.c.l.s4 1934713408
        %v1265 = vunpack.c.0.s8 %v1264
        %v1266 = vperm.slane %v1260, %v1265
        %v1268 = vunpack.c.l.s4 1934713408
        %v1269 = vunpack.c.0.s8 %v1268
        %v1270 = vperm.slane %v1262, %v1269
        %v1271 = vrot.slane %v1258, 4
        %v1272 = vsel %vm700, %v1271, %v1246
        %v1273 = vrot.slane %v1246, 4
        %v1274 = vsel %vm700, %v1258, %v1273
        %v1276 = vunpack.c.l.s4 1934713408
        %v1277 = vunpack.c.0.s8 %v1276
        %v1278 = vperm.slane %v1272, %v1277
        %v1280 = vunpack.c.l.s4 1934713408
        %v1281 = vunpack.c.0.s8 %v1280
        %v1282 = vperm.slane %v1274, %v1281
        %v1283 = vrot.slane %v1266, 4
        %v1284 = vsel %vm700, 0.0, %v1283
        %v1285 = vrot.slane %v1270, 4
        %v1286 = vsel %vm700, 0.0, %v1285
        %v1287 = vrot.slane %v1278, 4
        %v1288 = vsel %vm700, 0.0, %v1287
        %v1289 = vrot.slane %v1282, 4
        %v1290 = vsel %vm700, 0.0, %v1289
        %v1291 = vsel %vm700, %v1285, %v1266
        %v1293 = vunpack.c.l.s4 1983009808
        %v1294 = vunpack.c.0.s8 %v1293
        %v1295 = vperm.slane %v1291, %v1294
        %v1296 = vrot.slane %v1286, 4
        %v1297 = vsel %vm700, %v1296, %v1284
        %v1299 = vunpack.c.l.s4 1983009808
        %v1300 = vunpack.c.0.s8 %v1299
        %v1301 = vperm.slane %v1297, %v1300
        %v1302 = vsel %vm700, %v1289, %v1278
        %v1304 = vunpack.c.l.s4 1983009808
        %v1305 = vunpack.c.0.s8 %v1304
        %v1306 = vperm.slane %v1302, %v1305
        %v1307 = vrot.slane %v1290, 4
        %v1308 = vsel %vm700, %v1307, %v1288
        %v1310 = vunpack.c.l.s4 1983009808
        %v1311 = vunpack.c.0.s8 %v1310
        %v1312 = vperm.slane %v1308, %v1311
        %v1313 = vrot.slane %v1301, 4
        %v1314 = vsel %vm700, %v1313, %v1295
        %v1315 = vrot.slane %v1295, 4
        %v1316 = vsel %vm700, %v1301, %v1315
        %v1318 = vunpack.c.l.s4 1934713408
        %v1319 = vunpack.c.0.s8 %v1318
        %v1320 = vperm.slane %v1314, %v1319
        %v1322 = vunpack.c.l.s4 1934713408
        %v1323 = vunpack.c.0.s8 %v1322
        %v1324 = vperm.slane %v1316, %v1323
        %v1325 = vrot.slane %v1312, 4
        %v1326 = vsel %vm700, %v1325, %v1306
        %v1327 = vrot.slane %v1306, 4
        %v1328 = vsel %vm700, %v1312, %v1327
        %v1330 = vunpack.c.l.s4 1934713408
        %v1331 = vunpack.c.0.s8 %v1330
        %v1332 = vperm.slane %v1326, %v1331
        %v1334 = vunpack.c.l.s4 1934713408
        %v1335 = vunpack.c.0.s8 %v1334
        %v1336 = vperm.slane %v1328, %v1335
        %v1337 = vrot.slane %v1332, 4
        %v1338 = vsel %vm700, %v1337, %v1320
        %v1339 = vrot.slane %v1320, 4
        %v1340 = vsel %vm700, %v1332, %v1339
        %v1341 = vrot.slane %v1336, 4
        %v1342 = vsel %vm700, %v1341, %v1324
        %v1343 = vrot.slane %v1324, 4
        %v1344 = vsel %vm700, %v1336, %v1343
        %1346 = vrot.lane.b32.xlu0 %v1340, 8
        %v1347 = vpop.permute.xlu0 %1346
        %1350 = vrot.lane.b32.xlu0 %v1342, 16
        %v1351 = vpop.permute.xlu0 %1350
        %1354 = vrot.lane.b32.xlu0 %v1344, 24
        %v1355 = vpop.permute.xlu0 %1354
        %v1357 = vsel %vm1062, %v1338, %v1347
        %vm1358 = vcmask 130048
        %v1359 = vsel %vm1358, %v1357, %v1351
        %vm1360 = vcmask 195584
        %v1361 = vsel %vm1360, %v1359, %v1355
        %1362 = vst.msk [vmem:[%s648] sm:$0xff] %vm672, %v1361
        %v1363 = vpack.c.bf16 %v1189, %v1189
        %v1364 = vpack.c.bf16 %v1204, %v1204
        %v1365 = vpack.c.bf16 %v1219, %v1219
        %v1366 = vpack.c.bf16 %v1234, %v1234
        %v1367 = vpack.c.bf16 %v1047, %v1047
        %v1368 = vpack.c.bf16 %v1049, %v1049
        %v1369 = vpack.c.bf16 %v1051, %v1051
        %v1370 = vpack.c.bf16 %v1053, %v1053
        %v1372 = vsel %vm1062, %v1363, 0
        %vm1374 = vcmask 1043456
        %v1376 = vsel %vm1374, %v1367, 0
        %1378 = vmatpush.bf16.msra.mxu0 0
        %1379 = vmatpush.bf16.msra.mxu0 0
        %1380 = vmatpush.bf16.msra.mxu0 0
        %1381 = vmatpush.bf16.msra.mxu0 0
        %1382 = vmatpush.bf16.msra.mxu0 0
        %1383 = vmatpush.bf16.msra.mxu0 0
        %1384 = vmatpush.bf16.msra.mxu0 0
        %1385 = vmatpush.bf16.msra.mxu0 %v1376
        %1386 = vmatmul.bf16.gmra.mxu0 %v1372
        %v1387 = vpop.f32.mrf.mxu0
        %v1388 = vadd.f32 0.0, %v1387
        %v1389 = vpop.f32.mrf.mxu0
        %1390 = vdwg.mxu0
        %v1392 = vsel %vm1062, %v1364, 0
        %v1395 = vsel %vm1374, %v1368, 0
        %1397 = vmatpush.bf16.msra.mxu0 0
        %1398 = vmatpush.bf16.msra.mxu0 0
        %1399 = vmatpush.bf16.msra.mxu0 0
        %1400 = vmatpush.bf16.msra.mxu0 0
        %1401 = vmatpush.bf16.msra.mxu0 0
        %1402 = vmatpush.bf16.msra.mxu0 0
        %1403 = vmatpush.bf16.msra.mxu0 0
        %1404 = vmatpush.bf16.msra.mxu0 %v1395
        %1405 = vmatmul.bf16.gmra.mxu0 %v1392
        %v1406 = vpop.f32.mrf.mxu0
        %v1407 = vadd.f32 0.0, %v1406
        %v1408 = vpop.f32.mrf.mxu0
        %1409 = vdwg.mxu0
        %v1411 = vsel %vm1062, %v1365, 0
        %v1414 = vsel %vm1374, %v1369, 0
        %1416 = vmatpush.bf16.msra.mxu0 0
        %1417 = vmatpush.bf16.msra.mxu0 0
        %1418 = vmatpush.bf16.msra.mxu0 0
        %1419 = vmatpush.bf16.msra.mxu0 0
        %1420 = vmatpush.bf16.msra.mxu0 0
        %1421 = vmatpush.bf16.msra.mxu0 0
        %1422 = vmatpush.bf16.msra.mxu0 0
        %1423 = vmatpush.bf16.msra.mxu0 %v1414
        %1424 = vmatmul.bf16.gmra.mxu0 %v1411
        %v1425 = vpop.f32.mrf.mxu0
        %v1426 = vadd.f32 0.0, %v1425
        %v1427 = vpop.f32.mrf.mxu0
        %1428 = vdwg.mxu0
        %v1430 = vsel %vm1062, %v1366, 0
        %v1433 = vsel %vm1374, %v1370, 0
        %1435 = vmatpush.bf16.msra.mxu0 0
        %1436 = vmatpush.bf16.msra.mxu0 0
        %1437 = vmatpush.bf16.msra.mxu0 0
        %1438 = vmatpush.bf16.msra.mxu0 0
        %1439 = vmatpush.bf16.msra.mxu0 0
        %1440 = vmatpush.bf16.msra.mxu0 0
        %1441 = vmatpush.bf16.msra.mxu0 0
        %1442 = vmatpush.bf16.msra.mxu0 %v1433
        %1443 = vmatmul.bf16.gmra.mxu0 %v1430
        %v1444 = vpop.f32.mrf.mxu0
        %v1445 = vadd.f32 0.0, %v1444
        %v1446 = vpop.f32.mrf.mxu0
        %1447 = vdwg.mxu0
        %v1448 = vrot.slane %v1426, 4
        %v1449 = vsel %vm700, %v1448, %v1388
        %v1450 = vrot.slane %v1388, 4
        %v1451 = vsel %vm700, %v1426, %v1450
        %v1453 = vunpack.c.l.s4 1983009808
        %v1454 = vunpack.c.0.s8 %v1453
        %v1455 = vperm.slane %v1449, %v1454
        %v1457 = vunpack.c.l.s4 1983009808
        %v1458 = vunpack.c.0.s8 %v1457
        %v1459 = vperm.slane %v1451, %v1458
        %v1460 = vrot.slane %v1445, 4
        %v1461 = vsel %vm700, %v1460, %v1407
        %v1462 = vrot.slane %v1407, 4
        %v1463 = vsel %vm700, %v1445, %v1462
        %v1465 = vunpack.c.l.s4 1983009808
        %v1466 = vunpack.c.0.s8 %v1465
        %v1467 = vperm.slane %v1461, %v1466
        %v1469 = vunpack.c.l.s4 1983009808
        %v1470 = vunpack.c.0.s8 %v1469
        %v1471 = vperm.slane %v1463, %v1470
        %v1472 = vrot.slane %v1467, 4
        %v1473 = vsel %vm700, %v1472, %v1455
        %v1474 = vrot.slane %v1455, 4
        %v1475 = vsel %vm700, %v1467, %v1474
        %v1477 = vunpack.c.l.s4 1934713408
        %v1478 = vunpack.c.0.s8 %v1477
        %v1479 = vperm.slane %v1473, %v1478
        %v1481 = vunpack.c.l.s4 1934713408
        %v1482 = vunpack.c.0.s8 %v1481
        %v1483 = vperm.slane %v1475, %v1482
        %v1484 = vrot.slane %v1471, 4
        %v1485 = vsel %vm700, %v1484, %v1459
        %v1486 = vrot.slane %v1459, 4
        %v1487 = vsel %vm700, %v1471, %v1486
        %v1489 = vunpack.c.l.s4 1934713408
        %v1490 = vunpack.c.0.s8 %v1489
        %v1491 = vperm.slane %v1485, %v1490
        %v1493 = vunpack.c.l.s4 1934713408
        %v1494 = vunpack.c.0.s8 %v1493
        %v1495 = vperm.slane %v1487, %v1494
        %v1496 = vrot.slane %v1479, 4
        %v1497 = vsel %vm700, 0.0, %v1496
        %v1498 = vrot.slane %v1483, 4
        %v1499 = vsel %vm700, 0.0, %v1498
        %v1500 = vrot.slane %v1491, 4
        %v1501 = vsel %vm700, 0.0, %v1500
        %v1502 = vrot.slane %v1495, 4
        %v1503 = vsel %vm700, 0.0, %v1502
        %v1504 = vsel %vm700, %v1498, %v1479
        %v1506 = vunpack.c.l.s4 1983009808
        %v1507 = vunpack.c.0.s8 %v1506
        %v1508 = vperm.slane %v1504, %v1507
        %v1509 = vrot.slane %v1499, 4
        %v1510 = vsel %vm700, %v1509, %v1497
        %v1512 = vunpack.c.l.s4 1983009808
        %v1513 = vunpack.c.0.s8 %v1512
        %v1514 = vperm.slane %v1510, %v1513
        %v1515 = vsel %vm700, %v1502, %v1491
        %v1517 = vunpack.c.l.s4 1983009808
        %v1518 = vunpack.c.0.s8 %v1517
        %v1519 = vperm.slane %v1515, %v1518
        %v1520 = vrot.slane %v1503, 4
        %v1521 = vsel %vm700, %v1520, %v1501
        %v1523 = vunpack.c.l.s4 1983009808
        %v1524 = vunpack.c.0.s8 %v1523
        %v1525 = vperm.slane %v1521, %v1524
        %v1526 = vrot.slane %v1514, 4
        %v1527 = vsel %vm700, %v1526, %v1508
        %v1528 = vrot.slane %v1508, 4
        %v1529 = vsel %vm700, %v1514, %v1528
        %v1531 = vunpack.c.l.s4 1934713408
        %v1532 = vunpack.c.0.s8 %v1531
        %v1533 = vperm.slane %v1527, %v1532
        %v1535 = vunpack.c.l.s4 1934713408
        %v1536 = vunpack.c.0.s8 %v1535
        %v1537 = vperm.slane %v1529, %v1536
        %v1538 = vrot.slane %v1525, 4
        %v1539 = vsel %vm700, %v1538, %v1519
        %v1540 = vrot.slane %v1519, 4
        %v1541 = vsel %vm700, %v1525, %v1540
        %v1543 = vunpack.c.l.s4 1934713408
        %v1544 = vunpack.c.0.s8 %v1543
        %v1545 = vperm.slane %v1539, %v1544
        %v1547 = vunpack.c.l.s4 1934713408
        %v1548 = vunpack.c.0.s8 %v1547
        %v1549 = vperm.slane %v1541, %v1548
        %v1550 = vrot.slane %v1545, 4
        %v1551 = vsel %vm700, %v1550, %v1533
        %v1552 = vrot.slane %v1533, 4
        %v1553 = vsel %vm700, %v1545, %v1552
        %v1554 = vrot.slane %v1549, 4
        %v1555 = vsel %vm700, %v1554, %v1537
        %v1556 = vrot.slane %v1537, 4
        %v1557 = vsel %vm700, %v1549, %v1556
        %1559 = vrot.lane.b32.xlu0 %v1553, 8
        %v1560 = vpop.permute.xlu0 %1559
        %1563 = vrot.lane.b32.xlu0 %v1555, 16
        %v1564 = vpop.permute.xlu0 %1563
        %1567 = vrot.lane.b32.xlu0 %v1557, 24
        %v1568 = vpop.permute.xlu0 %1567
        %v1570 = vsel %vm1062, %v1551, %v1560
        %v1571 = vsel %vm1358, %v1570, %v1564
        %v1572 = vsel %vm1360, %v1571, %v1568
        %v1573 = vpack.c.bf16 %v1572, %v1572
        %v1574 = vld [vmem:[%s3] sm:$0xf]
        %v1575 = vld [vmem:[%s3 + $0x4] sm:$0xf]
        %v1576 = vld [vmem:[%s3 + $0x8] sm:$0xf]
        %v1577 = vld [vmem:[%s3 + $0xc] sm:$0xf]
        %v1578 = vld [vmem:[%s4] sm:$0x1]
        %v1580 = vperm.slane %v1578, 0
        %v1586 = vunpack.c.l.b16 %v1574
        %v1587 = vunpack.c.l.b16 %v1575
        %v1588 = vunpack.c.l.b16 %v1576
        %v1589 = vunpack.c.l.b16 %v1577
        %v1590 = vpack.c.b16 %v1587, %v1586
        %v1591 = vpack.c.b16 %v1589, %v1588
        %v1595 = vsel %vm672, %v1573, 0
        %1597 = vmatpush.bf16.msra.mxu0 0
        %1598 = vmatpush.bf16.msra.mxu0 0
        %1599 = vmatpush.bf16.msra.mxu0 0
        %1600 = vmatpush.bf16.msra.mxu0 0
        %1601 = vmatpush.bf16.msra.mxu0 0
        %1602 = vmatpush.bf16.msra.mxu0 0
        %1603 = vmatpush.bf16.msra.mxu0 %v1591
        %1604 = vmatpush.bf16.msra.mxu0 %v1590
        %1605 = vmatmul.bf16.gmra.mxu0 %v1595
        %v1606 = vpop.f32.mrf.mxu0
        %v1607 = vadd.f32 %v1580, %v1606
        %v1608 = vpop.f32.mrf.mxu0
        %1609 = vdwg.mxu0
        %v1610 = vadd.f32 %v650, %v1607
        %v1611 = vld [vmem:[%s5] sm:$0x1]
        %v1612 = vld [vmem:[#allocation5] sm:$0x1]
        %v1613 = vsel %vm672, %v1610, 0.0
        %1614 = vadd.xlane.f32.xlu0 %v1613
        %v1615 = vpop.xlane.xlu0 %1614
        %v1616 = vrcp.pop 32.0
        %v1617 = vmul.f32 32.0, %v1616
        %v1618 = vsub.f32 1.0, %v1617
        %v1619 = vmul.f32 %v1616, %v1618
        %v1620 = vadd.f32 %v1616, %v1619
        %vm1621 = vweird.f32 %v1616
        %v1622 = vsel %vm1621, %v1616, %v1620
        %v1623 = vmul.f32 %v1615, %v1622
        %v1624 = vsub.f32 %v1610, %v1623
        %v1625 = vmul.f32 %v1624, %v1624
        %v1626 = vsel %vm672, %v1625, 0.0
        %1627 = vadd.xlane.f32.xlu0 %v1626
        %v1628 = vpop.xlane.xlu0 %1627
        %v1629 = vmul.f32 %v1628, %v1622
        %v1630 = vadd.f32 %v1629, 1e-05
        %v1631 = vrsqrt.pop %v1630
        %v1632 = vmul.f32 %v1631, %v1630
        %v1633 = vmul.f32 %v1632, %v1631
        %v1634 = vmul.f32 0.5, %v1633
        %v1635 = vsub.f32 1.5, %v1634
        %v1636 = vmul.f32 %v1631, %v1635
        %vm1637 = vweird.f32 %v1630
        %vm1638 = vweird.f32 %v1631
        %vm1639 = vmor %vm1637, %vm1638
        %v1640 = vsel %vm1639, %v1631, %v1636
        %v1641 = vmul.f32 %v1624, %v1640
        %v1643 = vperm.slane %v1611, 0
        %v1645 = vmul.f32 %v1641, %v1643
        %v1647 = vperm.slane %v1612, 0
        %v1649 = vadd.f32 %v1645, %v1647
        %v1650 = vpack.c.bf16 %v1649, %v1649
        %v1651 = vld [vmem:[%s7] sm:$0xf]
        %v1652 = vld [vmem:[%s7 + $0x4] sm:$0xf]
        %v1653 = vld [vmem:[%s7 + $0x8] sm:$0xf]
        %v1654 = vld [vmem:[%s7 + $0xc] sm:$0xf]
        %v1655 = vld [vmem:[#allocation7] sm:$0x1]
        %v1657 = vperm.slane %v1655, 0
        %v1663 = vunpack.c.l.b16 %v1651
        %v1664 = vunpack.c.l.b16 %v1652
        %v1665 = vunpack.c.l.b16 %v1653
        %v1666 = vunpack.c.l.b16 %v1654
        %v1667 = vpack.c.b16 %v1664, %v1663
        %v1668 = vpack.c.b16 %v1666, %v1665
        %v1672 = vsel %vm672, %v1650, 0
        %1674 = vmatpush.bf16.msra.mxu0 0
        %1675 = vmatpush.bf16.msra.mxu0 0
        %1676 = vmatpush.bf16.msra.mxu0 0
        %1677 = vmatpush.bf16.msra.mxu0 0
        %1678 = vmatpush.bf16.msra.mxu0 0
        %1679 = vmatpush.bf16.msra.mxu0 0
        %1680 = vmatpush.bf16.msra.mxu0 %v1668
        %1681 = vmatpush.bf16.msra.mxu0 %v1667
        %1682 = vmatmul.bf16.gmra.mxu0 %v1672
        %v1683 = vpop.f32.mrf.mxu0
        %v1684 = vadd.f32 %v1657, %v1683
        %v1685 = vpop.f32.mrf.mxu0
        %1686 = vdwg.mxu0
        %v1687 = vmax.f32 %v1684, 0.0
        %v1688 = vpack.c.bf16 %v1687, %v1687
        %v1689 = vld [vmem:[%s9] sm:$0xf]
        %v1690 = vld [vmem:[%s9 + $0x4] sm:$0xf]
        %v1691 = vld [vmem:[%s9 + $0x8] sm:$0xf]
        %v1692 = vld [vmem:[%s9 + $0xc] sm:$0xf]
        %v1693 = vld [vmem:[%s9 + $0x10] sm:$0xf]
        %v1694 = vld [vmem:[%s9 + $0x14] sm:$0xf]
        %v1695 = vld [vmem:[%s9 + $0x18] sm:$0xf]
        %v1696 = vld [vmem:[%s9 + $0x1c] sm:$0xf]
        %v1697 = vld [vmem:[#allocation8] sm:$0x1]
        %v1699 = vperm.slane %v1697, 0
        %v1709 = vunpack.c.l.b16 %v1689
        %v1710 = vunpack.c.l.b16 %v1690
        %v1711 = vunpack.c.l.b16 %v1691
        %v1712 = vunpack.c.l.b16 %v1692
        %v1713 = vunpack.c.l.b16 %v1693
        %v1714 = vunpack.c.l.b16 %v1694
        %v1715 = vunpack.c.l.b16 %v1695
        %v1716 = vunpack.c.l.b16 %v1696
        %v1717 = vpack.c.b16 %v1710, %v1709
        %v1718 = vpack.c.b16 %v1712, %v1711
        %v1719 = vpack.c.b16 %v1714, %v1713
        %v1720 = vpack.c.b16 %v1716, %v1715
        %vm1725 = vcmask 523264
        %v1727 = vsel %vm1725, %v1688, 0
        %1729 = vmatpush.bf16.msra.mxu0 0
        %1730 = vmatpush.bf16.msra.mxu0 0
        %1731 = vmatpush.bf16.msra.mxu0 0
        %1732 = vmatpush.bf16.msra.mxu0 0
        %1733 = vmatpush.bf16.msra.mxu0 %v1720
        %1734 = vmatpush.bf16.msra.mxu0 %v1719
        %1735 = vmatpush.bf16.msra.mxu0 %v1718
        %1736 = vmatpush.bf16.msra.mxu0 %v1717
        %1737 = vmatmul.bf16.gmra.mxu0 %v1727
        %v1738 = vpop.f32.mrf.mxu0
        %v1739 = vadd.f32 %v1699, %v1738
        %v1740 = vpop.f32.mrf.mxu0
        %1741 = vdwg.mxu0
        %v1742 = vadd.f32 %v1649, %v1739
        %v1743 = vld [vmem:[#allocation10] sm:$0x1]
        %v1744 = vld [vmem:[#allocation11] sm:$0x1]
        %v1745 = vsel %vm672, %v1742, 0.0
        %1746 = vadd.xlane.f32.xlu0 %v1745
        %v1747 = vpop.xlane.xlu0 %1746
        %v1748 = vmul.f32 %v1747, %v1622
        %v1749 = vsub.f32 %v1742, %v1748
        %v1750 = vmul.f32 %v1749, %v1749
        %v1751 = vsel %vm672, %v1750, 0.0
        %1752 = vadd.xlane.f32.xlu0 %v1751
        %v1753 = vpop.xlane.xlu0 %1752
        %v1754 = vmul.f32 %v1753, %v1622
        %v1755 = vadd.f32 %v1754, 1e-05
        %v1756 = vrsqrt.pop %v1755
        %v1757 = vmul.f32 %v1756, %v1755
        %v1758 = vmul.f32 %v1757, %v1756
        %v1759 = vmul.f32 0.5, %v1758
        %v1760 = vsub.f32 1.5, %v1759
        %v1761 = vmul.f32 %v1756, %v1760
        %vm1762 = vweird.f32 %v1755
        %vm1763 = vweird.f32 %v1756
        %vm1764 = vmor %vm1762, %vm1763
        %v1765 = vsel %vm1764, %v1756, %v1761
        %v1766 = vmul.f32 %v1749, %v1765
        %v1768 = vperm.slane %v1743, 0
        %v1770 = vmul.f32 %v1766, %v1768
        %v1772 = vperm.slane %v1744, 0
        %v1774 = vadd.f32 %v1770, %v1772
        %v1775 = vpack.c.bf16 %v1774, %v1774
        %s1776 = scalar_lea.vmem %s1, 16
        %v1777 = vld [vmem:[%s1776] sm:$0xf]
        %v1778 = vld [vmem:[%s1776 + $0x4] sm:$0xf]
        %v1779 = vld [vmem:[%s1776 + $0x8] sm:$0xf]
        %v1780 = vld [vmem:[%s1776 + $0xc] sm:$0xf]
        %s1781 = scalar_lea.vmem %s2, 1
        %v1782 = vld [vmem:[%s1781] sm:$0x1]
        %v1784 = vperm.slane %v1782, 0
        %v1790 = vunpack.c.l.b16 %v1777
        %v1791 = vunpack.c.l.b16 %v1778
        %v1792 = vunpack.c.l.b16 %v1779
        %v1793 = vunpack.c.l.b16 %v1780
        %v1794 = vpack.c.b16 %v1791, %v1790
        %v1795 = vpack.c.b16 %v1793, %v1792
        %v1799 = vsel %vm672, %v1775, 0
        %1801 = vmatpush.bf16.msra.mxu0 0
        %1802 = vmatpush.bf16.msra.mxu0 0
        %1803 = vmatpush.bf16.msra.mxu0 0
        %1804 = vmatpush.bf16.msra.mxu0 0
        %1805 = vmatpush.bf16.msra.mxu0 0
        %1806 = vmatpush.bf16.msra.mxu0 0
        %1807 = vmatpush.bf16.msra.mxu0 %v1795
        %1808 = vmatpush.bf16.msra.mxu0 %v1794
        %1809 = vmatmul.bf16.gmra.mxu0 %v1799
        %v1810 = vpop.f32.mrf.mxu0
        %v1811 = vadd.f32 %v1784, %v1810
        %v1812 = vpop.f32.mrf.mxu0
        %1813 = vdwg.mxu0
        %1815 = vrot.lane.b32.xlu0 %v1811, 120
        %v1816 = vpop.permute.xlu0 %1815
        %1818 = vrot.lane.b32.xlu0 %v1811, 112
        %v1819 = vpop.permute.xlu0 %1818
        %1821 = vrot.lane.b32.xlu0 %v1811, 104
        %v1822 = vpop.permute.xlu0 %1821
        %v1824 = vrot.slane %v1819, 4
        %v1825 = vsel %vm700, %v1824, %v1811
        %v1826 = vrot.slane %v1811, 4
        %v1827 = vsel %vm700, %v1819, %v1826
        %v1829 = vunpack.c.l.s4 1983009808
        %v1830 = vunpack.c.0.s8 %v1829
        %v1831 = vperm.slane %v1825, %v1830
        %v1833 = vunpack.c.l.s4 1983009808
        %v1834 = vunpack.c.0.s8 %v1833
        %v1835 = vperm.slane %v1827, %v1834
        %v1836 = vrot.slane %v1822, 4
        %v1837 = vsel %vm700, %v1836, %v1816
        %v1838 = vrot.slane %v1816, 4
        %v1839 = vsel %vm700, %v1822, %v1838
        %v1841 = vunpack.c.l.s4 1983009808
        %v1842 = vunpack.c.0.s8 %v1841
        %v1843 = vperm.slane %v1837, %v1842
        %v1845 = vunpack.c.l.s4 1983009808
        %v1846 = vunpack.c.0.s8 %v1845
        %v1847 = vperm.slane %v1839, %v1846
        %v1848 = vrot.slane %v1843, 4
        %v1849 = vsel %vm700, %v1848, %v1831
        %v1850 = vrot.slane %v1831, 4
        %v1851 = vsel %vm700, %v1843, %v1850
        %v1853 = vunpack.c.l.s4 1934713408
        %v1854 = vunpack.c.0.s8 %v1853
        %v1855 = vperm.slane %v1849, %v1854
        %v1857 = vunpack.c.l.s4 1934713408
        %v1858 = vunpack.c.0.s8 %v1857
        %v1859 = vperm.slane %v1851, %v1858
        %v1860 = vrot.slane %v1847, 4
        %v1861 = vsel %vm700, %v1860, %v1835
        %v1862 = vrot.slane %v1835, 4
        %v1863 = vsel %vm700, %v1847, %v1862
        %v1865 = vunpack.c.l.s4 1934713408
        %v1866 = vunpack.c.0.s8 %v1865
        %v1867 = vperm.slane %v1861, %v1866
        %v1869 = vunpack.c.l.s4 1934713408
        %v1870 = vunpack.c.0.s8 %v1869
        %v1871 = vperm.slane %v1863, %v1870
        %v1872 = vrot.slane %v1855, 4
        %v1873 = vsel %vm700, 0.0, %v1872
        %v1874 = vrot.slane %v1859, 4
        %v1875 = vsel %vm700, 0.0, %v1874
        %v1876 = vrot.slane %v1867, 4
        %v1877 = vsel %vm700, 0.0, %v1876
        %v1878 = vrot.slane %v1871, 4
        %v1879 = vsel %vm700, 0.0, %v1878
        %v1880 = vsel %vm700, %v1874, %v1855
        %v1882 = vunpack.c.l.s4 1983009808
        %v1883 = vunpack.c.0.s8 %v1882
        %v1884 = vperm.slane %v1880, %v1883
        %v1885 = vrot.slane %v1875, 4
        %v1886 = vsel %vm700, %v1885, %v1873
        %v1888 = vunpack.c.l.s4 1983009808
        %v1889 = vunpack.c.0.s8 %v1888
        %v1890 = vperm.slane %v1886, %v1889
        %v1891 = vsel %vm700, %v1878, %v1867
        %v1893 = vunpack.c.l.s4 1983009808
        %v1894 = vunpack.c.0.s8 %v1893
        %v1895 = vperm.slane %v1891, %v1894
        %v1896 = vrot.slane %v1879, 4
        %v1897 = vsel %vm700, %v1896, %v1877
        %v1899 = vunpack.c.l.s4 1983009808
        %v1900 = vunpack.c.0.s8 %v1899
        %v1901 = vperm.slane %v1897, %v1900
        %v1902 = vrot.slane %v1890, 4
        %v1903 = vsel %vm700, %v1902, %v1884
        %v1904 = vrot.slane %v1884, 4
        %v1905 = vsel %vm700, %v1890, %v1904
        %v1907 = vunpack.c.l.s4 1934713408
        %v1908 = vunpack.c.0.s8 %v1907
        %v1909 = vperm.slane %v1903, %v1908
        %v1911 = vunpack.c.l.s4 1934713408
        %v1912 = vunpack.c.0.s8 %v1911
        %v1913 = vperm.slane %v1905, %v1912
        %v1914 = vrot.slane %v1901, 4
        %v1915 = vsel %vm700, %v1914, %v1895
        %v1916 = vrot.slane %v1895, 4
        %v1917 = vsel %vm700, %v1901, %v1916
        %v1919 = vunpack.c.l.s4 1934713408
        %v1920 = vunpack.c.0.s8 %v1919
        %v1921 = vperm.slane %v1915, %v1920
        %v1923 = vunpack.c.l.s4 1934713408
        %v1924 = vunpack.c.0.s8 %v1923
        %v1925 = vperm.slane %v1917, %v1924
        %v1926 = vrot.slane %v1921, 4
        %v1927 = vsel %vm700, %v1926, %v1909
        %v1928 = vrot.slane %v1909, 4
        %v1929 = vsel %vm700, %v1921, %v1928
        %v1930 = vrot.slane %v1925, 4
        %v1931 = vsel %vm700, %v1930, %v1913
        %v1932 = vrot.slane %v1913, 4
        %v1933 = vsel %vm700, %v1925, %v1932
        %1934 = vrot.lane.b32.xlu0 %v1811, 96
        %v1935 = vpop.permute.xlu0 %1934
        %1936 = vrot.lane.b32.xlu0 %v1816, 96
        %v1937 = vpop.permute.xlu0 %1936
        %1938 = vrot.lane.b32.xlu0 %v1819, 96
        %v1939 = vpop.permute.xlu0 %1938
        %1940 = vrot.lane.b32.xlu0 %v1822, 96
        %v1941 = vpop.permute.xlu0 %1940
        %v1946 = vrot.slane %v1939, 4
        %v1947 = vsel %vm700, %v1946, %v1935
        %v1948 = vrot.slane %v1935, 4
        %v1949 = vsel %vm700, %v1939, %v1948
        %v1951 = vunpack.c.l.s4 1983009808
        %v1952 = vunpack.c.0.s8 %v1951
        %v1953 = vperm.slane %v1947, %v1952
        %v1955 = vunpack.c.l.s4 1983009808
        %v1956 = vunpack.c.0.s8 %v1955
        %v1957 = vperm.slane %v1949, %v1956
        %v1958 = vrot.slane %v1941, 4
        %v1959 = vsel %vm700, %v1958, %v1937
        %v1960 = vrot.slane %v1937, 4
        %v1961 = vsel %vm700, %v1941, %v1960
        %v1963 = vunpack.c.l.s4 1983009808
        %v1964 = vunpack.c.0.s8 %v1963
        %v1965 = vperm.slane %v1959, %v1964
        %v1967 = vunpack.c.l.s4 1983009808
        %v1968 = vunpack.c.0.s8 %v1967
        %v1969 = vperm.slane %v1961, %v1968
        %v1970 = vrot.slane %v1965, 4
        %v1971 = vsel %vm700, %v1970, %v1953
        %v1972 = vrot.slane %v1953, 4
        %v1973 = vsel %vm700, %v1965, %v1972
        %v1975 = vunpack.c.l.s4 1934713408
        %v1976 = vunpack.c.0.s8 %v1975
        %v1977 = vperm.slane %v1971, %v1976
        %v1979 = vunpack.c.l.s4 1934713408
        %v1980 = vunpack.c.0.s8 %v1979
        %v1981 = vperm.slane %v1973, %v1980
        %v1982 = vrot.slane %v1969, 4
        %v1983 = vsel %vm700, %v1982, %v1957
        %v1984 = vrot.slane %v1957, 4
        %v1985 = vsel %vm700, %v1969, %v1984
        %v1987 = vunpack.c.l.s4 1934713408
        %v1988 = vunpack.c.0.s8 %v1987
        %v1989 = vperm.slane %v1983, %v1988
        %v1991 = vunpack.c.l.s4 1934713408
        %v1992 = vunpack.c.0.s8 %v1991
        %v1993 = vperm.slane %v1985, %v1992
        %v1994 = vrot.slane %v1977, 4
        %v1995 = vsel %vm700, 0.0, %v1994
        %v1996 = vrot.slane %v1981, 4
        %v1997 = vsel %vm700, 0.0, %v1996
        %v1998 = vrot.slane %v1989, 4
        %v1999 = vsel %vm700, 0.0, %v1998
        %v2000 = vrot.slane %v1993, 4
        %v2001 = vsel %vm700, 0.0, %v2000
        %v2002 = vsel %vm700, %v1996, %v1977
        %v2004 = vunpack.c.l.s4 1983009808
        %v2005 = vunpack.c.0.s8 %v2004
        %v2006 = vperm.slane %v2002, %v2005
        %v2007 = vrot.slane %v1997, 4
        %v2008 = vsel %vm700, %v2007, %v1995
        %v2010 = vunpack.c.l.s4 1983009808
        %v2011 = vunpack.c.0.s8 %v2010
        %v2012 = vperm.slane %v2008, %v2011
        %v2013 = vsel %vm700, %v2000, %v1989
        %v2015 = vunpack.c.l.s4 1983009808
        %v2016 = vunpack.c.0.s8 %v2015
        %v2017 = vperm.slane %v2013, %v2016
        %v2018 = vrot.slane %v2001, 4
        %v2019 = vsel %vm700, %v2018, %v1999
        %v2021 = vunpack.c.l.s4 1983009808
        %v2022 = vunpack.c.0.s8 %v2021
        %v2023 = vperm.slane %v2019, %v2022
        %v2024 = vrot.slane %v2012, 4
        %v2025 = vsel %vm700, %v2024, %v2006
        %v2026 = vrot.slane %v2006, 4
        %v2027 = vsel %vm700, %v2012, %v2026
        %v2029 = vunpack.c.l.s4 1934713408
        %v2030 = vunpack.c.0.s8 %v2029
        %v2031 = vperm.slane %v2025, %v2030
        %v2033 = vunpack.c.l.s4 1934713408
        %v2034 = vunpack.c.0.s8 %v2033
        %v2035 = vperm.slane %v2027, %v2034
        %v2036 = vrot.slane %v2023, 4
        %v2037 = vsel %vm700, %v2036, %v2017
        %v2038 = vrot.slane %v2017, 4
        %v2039 = vsel %vm700, %v2023, %v2038
        %v2041 = vunpack.c.l.s4 1934713408
        %v2042 = vunpack.c.0.s8 %v2041
        %v2043 = vperm.slane %v2037, %v2042
        %v2045 = vunpack.c.l.s4 1934713408
        %v2046 = vunpack.c.0.s8 %v2045
        %v2047 = vperm.slane %v2039, %v2046
        %v2048 = vrot.slane %v2043, 4
        %v2049 = vsel %vm700, %v2048, %v2031
        %v2050 = vrot.slane %v2031, 4
        %v2051 = vsel %vm700, %v2043, %v2050
        %v2052 = vrot.slane %v2047, 4
        %v2053 = vsel %vm700, %v2052, %v2035
        %v2054 = vrot.slane %v2035, 4
        %v2055 = vsel %vm700, %v2047, %v2054
        %2056 = vrot.lane.b32.xlu0 %v1811, 64
        %v2057 = vpop.permute.xlu0 %2056
        %2058 = vrot.lane.b32.xlu0 %v1816, 64
        %v2059 = vpop.permute.xlu0 %2058
        %2060 = vrot.lane.b32.xlu0 %v1819, 64
        %v2061 = vpop.permute.xlu0 %2060
        %2062 = vrot.lane.b32.xlu0 %v1822, 64
        %v2063 = vpop.permute.xlu0 %2062
        %v2068 = vrot.slane %v2061, 4
        %v2069 = vsel %vm700, %v2068, %v2057
        %v2070 = vrot.slane %v2057, 4
        %v2071 = vsel %vm700, %v2061, %v2070
        %v2073 = vunpack.c.l.s4 1983009808
        %v2074 = vunpack.c.0.s8 %v2073
        %v2075 = vperm.slane %v2069, %v2074
        %v2077 = vunpack.c.l.s4 1983009808
        %v2078 = vunpack.c.0.s8 %v2077
        %v2079 = vperm.slane %v2071, %v2078
        %v2080 = vrot.slane %v2063, 4
        %v2081 = vsel %vm700, %v2080, %v2059
        %v2082 = vrot.slane %v2059, 4
        %v2083 = vsel %vm700, %v2063, %v2082
        %v2085 = vunpack.c.l.s4 1983009808
        %v2086 = vunpack.c.0.s8 %v2085
        %v2087 = vperm.slane %v2081, %v2086
        %v2089 = vunpack.c.l.s4 1983009808
        %v2090 = vunpack.c.0.s8 %v2089
        %v2091 = vperm.slane %v2083, %v2090
        %v2092 = vrot.slane %v2087, 4
        %v2093 = vsel %vm700, %v2092, %v2075
        %v2094 = vrot.slane %v2075, 4
        %v2095 = vsel %vm700, %v2087, %v2094
        %v2097 = vunpack.c.l.s4 1934713408
        %v2098 = vunpack.c.0.s8 %v2097
        %v2099 = vperm.slane %v2093, %v2098
        %v2101 = vunpack.c.l.s4 1934713408
        %v2102 = vunpack.c.0.s8 %v2101
        %v2103 = vperm.slane %v2095, %v2102
        %v2104 = vrot.slane %v2091, 4
        %v2105 = vsel %vm700, %v2104, %v2079
        %v2106 = vrot.slane %v2079, 4
        %v2107 = vsel %vm700, %v2091, %v2106
        %v2109 = vunpack.c.l.s4 1934713408
        %v2110 = vunpack.c.0.s8 %v2109
        %v2111 = vperm.slane %v2105, %v2110
        %v2113 = vunpack.c.l.s4 1934713408
        %v2114 = vunpack.c.0.s8 %v2113
        %v2115 = vperm.slane %v2107, %v2114
        %v2116 = vrot.slane %v2099, 4
        %v2117 = vsel %vm700, 0.0, %v2116
        %v2118 = vrot.slane %v2103, 4
        %v2119 = vsel %vm700, 0.0, %v2118
        %v2120 = vrot.slane %v2111, 4
        %v2121 = vsel %vm700, 0.0, %v2120
        %v2122 = vrot.slane %v2115, 4
        %v2123 = vsel %vm700, 0.0, %v2122
        %v2124 = vsel %vm700, %v2118, %v2099
        %v2126 = vunpack.c.l.s4 1983009808
        %v2127 = vunpack.c.0.s8 %v2126
        %v2128 = vperm.slane %v2124, %v2127
        %v2129 = vrot.slane %v2119, 4
        %v2130 = vsel %vm700, %v2129, %v2117
        %v2132 = vunpack.c.l.s4 1983009808
        %v2133 = vunpack.c.0.s8 %v2132
        %v2134 = vperm.slane %v2130, %v2133
        %v2135 = vsel %vm700, %v2122, %v2111
        %v2137 = vunpack.c.l.s4 1983009808
        %v2138 = vunpack.c.0.s8 %v2137
        %v2139 = vperm.slane %v2135, %v2138
        %v2140 = vrot.slane %v2123, 4
        %v2141 = vsel %vm700, %v2140, %v2121
        %v2143 = vunpack.c.l.s4 1983009808
        %v2144 = vunpack.c.0.s8 %v2143
        %v2145 = vperm.slane %v2141, %v2144
        %v2146 = vrot.slane %v2134, 4
        %v2147 = vsel %vm700, %v2146, %v2128
        %v2148 = vrot.slane %v2128, 4
        %v2149 = vsel %vm700, %v2134, %v2148
        %v2151 = vunpack.c.l.s4 1934713408
        %v2152 = vunpack.c.0.s8 %v2151
        %v2153 = vperm.slane %v2147, %v2152
        %v2155 = vunpack.c.l.s4 1934713408
        %v2156 = vunpack.c.0.s8 %v2155
        %v2157 = vperm.slane %v2149, %v2156
        %v2158 = vrot.slane %v2145, 4
        %v2159 = vsel %vm700, %v2158, %v2139
        %v2160 = vrot.slane %v2139, 4
        %v2161 = vsel %vm700, %v2145, %v2160
        %v2163 = vunpack.c.l.s4 1934713408
        %v2164 = vunpack.c.0.s8 %v2163
        %v2165 = vperm.slane %v2159, %v2164
        %v2167 = vunpack.c.l.s4 1934713408
        %v2168 = vunpack.c.0.s8 %v2167
        %v2169 = vperm.slane %v2161, %v2168
        %v2170 = vrot.slane %v2165, 4
        %v2171 = vsel %vm700, %v2170, %v2153
        %v2172 = vrot.slane %v2153, 4
        %v2173 = vsel %vm700, %v2165, %v2172
        %v2174 = vrot.slane %v2169, 4
        %v2175 = vsel %vm700, %v2174, %v2157
        %v2176 = vrot.slane %v2157, 4
        %v2177 = vsel %vm700, %v2169, %v2176
        %v2178 = vpack.c.bf16 %v1927, %v1927
        %v2179 = vpack.c.bf16 %v1929, %v1929
        %v2180 = vpack.c.bf16 %v1931, %v1931
        %v2181 = vpack.c.bf16 %v1933, %v1933
        %v2182 = vpack.c.bf16 %v2049, %v2049
        %v2183 = vpack.c.bf16 %v2051, %v2051
        %v2184 = vpack.c.bf16 %v2053, %v2053
        %v2185 = vpack.c.bf16 %v2055, %v2055
        %v2187 = vsel %vm1062, %v2178, 0
        %v2190 = vsel %vm1062, %v2182, 0
        %2192 = vmatpush.bf16.xpose.msra.mxu0 0
        %2193 = vmatpush.bf16.xpose.msra.mxu0 0
        %2194 = vmatpush.bf16.xpose.msra.mxu0 0
        %2195 = vmatpush.bf16.xpose.msra.mxu0 0
        %2196 = vmatpush.bf16.xpose.msra.mxu0 0
        %2197 = vmatpush.bf16.xpose.msra.mxu0 0
        %2198 = vmatpush.bf16.xpose.msra.mxu0 0
        %2199 = vmatpush.bf16.xpose.msra.mxu0 %v2190
        %2200 = vmatmul.bf16.gmra.mxu0 %v2187
        %v2201 = vpop.f32.mrf.mxu0
        %v2202 = vadd.f32 0.0, %v2201
        %v2203 = vpop.f32.mrf.mxu0
        %2204 = vdwg.mxu0
        %v2206 = vsel %vm1062, %v2179, 0
        %v2209 = vsel %vm1062, %v2183, 0
        %2211 = vmatpush.bf16.xpose.msra.mxu0 0
        %2212 = vmatpush.bf16.xpose.msra.mxu0 0
        %2213 = vmatpush.bf16.xpose.msra.mxu0 0
        %2214 = vmatpush.bf16.xpose.msra.mxu0 0
        %2215 = vmatpush.bf16.xpose.msra.mxu0 0
        %2216 = vmatpush.bf16.xpose.msra.mxu0 0
        %2217 = vmatpush.bf16.xpose.msra.mxu0 0
        %2218 = vmatpush.bf16.xpose.msra.mxu0 %v2209
        %2219 = vmatmul.bf16.gmra.mxu0 %v2206
        %v2220 = vpop.f32.mrf.mxu0
        %v2221 = vadd.f32 0.0, %v2220
        %v2222 = vpop.f32.mrf.mxu0
        %2223 = vdwg.mxu0
        %v2225 = vsel %vm1062, %v2180, 0
        %v2228 = vsel %vm1062, %v2184, 0
        %2230 = vmatpush.bf16.xpose.msra.mxu0 0
        %2231 = vmatpush.bf16.xpose.msra.mxu0 0
        %2232 = vmatpush.bf16.xpose.msra.mxu0 0
        %2233 = vmatpush.bf16.xpose.msra.mxu0 0
        %2234 = vmatpush.bf16.xpose.msra.mxu0 0
        %2235 = vmatpush.bf16.xpose.msra.mxu0 0
        %2236 = vmatpush.bf16.xpose.msra.mxu0 0
        %2237 = vmatpush.bf16.xpose.msra.mxu0 %v2228
        %2238 = vmatmul.bf16.gmra.mxu0 %v2225
        %v2239 = vpop.f32.mrf.mxu0
        %v2240 = vadd.f32 0.0, %v2239
        %v2241 = vpop.f32.mrf.mxu0
        %2242 = vdwg.mxu0
        %v2244 = vsel %vm1062, %v2181, 0
        %v2247 = vsel %vm1062, %v2185, 0
        %2249 = vmatpush.bf16.xpose.msra.mxu0 0
        %2250 = vmatpush.bf16.xpose.msra.mxu0 0
        %2251 = vmatpush.bf16.xpose.msra.mxu0 0
        %2252 = vmatpush.bf16.xpose.msra.mxu0 0
        %2253 = vmatpush.bf16.xpose.msra.mxu0 0
        %2254 = vmatpush.bf16.xpose.msra.mxu0 0
        %2255 = vmatpush.bf16.xpose.msra.mxu0 0
        %2256 = vmatpush.bf16.xpose.msra.mxu0 %v2247
        %2257 = vmatmul.bf16.gmra.mxu0 %v2244
        %v2258 = vpop.f32.mrf.mxu0
        %v2259 = vadd.f32 0.0, %v2258
        %v2260 = vpop.f32.mrf.mxu0
        %2261 = vdwg.mxu0
        %v2262 = vsel %vm1062, %v2202, -inf
        %2263 = vmax.xlane.f32.xlu0 %v2262
        %v2264 = vpop.xlane.xlu0 %2263
        %v2265 = vsel %vm1062, %v2221, -inf
        %2266 = vmax.xlane.f32.xlu0 %v2265
        %v2267 = vpop.xlane.xlu0 %2266
        %v2268 = vsel %vm1062, %v2240, -inf
        %2269 = vmax.xlane.f32.xlu0 %v2268
        %v2270 = vpop.xlane.xlu0 %2269
        %v2271 = vsel %vm1062, %v2259, -inf
        %2272 = vmax.xlane.f32.xlu0 %v2271
        %v2273 = vpop.xlane.xlu0 %2272
        %v2274 = vsub.f32 %v2202, %v2264
        %v2275 = vsub.f32 %v2221, %v2267
        %v2276 = vsub.f32 %v2240, %v2270
        %v2277 = vsub.f32 %v2259, %v2273
        %v2278 = vmul.f32 %v2274, 1.442695
        %v2279 = vpow.pop %v2278
        %v2280 = vmul.f32 %v2275, 1.442695
        %v2281 = vpow.pop %v2280
        %v2282 = vmul.f32 %v2276, 1.442695
        %v2283 = vpow.pop %v2282
        %v2284 = vmul.f32 %v2277, 1.442695
        %v2285 = vpow.pop %v2284
        %v2286 = vsel %vm1062, %v2279, 0.0
        %2287 = vadd.xlane.f32.xlu0 %v2286
        %v2288 = vpop.xlane.xlu0 %2287
        %v2289 = vsel %vm1062, %v2281, 0.0
        %2290 = vadd.xlane.f32.xlu0 %v2289
        %v2291 = vpop.xlane.xlu0 %2290
        %v2292 = vsel %vm1062, %v2283, 0.0
        %2293 = vadd.xlane.f32.xlu0 %v2292
        %v2294 = vpop.xlane.xlu0 %2293
        %v2295 = vsel %vm1062, %v2285, 0.0
        %2296 = vadd.xlane.f32.xlu0 %v2295
        %v2297 = vpop.xlane.xlu0 %2296
        %v2298 = vrcp.pop %v2288
        %v2299 = vmul.f32 %v2288, %v2298
        %v2300 = vsub.f32 1.0, %v2299
        %v2301 = vmul.f32 %v2298, %v2300
        %v2302 = vadd.f32 %v2298, %v2301
        %vm2303 = vweird.f32 %v2288
        %vm2304 = vweird.f32 %v2298
        %vm2305 = vmor %vm2303, %vm2304
        %v2306 = vsel %vm2305, %v2298, %v2302
        %v2307 = vand.u32 2147483647, %v2288
        %vm2308 = vcmp.eq.f32.partialorder %v2307, 8.507059e+37
        %v2309 = vand.u32 %v2288, 2147483648
        %v2310 = vor.u32 1.1754944e-38, %v2309
        %v2311 = vsel %vm2308, %v2310, %v2306
        %v2312 = vmul.f32 %v2279, %v2311
        %v2313 = vrcp.pop %v2291
        %v2314 = vmul.f32 %v2291, %v2313
        %v2315 = vsub.f32 1.0, %v2314
        %v2316 = vmul.f32 %v2313, %v2315
        %v2317 = vadd.f32 %v2313, %v2316
        %vm2318 = vweird.f32 %v2291
        %vm2319 = vweird.f32 %v2313
        %vm2320 = vmor %vm2318, %vm2319
        %v2321 = vsel %vm2320, %v2313, %v2317
        %v2322 = vand.u32 2147483647, %v2291
        %vm2323 = vcmp.eq.f32.partialorder %v2322, 8.507059e+37
        %v2324 = vand.u32 %v2291, 2147483648
        %v2325 = vor.u32 1.1754944e-38, %v2324
        %v2326 = vsel %vm2323, %v2325, %v2321
        %v2327 = vmul.f32 %v2281, %v2326
        %v2328 = vrcp.pop %v2294
        %v2329 = vmul.f32 %v2294, %v2328
        %v2330 = vsub.f32 1.0, %v2329
        %v2331 = vmul.f32 %v2328, %v2330
        %v2332 = vadd.f32 %v2328, %v2331
        %vm2333 = vweird.f32 %v2294
        %vm2334 = vweird.f32 %v2328
        %vm2335 = vmor %vm2333, %vm2334
        %v2336 = vsel %vm2335, %v2328, %v2332
        %v2337 = vand.u32 2147483647, %v2294
        %vm2338 = vcmp.eq.f32.partialorder %v2337, 8.507059e+37
        %v2339 = vand.u32 %v2294, 2147483648
        %v2340 = vor.u32 1.1754944e-38, %v2339
        %v2341 = vsel %vm2338, %v2340, %v2336
        %v2342 = vmul.f32 %v2283, %v2341
        %v2343 = vrcp.pop %v2297
        %v2344 = vmul.f32 %v2297, %v2343
        %v2345 = vsub.f32 1.0, %v2344
        %v2346 = vmul.f32 %v2343, %v2345
        %v2347 = vadd.f32 %v2343, %v2346
        %vm2348 = vweird.f32 %v2297
        %vm2349 = vweird.f32 %v2343
        %vm2350 = vmor %vm2348, %vm2349
        %v2351 = vsel %vm2350, %v2343, %v2347
        %v2352 = vand.u32 2147483647, %v2297
        %vm2353 = vcmp.eq.f32.partialorder %v2352, 8.507059e+37
        %v2354 = vand.u32 %v2297, 2147483648
        %v2355 = vor.u32 1.1754944e-38, %v2354
        %v2356 = vsel %vm2353, %v2355, %v2351
        %v2357 = vmul.f32 %v2285, %v2356
        %v2358 = vrot.slane %v2342, 4
        %v2359 = vsel %vm700, %v2358, %v2312
        %v2360 = vrot.slane %v2312, 4
        %v2361 = vsel %vm700, %v2342, %v2360
        %v2363 = vunpack.c.l.s4 1983009808
        %v2364 = vunpack.c.0.s8 %v2363
        %v2365 = vperm.slane %v2359, %v2364
        %v2367 = vunpack.c.l.s4 1983009808
        %v2368 = vunpack.c.0.s8 %v2367
        %v2369 = vperm.slane %v2361, %v2368
        %v2370 = vrot.slane %v2357, 4
        %v2371 = vsel %vm700, %v2370, %v2327
        %v2372 = vrot.slane %v2327, 4
        %v2373 = vsel %vm700, %v2357, %v2372
        %v2375 = vunpack.c.l.s4 1983009808
        %v2376 = vunpack.c.0.s8 %v2375
        %v2377 = vperm.slane %v2371, %v2376
        %v2379 = vunpack.c.l.s4 1983009808
        %v2380 = vunpack.c.0.s8 %v2379
        %v2381 = vperm.slane %v2373, %v2380
        %v2382 = vrot.slane %v2377, 4
        %v2383 = vsel %vm700, %v2382, %v2365
        %v2384 = vrot.slane %v2365, 4
        %v2385 = vsel %vm700, %v2377, %v2384
        %v2387 = vunpack.c.l.s4 1934713408
        %v2388 = vunpack.c.0.s8 %v2387
        %v2389 = vperm.slane %v2383, %v2388
        %v2391 = vunpack.c.l.s4 1934713408
        %v2392 = vunpack.c.0.s8 %v2391
        %v2393 = vperm.slane %v2385, %v2392
        %v2394 = vrot.slane %v2381, 4
        %v2395 = vsel %vm700, %v2394, %v2369
        %v2396 = vrot.slane %v2369, 4
        %v2397 = vsel %vm700, %v2381, %v2396
        %v2399 = vunpack.c.l.s4 1934713408
        %v2400 = vunpack.c.0.s8 %v2399
        %v2401 = vperm.slane %v2395, %v2400
        %v2403 = vunpack.c.l.s4 1934713408
        %v2404 = vunpack.c.0.s8 %v2403
        %v2405 = vperm.slane %v2397, %v2404
        %v2406 = vrot.slane %v2389, 4
        %v2407 = vsel %vm700, 0.0, %v2406
        %v2408 = vrot.slane %v2393, 4
        %v2409 = vsel %vm700, 0.0, %v2408
        %v2410 = vrot.slane %v2401, 4
        %v2411 = vsel %vm700, 0.0, %v2410
        %v2412 = vrot.slane %v2405, 4
        %v2413 = vsel %vm700, 0.0, %v2412
        %v2414 = vsel %vm700, %v2408, %v2389
        %v2416 = vunpack.c.l.s4 1983009808
        %v2417 = vunpack.c.0.s8 %v2416
        %v2418 = vperm.slane %v2414, %v2417
        %v2419 = vrot.slane %v2409, 4
        %v2420 = vsel %vm700, %v2419, %v2407
        %v2422 = vunpack.c.l.s4 1983009808
        %v2423 = vunpack.c.0.s8 %v2422
        %v2424 = vperm.slane %v2420, %v2423
        %v2425 = vsel %vm700, %v2412, %v2401
        %v2427 = vunpack.c.l.s4 1983009808
        %v2428 = vunpack.c.0.s8 %v2427
        %v2429 = vperm.slane %v2425, %v2428
        %v2430 = vrot.slane %v2413, 4
        %v2431 = vsel %vm700, %v2430, %v2411
        %v2433 = vunpack.c.l.s4 1983009808
        %v2434 = vunpack.c.0.s8 %v2433
        %v2435 = vperm.slane %v2431, %v2434
        %v2436 = vrot.slane %v2424, 4
        %v2437 = vsel %vm700, %v2436, %v2418
        %v2438 = vrot.slane %v2418, 4
        %v2439 = vsel %vm700, %v2424, %v2438
        %v2441 = vunpack.c.l.s4 1934713408
        %v2442 = vunpack.c.0.s8 %v2441
        %v2443 = vperm.slane %v2437, %v2442
        %v2445 = vunpack.c.l.s4 1934713408
        %v2446 = vunpack.c.0.s8 %v2445
        %v2447 = vperm.slane %v2439, %v2446
        %v2448 = vrot.slane %v2435, 4
        %v2449 = vsel %vm700, %v2448, %v2429
        %v2450 = vrot.slane %v2429, 4
        %v2451 = vsel %vm700, %v2435, %v2450
        %v2453 = vunpack.c.l.s4 1934713408
        %v2454 = vunpack.c.0.s8 %v2453
        %v2455 = vperm.slane %v2449, %v2454
        %v2457 = vunpack.c.l.s4 1934713408
        %v2458 = vunpack.c.0.s8 %v2457
        %v2459 = vperm.slane %v2451, %v2458
        %v2460 = vrot.slane %v2455, 4
        %v2461 = vsel %vm700, %v2460, %v2443
        %v2462 = vrot.slane %v2443, 4
        %v2463 = vsel %vm700, %v2455, %v2462
        %v2464 = vrot.slane %v2459, 4
        %v2465 = vsel %vm700, %v2464, %v2447
        %v2466 = vrot.slane %v2447, 4
        %v2467 = vsel %vm700, %v2459, %v2466
        %2469 = vrot.lane.b32.xlu0 %v2463, 8
        %v2470 = vpop.permute.xlu0 %2469
        %2473 = vrot.lane.b32.xlu0 %v2465, 16
        %v2474 = vpop.permute.xlu0 %2473
        %2477 = vrot.lane.b32.xlu0 %v2467, 24
        %v2478 = vpop.permute.xlu0 %2477
        %v2480 = vsel %vm1062, %v2461, %v2470
        %v2481 = vsel %vm1358, %v2480, %v2474
        %v2482 = vsel %vm1360, %v2481, %v2478
        %s2483 = scalar_lea.vmem %s648, 8
        %2484 = vst.msk [vmem:[%s2483] sm:$0xff] %vm672, %v2482
        %v2485 = vpack.c.bf16 %v2312, %v2312
        %v2486 = vpack.c.bf16 %v2327, %v2327
        %v2487 = vpack.c.bf16 %v2342, %v2342
        %v2488 = vpack.c.bf16 %v2357, %v2357
        %v2489 = vpack.c.bf16 %v2171, %v2171
        %v2490 = vpack.c.bf16 %v2173, %v2173
        %v2491 = vpack.c.bf16 %v2175, %v2175
        %v2492 = vpack.c.bf16 %v2177, %v2177
        %v2494 = vsel %vm1062, %v2485, 0
        %v2497 = vsel %vm1374, %v2489, 0
        %2499 = vmatpush.bf16.msra.mxu0 0
        %2500 = vmatpush.bf16.msra.mxu0 0
        %2501 = vmatpush.bf16.msra.mxu0 0
        %2502 = vmatpush.bf16.msra.mxu0 0
        %2503 = vmatpush.bf16.msra.mxu0 0
        %2504 = vmatpush.bf16.msra.mxu0 0
        %2505 = vmatpush.bf16.msra.mxu0 0
        %2506 = vmatpush.bf16.msra.mxu0 %v2497
        %2507 = vmatmul.bf16.gmra.mxu0 %v2494
        %v2508 = vpop.f32.mrf.mxu0
        %v2509 = vadd.f32 0.0, %v2508
        %v2510 = vpop.f32.mrf.mxu0
        %2511 = vdwg.mxu0
        %v2513 = vsel %vm1062, %v2486, 0
        %v2516 = vsel %vm1374, %v2490, 0
        %2518 = vmatpush.bf16.msra.mxu0 0
        %2519 = vmatpush.bf16.msra.mxu0 0
        %2520 = vmatpush.bf16.msra.mxu0 0
        %2521 = vmatpush.bf16.msra.mxu0 0
        %2522 = vmatpush.bf16.msra.mxu0 0
        %2523 = vmatpush.bf16.msra.mxu0 0
        %2524 = vmatpush.bf16.msra.mxu0 0
        %2525 = vmatpush.bf16.msra.mxu0 %v2516
        %2526 = vmatmul.bf16.gmra.mxu0 %v2513
        %v2527 = vpop.f32.mrf.mxu0
        %v2528 = vadd.f32 0.0, %v2527
        %v2529 = vpop.f32.mrf.mxu0
        %2530 = vdwg.mxu0
        %v2532 = vsel %vm1062, %v2487, 0
        %v2535 = vsel %vm1374, %v2491, 0
        %2537 = vmatpush.bf16.msra.mxu0 0
        %2538 = vmatpush.bf16.msra.mxu0 0
        %2539 = vmatpush.bf16.msra.mxu0 0
        %2540 = vmatpush.bf16.msra.mxu0 0
        %2541 = vmatpush.bf16.msra.mxu0 0
        %2542 = vmatpush.bf16.msra.mxu0 0
        %2543 = vmatpush.bf16.msra.mxu0 0
        %2544 = vmatpush.bf16.msra.mxu0 %v2535
        %2545 = vmatmul.bf16.gmra.mxu0 %v2532
        %v2546 = vpop.f32.mrf.mxu0
        %v2547 = vadd.f32 0.0, %v2546
        %v2548 = vpop.f32.mrf.mxu0
        %2549 = vdwg.mxu0
        %v2551 = vsel %vm1062, %v2488, 0
        %v2554 = vsel %vm1374, %v2492, 0
        %2556 = vmatpush.bf16.msra.mxu0 0
        %2557 = vmatpush.bf16.msra.mxu0 0
        %2558 = vmatpush.bf16.msra.mxu0 0
        %2559 = vmatpush.bf16.msra.mxu0 0
        %2560 = vmatpush.bf16.msra.mxu0 0
        %2561 = vmatpush.bf16.msra.mxu0 0
        %2562 = vmatpush.bf16.msra.mxu0 0
        %2563 = vmatpush.bf16.msra.mxu0 %v2554
        %2564 = vmatmul.bf16.gmra.mxu0 %v2551
        %v2565 = vpop.f32.mrf.mxu0
        %v2566 = vadd.f32 0.0, %v2565
        %v2567 = vpop.f32.mrf.mxu0
        %2568 = vdwg.mxu0
        %v2569 = vrot.slane %v2547, 4
        %v2570 = vsel %vm700, %v2569, %v2509
        %v2571 = vrot.slane %v2509, 4
        %v2572 = vsel %vm700, %v2547, %v2571
        %v2574 = vunpack.c.l.s4 1983009808
        %v2575 = vunpack.c.0.s8 %v2574
        %v2576 = vperm.slane %v2570, %v2575
        %v2578 = vunpack.c.l.s4 1983009808
        %v2579 = vunpack.c.0.s8 %v2578
        %v2580 = vperm.slane %v2572, %v2579
        %v2581 = vrot.slane %v2566, 4
        %v2582 = vsel %vm700, %v2581, %v2528
        %v2583 = vrot.slane %v2528, 4
        %v2584 = vsel %vm700, %v2566, %v2583
        %v2586 = vunpack.c.l.s4 1983009808
        %v2587 = vunpack.c.0.s8 %v2586
        %v2588 = vperm.slane %v2582, %v2587
        %v2590 = vunpack.c.l.s4 1983009808
        %v2591 = vunpack.c.0.s8 %v2590
        %v2592 = vperm.slane %v2584, %v2591
        %v2593 = vrot.slane %v2588, 4
        %v2594 = vsel %vm700, %v2593, %v2576
        %v2595 = vrot.slane %v2576, 4
        %v2596 = vsel %vm700, %v2588, %v2595
        %v2598 = vunpack.c.l.s4 1934713408
        %v2599 = vunpack.c.0.s8 %v2598
        %v2600 = vperm.slane %v2594, %v2599
        %v2602 = vunpack.c.l.s4 1934713408
        %v2603 = vunpack.c.0.s8 %v2602
        %v2604 = vperm.slane %v2596, %v2603
        %v2605 = vrot.slane %v2592, 4
        %v2606 = vsel %vm700, %v2605, %v2580
        %v2607 = vrot.slane %v2580, 4
        %v2608 = vsel %vm700, %v2592, %v2607
        %v2610 = vunpack.c.l.s4 1934713408
        %v2611 = vunpack.c.0.s8 %v2610
        %v2612 = vperm.slane %v2606, %v2611
        %v2614 = vunpack.c.l.s4 1934713408
        %v2615 = vunpack.c.0.s8 %v2614
        %v2616 = vperm.slane %v2608, %v2615
        %v2617 = vrot.slane %v2600, 4
        %v2618 = vsel %vm700, 0.0, %v2617
        %v2619 = vrot.slane %v2604, 4
        %v2620 = vsel %vm700, 0.0, %v2619
        %v2621 = vrot.slane %v2612, 4
        %v2622 = vsel %vm700, 0.0, %v2621
        %v2623 = vrot.slane %v2616, 4
        %v2624 = vsel %vm700, 0.0, %v2623
        %v2625 = vsel %vm700, %v2619, %v2600
        %v2627 = vunpack.c.l.s4 1983009808
        %v2628 = vunpack.c.0.s8 %v2627
        %v2629 = vperm.slane %v2625, %v2628
        %v2630 = vrot.slane %v2620, 4
        %v2631 = vsel %vm700, %v2630, %v2618
        %v2633 = vunpack.c.l.s4 1983009808
        %v2634 = vunpack.c.0.s8 %v2633
        %v2635 = vperm.slane %v2631, %v2634
        %v2636 = vsel %vm700, %v2623, %v2612
        %v2638 = vunpack.c.l.s4 1983009808
        %v2639 = vunpack.c.0.s8 %v2638
        %v2640 = vperm.slane %v2636, %v2639
        %v2641 = vrot.slane %v2624, 4
        %v2642 = vsel %vm700, %v2641, %v2622
        %v2644 = vunpack.c.l.s4 1983009808
        %v2645 = vunpack.c.0.s8 %v2644
        %v2646 = vperm.slane %v2642, %v2645
        %v2647 = vrot.slane %v2635, 4
        %v2648 = vsel %vm700, %v2647, %v2629
        %v2649 = vrot.slane %v2629, 4
        %v2650 = vsel %vm700, %v2635, %v2649
        %v2652 = vunpack.c.l.s4 1934713408
        %v2653 = vunpack.c.0.s8 %v2652
        %v2654 = vperm.slane %v2648, %v2653
        %v2656 = vunpack.c.l.s4 1934713408
        %v2657 = vunpack.c.0.s8 %v2656
        %v2658 = vperm.slane %v2650, %v2657
        %v2659 = vrot.slane %v2646, 4
        %v2660 = vsel %vm700, %v2659, %v2640
        %v2661 = vrot.slane %v2640, 4
        %v2662 = vsel %vm700, %v2646, %v2661
        %v2664 = vunpack.c.l.s4 1934713408
        %v2665 = vunpack.c.0.s8 %v2664
        %v2666 = vperm.slane %v2660, %v2665
        %v2668 = vunpack.c.l.s4 1934713408
        %v2669 = vunpack.c.0.s8 %v2668
        %v2670 = vperm.slane %v2662, %v2669
        %v2671 = vrot.slane %v2666, 4
        %v2672 = vsel %vm700, %v2671, %v2654
        %v2673 = vrot.slane %v2654, 4
        %v2674 = vsel %vm700, %v2666, %v2673
        %v2675 = vrot.slane %v2670, 4
        %v2676 = vsel %vm700, %v2675, %v2658
        %v2677 = vrot.slane %v2658, 4
        %v2678 = vsel %vm700, %v2670, %v2677
        %2680 = vrot.lane.b32.xlu0 %v2674, 8
        %v2681 = vpop.permute.xlu0 %2680
        %2684 = vrot.lane.b32.xlu0 %v2676, 16
        %v2685 = vpop.permute.xlu0 %2684
        %2688 = vrot.lane.b32.xlu0 %v2678, 24
        %v2689 = vpop.permute.xlu0 %2688
        %v2691 = vsel %vm1062, %v2672, %v2681
        %v2692 = vsel %vm1358, %v2691, %v2685
        %v2693 = vsel %vm1360, %v2692, %v2689
        %v2694 = vpack.c.bf16 %v2693, %v2693
        %s2695 = scalar_lea.vmem %s3, 16
        %v2696 = vld [vmem:[%s2695] sm:$0xf]
        %v2697 = vld [vmem:[%s2695 + $0x4] sm:$0xf]
        %v2698 = vld [vmem:[%s2695 + $0x8] sm:$0xf]
        %v2699 = vld [vmem:[%s2695 + $0xc] sm:$0xf]
        %s2700 = scalar_lea.vmem %s4, 1
        %v2701 = vld [vmem:[%s2700] sm:$0x1]
        %v2703 = vperm.slane %v2701, 0
        %v2709 = vunpack.c.l.b16 %v2696
        %v2710 = vunpack.c.l.b16 %v2697
        %v2711 = vunpack.c.l.b16 %v2698
        %v2712 = vunpack.c.l.b16 %v2699
        %v2713 = vpack.c.b16 %v2710, %v2709
        %v2714 = vpack.c.b16 %v2712, %v2711
        %v2718 = vsel %vm672, %v2694, 0
        %2720 = vmatpush.bf16.msra.mxu0 0
        %2721 = vmatpush.bf16.msra.mxu0 0
        %2722 = vmatpush.bf16.msra.mxu0 0
        %2723 = vmatpush.bf16.msra.mxu0 0
        %2724 = vmatpush.bf16.msra.mxu0 0
        %2725 = vmatpush.bf16.msra.mxu0 0
        %2726 = vmatpush.bf16.msra.mxu0 %v2714
        %2727 = vmatpush.bf16.msra.mxu0 %v2713
        %2728 = vmatmul.bf16.gmra.mxu0 %v2718
        %v2729 = vpop.f32.mrf.mxu0
        %v2730 = vadd.f32 %v2703, %v2729
        %v2731 = vpop.f32.mrf.mxu0
        %2732 = vdwg.mxu0
        %v2733 = vadd.f32 %v1774, %v2730
        %s2734 = scalar_lea.vmem %s5, 1
        %v2735 = vld [vmem:[%s2734] sm:$0x1]
        %s2736 = scalar_lea.vmem [#allocation5], 1
        %v2737 = vld [vmem:[%s2736] sm:$0x1]
        %v2738 = vsel %vm672, %v2733, 0.0
        %2739 = vadd.xlane.f32.xlu0 %v2738
        %v2740 = vpop.xlane.xlu0 %2739
        %v2741 = vmul.f32 %v2740, %v1622
        %v2742 = vsub.f32 %v2733, %v2741
        %v2743 = vmul.f32 %v2742, %v2742
        %v2744 = vsel %vm672, %v2743, 0.0
        %2745 = vadd.xlane.f32.xlu0 %v2744
        %v2746 = vpop.xlane.xlu0 %2745
        %v2747 = vmul.f32 %v2746, %v1622
        %v2748 = vadd.f32 %v2747, 1e-05
        %v2749 = vrsqrt.pop %v2748
        %v2750 = vmul.f32 %v2749, %v2748
        %v2751 = vmul.f32 %v2750, %v2749
        %v2752 = vmul.f32 0.5, %v2751
        %v2753 = vsub.f32 1.5, %v2752
        %v2754 = vmul.f32 %v2749, %v2753
        %vm2755 = vweird.f32 %v2748
        %vm2756 = vweird.f32 %v2749
        %vm2757 = vmor %vm2755, %vm2756
        %v2758 = vsel %vm2757, %v2749, %v2754
        %v2759 = vmul.f32 %v2742, %v2758
        %v2761 = vperm.slane %v2735, 0
        %v2763 = vmul.f32 %v2759, %v2761
        %v2765 = vperm.slane %v2737, 0
        %v2767 = vadd.f32 %v2763, %v2765
        %v2768 = vpack.c.bf16 %v2767, %v2767
        %s2769 = scalar_lea.vmem %s7, 16
        %v2770 = vld [vmem:[%s2769] sm:$0xf]
        %v2771 = vld [vmem:[%s2769 + $0x4] sm:$0xf]
        %v2772 = vld [vmem:[%s2769 + $0x8] sm:$0xf]
        %v2773 = vld [vmem:[%s2769 + $0xc] sm:$0xf]
        %s2774 = scalar_lea.vmem [#allocation7], 1
        %v2775 = vld [vmem:[%s2774] sm:$0x1]
        %v2777 = vperm.slane %v2775, 0
        %v2783 = vunpack.c.l.b16 %v2770
        %v2784 = vunpack.c.l.b16 %v2771
        %v2785 = vunpack.c.l.b16 %v2772
        %v2786 = vunpack.c.l.b16 %v2773
        %v2787 = vpack.c.b16 %v2784, %v2783
        %v2788 = vpack.c.b16 %v2786, %v2785
        %v2792 = vsel %vm672, %v2768, 0
        %2794 = vmatpush.bf16.msra.mxu0 0
        %2795 = vmatpush.bf16.msra.mxu0 0
        %2796 = vmatpush.bf16.msra.mxu0 0
        %2797 = vmatpush.bf16.msra.mxu0 0
        %2798 = vmatpush.bf16.msra.mxu0 0
        %2799 = vmatpush.bf16.msra.mxu0 0
        %2800 = vmatpush.bf16.msra.mxu0 %v2788
        %2801 = vmatpush.bf16.msra.mxu0 %v2787
        %2802 = vmatmul.bf16.gmra.mxu0 %v2792
        %v2803 = vpop.f32.mrf.mxu0
        %v2804 = vadd.f32 %v2777, %v2803
        %v2805 = vpop.f32.mrf.mxu0
        %2806 = vdwg.mxu0
        %v2807 = vmax.f32 %v2804, 0.0
        %v2808 = vpack.c.bf16 %v2807, %v2807
        %s2809 = scalar_lea.vmem %s9, 32
        %v2810 = vld [vmem:[%s2809] sm:$0xf]
        %v2811 = vld [vmem:[%s2809 + $0x4] sm:$0xf]
        %v2812 = vld [vmem:[%s2809 + $0x8] sm:$0xf]
        %v2813 = vld [vmem:[%s2809 + $0xc] sm:$0xf]
        %v2814 = vld [vmem:[%s2809 + $0x10] sm:$0xf]
        %v2815 = vld [vmem:[%s2809 + $0x14] sm:$0xf]
        %v2816 = vld [vmem:[%s2809 + $0x18] sm:$0xf]
        %v2817 = vld [vmem:[%s2809 + $0x1c] sm:$0xf]
        %s2818 = scalar_lea.vmem [#allocation8], 1
        %v2819 = vld [vmem:[%s2818] sm:$0x1]
        %v2821 = vperm.slane %v2819, 0
        %v2831 = vunpack.c.l.b16 %v2810
        %v2832 = vunpack.c.l.b16 %v2811
        %v2833 = vunpack.c.l.b16 %v2812
        %v2834 = vunpack.c.l.b16 %v2813
        %v2835 = vunpack.c.l.b16 %v2814
        %v2836 = vunpack.c.l.b16 %v2815
        %v2837 = vunpack.c.l.b16 %v2816
        %v2838 = vunpack.c.l.b16 %v2817
        %v2839 = vpack.c.b16 %v2832, %v2831
        %v2840 = vpack.c.b16 %v2834, %v2833
        %v2841 = vpack.c.b16 %v2836, %v2835
        %v2842 = vpack.c.b16 %v2838, %v2837
        %v2848 = vsel %vm1725, %v2808, 0
        %2850 = vmatpush.bf16.msra.mxu0 0
        %2851 = vmatpush.bf16.msra.mxu0 0
        %2852 = vmatpush.bf16.msra.mxu0 0
        %2853 = vmatpush.bf16.msra.mxu0 0
        %2854 = vmatpush.bf16.msra.mxu0 %v2842
        %2855 = vmatpush.bf16.msra.mxu0 %v2841
        %2856 = vmatpush.bf16.msra.mxu0 %v2840
        %2857 = vmatpush.bf16.msra.mxu0 %v2839
        %2858 = vmatmul.bf16.gmra.mxu0 %v2848
        %v2859 = vpop.f32.mrf.mxu0
        %v2860 = vadd.f32 %v2821, %v2859
        %v2861 = vpop.f32.mrf.mxu0
        %2862 = vdwg.mxu0
        %v2863 = vadd.f32 %v2767, %v2860
        %s2864 = scalar_lea.vmem [#allocation10], 1
        %v2865 = vld [vmem:[%s2864] sm:$0x1]
        %s2866 = scalar_lea.vmem [#allocation11], 1
        %v2867 = vld [vmem:[%s2866] sm:$0x1]
        %v2868 = vsel %vm672, %v2863, 0.0
        %2869 = vadd.xlane.f32.xlu0 %v2868
        %v2870 = vpop.xlane.xlu0 %2869
        %v2871 = vmul.f32 %v2870, %v1622
        %v2872 = vsub.f32 %v2863, %v2871
        %v2873 = vmul.f32 %v2872, %v2872
        %v2874 = vsel %vm672, %v2873, 0.0
        %2875 = vadd.xlane.f32.xlu0 %v2874
        %v2876 = vpop.xlane.xlu0 %2875
        %v2877 = vmul.f32 %v2876, %v1622
        %v2878 = vadd.f32 %v2877, 1e-05
        %v2879 = vrsqrt.pop %v2878
        %v2880 = vmul.f32 %v2879, %v2878
        %v2881 = vmul.f32 %v2880, %v2879
        %v2882 = vmul.f32 0.5, %v2881
        %v2883 = vsub.f32 1.5, %v2882
        %v2884 = vmul.f32 %v2879, %v2883
        %vm2885 = vweird.f32 %v2878
        %vm2886 = vweird.f32 %v2879
        %vm2887 = vmor %vm2885, %vm2886
        %v2888 = vsel %vm2887, %v2879, %v2884
        %v2889 = vmul.f32 %v2872, %v2888
        %v2891 = vperm.slane %v2865, 0
        %v2893 = vmul.f32 %v2889, %v2891
        %v2895 = vperm.slane %v2867, 0
        %v2897 = vadd.f32 %v2893, %v2895
        %v2898 = vld [vmem:[%s13] sm:$0x1]
        %v2899 = vld [vmem:[#allocation13] sm:$0x1]
        %v2900 = vsel %vm672, %v2897, 0.0
        %2901 = vadd.xlane.f32.xlu0 %v2900
        %v2902 = vpop.xlane.xlu0 %2901
        %v2903 = vmul.f32 %v2902, %v1622
        %v2904 = vsub.f32 %v2897, %v2903
        %v2905 = vmul.f32 %v2904, %v2904
        %v2906 = vsel %vm672, %v2905, 0.0
        %2907 = vadd.xlane.f32.xlu0 %v2906
        %v2908 = vpop.xlane.xlu0 %2907
        %v2909 = vmul.f32 %v2908, %v1622
        %v2910 = vadd.f32 %v2909, 1e-05
        %v2911 = vrsqrt.pop %v2910
        %v2912 = vmul.f32 %v2911, %v2910
        %v2913 = vmul.f32 %v2912, %v2911
        %v2914 = vmul.f32 0.5, %v2913
        %v2915 = vsub.f32 1.5, %v2914
        %v2916 = vmul.f32 %v2911, %v2915
        %vm2917 = vweird.f32 %v2910
        %vm2918 = vweird.f32 %v2911
        %vm2919 = vmor %vm2917, %vm2918
        %v2920 = vsel %vm2919, %v2911, %v2916
        %v2921 = vmul.f32 %v2904, %v2920
        %v2923 = vperm.slane %v2898, 0
        %v2925 = vmul.f32 %v2921, %v2923
        %v2927 = vperm.slane %v2899, 0
        %v2929 = vadd.f32 %v2925, %v2927
        %2930 = vst.msk [vmem:[%s636] sm:$0xff] %vm672, %v2929
        %s2931 = sand.u32 %s365, 1
        %s2932 = scalar_lea.sflag [#allocation4], %s2931
        %s2933 = sand.u32 %s365, 1
        %s2934 = smul.addr %s2933, 8
        %s2935 = scalar_lea.vmem [#allocation14], %s2934
        %p2936 = scmp.lt.s32.totalorder %s37, 1
        %s2937 = scalar_select %p2936, %s37, 1
        %s2938 = smul.addr %s2937, 2
        %s2939 = smul.addr %s2938, 8
        %s2940 = scalar_lea.vmem %s16, %s2939
        // Predicated region
        $region109: #{encoder_forward.1} parent=79 // pred_check
          %p2941 = pneg %p375
        $region110: #{encoder_forward.1} parent=79 // pred_check_branch
          %2943 = sbr.rel (%p2941) target = $region112
        $region111: #{encoder_forward.1} parent=79 // pred_region
          %2945 = vsyncadd %s2932, 0
          %s2946 = smul.addr %s37, 8
          %s2947 = scalar_lea.hbm %s15, %s2946
          %s2949 = sshll.u32 %s2935, 4
          %s2950 = int_to_ptr.vmem [resolvable:$true] %s2949
          %s2951 = sshll.u32 %s2947, 4
          %s2952 = int_to_ptr.hbm [resolvable:$true] %s2951
          %2954 = dma.vmem_to_hbm [thread:$0]  %s2950, 128, %s2952, %s2932
        $region112: #{encoder_forward.1} parent=79 // pred_fallthru
          _
        // Predicated region
        $region113: #{encoder_forward.1} parent=79 // pred_check
          %p2955 = pneg %p401
        $region114: #{encoder_forward.1} parent=79 // pred_check_branch
          %2957 = sbr.rel (%p2955) target = $region116
        $region115: #{encoder_forward.1} parent=79 // pred_region
          _
        $region116: #{encoder_forward.1} parent=79 // pred_fallthru
          _
      $region80: #{encoder_forward.1} parent=5 // pred_fallthru
        _
      %p2958 = scmp.le.s32.totalorder 2, %s32
      // Predicated region
      $region117: #{encoder_forward.1} parent=5 // pred_check
        %p2959 = pneg %p2958
      $region118: #{encoder_forward.1} parent=5 // pred_check_branch
        %2961 = sbr.rel (%p2959) target = $region120
      $region119: #{encoder_forward.1} parent=5 // pred_region
        %s2962 = ssub.s32 %s32, 2
        // Predicated region
        $region121: #{encoder_forward.1} parent=119 // pred_check
          %p2963 = pneg %p381
        $region122: #{encoder_forward.1} parent=119 // pred_check_branch
          %2965 = sbr.rel (%p2963) target = $region124
        $region123: #{encoder_forward.1} parent=119 // pred_region
          %s2966 = sand.u32 %s366, 1
          %s2967 = scalar_lea.sflag [#allocation4], %s2966
          %s2968 = sand.u32 %s366, 1
          %s2969 = smul.addr %s2968, 8
          %s2970 = scalar_lea.vmem [#allocation14], %s2969
          %2972 = dma.done %s2967, 128
        $region124: #{encoder_forward.1} parent=119 // pred_fallthru
          _
        // Predicated region
        $region125: #{encoder_forward.1} parent=119 // pred_check
          %p2973 = pneg %p407
        $region126: #{encoder_forward.1} parent=119 // pred_check_branch
          %2975 = sbr.rel (%p2973) target = $region128
        $region127: #{encoder_forward.1} parent=119 // pred_region
          %p2976 = scmp.lt.s32.totalorder %s38, 1
          %s2977 = scalar_select %p2976, %s38, 1
          %s2978 = smul.addr %s2977, 2
          %s2979 = smul.addr %s2978, 8
          %s2980 = scalar_lea.vmem %s16, %s2979
        $region128: #{encoder_forward.1} parent=119 // pred_fallthru
          _
      $region120: #{encoder_forward.1} parent=5 // pred_fallthru
        _
    $region6: #{encoder_forward.1} parent=1 // loop_footer
      %s36 = sadd.s32 1, %s32
    $region7: #{encoder_forward.1} parent=1 // loop_footer_branch
      %31 = sbr.rel target = $region3
    $region8: #{encoder_forward.1} parent=1 // loop_exit
      _
    %2981 = vsyncpa [#allocation3], 1
    %s2982 = scalar_lea.sflag [#allocation3], 1
    %2983 = vsyncpa %s2982, 1
    %2984 = vsyncpa [#allocation6], 1
    %2985 = vsyncpa [#allocation9], 1
    %2986 = vsyncpa [#allocation12], 1
    %2987 = vsyncpa [#allocation4], 1
    %s2988 = scalar_lea.sflag [#allocation4], 1
    %2989 = vsyncpa %s2988, 1

</llo_original>
